<compile_context>
chip_gen: v5e
topology: v5e:2x2
jax: 0.10.0
libtpu: 0.0.40
codegen_flags: <defaults>
</compile_context>

<pallas_src>
import functools

import jax
import jax.numpy as jnp
from jax.experimental import pallas as pl
from jax.experimental.pallas import tpu as pltpu


def _round_up(v: int, m: int) -> int:
    return ((v + m - 1) // m) * m


def _layout_sizes(layout, k):
    """Sizes of the flat plane-padded layout for spatial layout (Dl, Hl, Wl)."""
    Dl, Hl, Wl = layout
    hwpad = _round_up(Hl * Wl, 128)                 # per-depth-plane stride (lane aligned)
    s_out = Dl * hwpad                              # lanes computed / stored
    s_work = s_out + (k - 1) * hwpad                # operand slab width (covers kd shifts)
    s_in = _round_up(s_work + (k - 1) * (Wl + 1), 128)   # input width (covers kh,kw shifts)
    return hwpad, s_out, s_work, s_in


def _to_flat(x5, k):
    """NCDHW -> flat plane-padded (N, C, S_in) layout; tail is zero."""
    N, C, D, H, W = x5.shape
    hwpad, s_out, _, s_in = _layout_sizes((D, H, W), k)
    xf = x5.reshape(N, C, D, H * W)
    xf = jnp.pad(xf, ((0, 0), (0, 0), (0, 0), (0, hwpad - H * W)))
    xf = xf.reshape(N, C, s_out)
    return jnp.pad(xf, ((0, 0), (0, 0), (0, s_in - s_out)))


def _from_flat(xf, layout, valid, k):
    """Flat plane-padded (N, C, S_in) -> compact NCDHW with the valid extent."""
    N, C, _ = xf.shape
    Dl, Hl, Wl = layout
    Dv, Hv, Wv = valid
    hwpad, s_out, _, _ = _layout_sizes(layout, k)
    x = xf[:, :, :s_out].reshape(N, C, Dl, hwpad)[:, :, :, :Hl * Wl]
    return x.reshape(N, C, Dl, Hl, Wl)[:, :, :Dv, :Hv, :Wv]


def _build_mask(layout, out_valid, k):
    """(1, S_out) f32 {0,1} mask of valid conv-output positions in the flat layout."""
    Dl, Hl, Wl = layout
    Do, Ho, Wo = out_valid
    hwpad, s_out, _, _ = _layout_sizes(layout, k)
    plane = ((jnp.arange(Hl)[:, None] < Ho) &
             (jnp.arange(Wl)[None, :] < Wo)).reshape(-1).astype(jnp.float32)
    plane = jnp.pad(plane, (0, hwpad - Hl * Wl))
    full = (jnp.arange(Dl)[:, None] < Do).astype(jnp.float32) * plane[None, :]
    return full.reshape(1, s_out)


# ----------------------------------------------------------------------------
# Fused Conv3d(k^3, stride=1) + InstanceNorm3d + LeakyReLU kernel (flat layout)
# ----------------------------------------------------------------------------
def _conv_in_act_kernel(x_ref, w_ref, m_ref, o_ref, xsh_ref, *,
                        cin, cout, k, wl, hwpad, s_out, s_work, s_in,
                        n_valid, neg_slope, eps, conv_dtype):
    # x_ref : (1, cin, s_in)         flat plane-padded input (zero outside valid data)
    # w_ref : (k, cout, k*k*cin)     per-kd weight slab, columns ordered (kh, kw, ci)
    # m_ref : (1, s_out)             {0,1} mask of valid conv-output positions
    # o_ref : (1, cout, s_in)        fused output, same flat layout as the input
    # xsh_ref: (k*k*cin, s_work)     VMEM scratch: (kh, kw)-shifted operand slab (bf16)

    # ---- 1) Build the operand slab once: 9 (kh, kw) lane shifts of all channels,
    #         stacked along the contraction dimension.
    for kh in range(k):
        for kw in range(k):
            g = kh * k + kw
            off = kh * wl + kw
            xsh_ref[pl.ds(g * cin, cin), :] = (
                x_ref[0, :, pl.ds(off, s_work)].astype(conv_dtype))

    # ---- 2) Conv as k dots with K = k*k*cin.  The kd tap is an *aligned* lane offset
    #         (kd * hwpad is a multiple of 128), so the operand is a windowed view of
    #         the slab, not another shifted copy.  f32 accumulation on the MXU.
    acc = jnp.dot(w_ref[0], xsh_ref[:, pl.ds(0, s_out)],
                  preferred_element_type=jnp.float32)
    for kd in range(1, k):
        acc = acc + jnp.dot(w_ref[kd], xsh_ref[:, pl.ds(kd * hwpad, s_out)],
                            preferred_element_type=jnp.float32)
    # No bias add: InstanceNorm3d (affine-free) cancels a per-channel bias exactly.

    # ---- 3) InstanceNorm3d with one-pass stats over the valid positions only.
    m = m_ref[...]                                    # (1, s_out)
    inv_n = 1.0 / float(n_valid)
    am = acc * m
    mean = jnp.sum(am, axis=1, keepdims=True) * inv_n                 # (cout, 1)
    ex2 = jnp.sum(am * acc, axis=1, keepdims=True) * inv_n
    var = jnp.maximum(ex2 - mean * mean, 0.0)
    y = (acc - mean) * jax.lax.rsqrt(var + eps)

    # ---- 4) LeakyReLU (neg_slope == 0 -> ReLU); zero invalid lanes so the next
    #         chained stage reads clean zeros; lane-dense stores.
    y = jnp.where(y >= 0.0, y, neg_slope * y) * m
    o_ref[0, :, pl.ds(0, s_out)] = y.astype(o_ref.dtype)
    o_ref[0, :, pl.ds(s_out, s_in - s_out)] = jnp.zeros(
        (cout, s_in - s_out), o_ref.dtype)


def conv3d_instnorm_act_flat(x_flat, w, *, layout, valid, negative_slope=0.01,
                             eps=1e-5, conv_dtype=jnp.bfloat16, cout_block=None):
    """One fused stage on the flat plane-padded layout.

    x_flat: (N, Cin, S_in) in the layout given by `layout`; data valid in `valid`.
    Returns (N, Cout, S_in) in the SAME layout; new valid extent = valid - (k-1).
    """
    N, Cin, S_in = x_flat.shape
    Cout, Cin_w, k, k2, k3 = w.shape
    assert Cin_w == Cin and k == k2 == k3
    Dl, Hl, Wl = layout
    hwpad, s_out, s_work, s_in = _layout_sizes(layout, k)
    assert S_in == s_in, (S_in, s_in)
    Do, Ho, Wo = valid[0] - (k - 1), valid[1] - (k - 1), valid[2] - (k - 1)
    assert Do > 0 and Ho > 0 and Wo > 0, "spatial dims too small for the conv kernel"

    mask = _build_mask(layout, (Do, Ho, Wo), k)
    n_valid = Do * Ho * Wo

    # (k, Cout, k*k*Cin): per-kd slab, column index = (kh*k + kw)*Cin + ci.
    KK = k * k * Cin
    w_r = jnp.transpose(w, (2, 0, 3, 4, 1)).reshape(k, Cout, KK).astype(conv_dtype)

    # Optional Cout tiling: second "parallel" grid axis (fills both v7x TensorCores
    # when N is small) at the cost of re-building the slab per Cout tile.
    cout_blk = Cout if cout_block is None else int(cout_block)
    assert Cout % cout_blk == 0
    nc = Cout // cout_blk

    kern = functools.partial(
        _conv_in_act_kernel, cin=Cin, cout=cout_blk, k=k, wl=Wl, hwpad=hwpad,
        s_out=s_out, s_work=s_work, s_in=s_in, n_valid=n_valid,
        neg_slope=float(negative_slope), eps=float(eps), conv_dtype=conv_dtype)

    # Scoped-VMEM limit sized from the actual double-buffered block footprint.
    x_bytes = jnp.dtype(x_flat.dtype).itemsize
    c_bytes = jnp.dtype(conv_dtype).itemsize
    est = (2 * Cin * s_in * x_bytes            # double-buffered input block
           + 2 * k * cout_blk * KK * c_bytes   # double-buffered weights
           + 2 * s_out * 4                     # mask (constant index -> fetched once)
           + 2 * cout_blk * s_in * x_bytes     # double-buffered output block
           + KK * s_work * c_bytes             # operand slab scratch
           + 4 * cout_blk * s_out * 4)         # acc + elementwise temporaries
    vmem_limit = int(min(max(2 * est, 32 * 1024 * 1024), 96 * 1024 * 1024))

    return pl.pallas_call(
        kern,
        out_shape=jax.ShapeDtypeStruct((N, Cout, s_in), x_flat.dtype),
        grid=(N, nc),
        in_specs=[
            pl.BlockSpec((1, Cin, s_in), lambda n, j: (n, 0, 0)),
            pl.BlockSpec((k, cout_blk, KK), lambda n, j: (0, j, 0)),
            pl.BlockSpec((1, s_out), lambda n, j: (0, 0)),
        ],
        out_specs=pl.BlockSpec((1, cout_blk, s_in), lambda n, j: (n, j, 0)),
        scratch_shapes=[pltpu.VMEM((KK, s_work), conv_dtype)],
        compiler_params=pltpu.CompilerParams(
            dimension_semantics=("parallel", "parallel"),
            vmem_limit_bytes=vmem_limit),
    )(x_flat, w_r, mask)


# ----------------------------------------------------------------------------
# DownEmbedBlock (mirrors the PyTorch module's forward semantics, inference mode)
# ----------------------------------------------------------------------------
class DownEmbedBlock:
    def __init__(self, in_channels, out_channels, down_times, kernel_size=3,
                 stride=1, padding=0, dropout=None, activation='leakyrelu',
                 *, key=None, param_dtype=jnp.float32, conv_dtype=jnp.bfloat16,
                 cout_block=None):
        self.down_times = down_times
        self.kernel_size = int(kernel_size)
        self.padding = int(padding)
        self.dropout = dropout            # nn.Dropout is the identity at inference.
        # TODO(synk): training-mode dropout (random masking) is not implemented.
        self.conv_dtype = conv_dtype      # MXU operand dtype (bf16 recommended).
        self.cout_block = cout_block      # optional Cout tiling for a 2nd grid axis.

        strides = stride if isinstance(stride, (tuple, list)) else (stride,) * 3
        assert all(int(s) == 1 for s in strides), \
            "only stride=1 (the module default) is implemented"
        # TODO(synk): strided Conv3d is not implemented (module default stride=1).

        self.channel_list = [
            in_channels * 2 ** i if in_channels * 2 ** i <= out_channels
            else out_channels
            for i in range(self.down_times + 1)
        ]
        self.channel_list[-1] = out_channels
        self.negative_slope = 0.0 if activation == 'relu' else 0.01

        if key is None:
            key = jax.random.PRNGKey(0)
        self.weights, self.biases = [], []
        k = self.kernel_size
        for i in range(self.down_times):
            cin, cout = self.channel_list[i], self.channel_list[i + 1]
            key, kw_key, kb_key = jax.random.split(key, 3)
            scale = 1.0 / float(cin * k ** 3) ** 0.5
            self.weights.append(
                scale * jax.random.normal(kw_key, (cout, cin, k, k, k),
                                          dtype=param_dtype))
            # Kept for parity with nn.Conv3d(bias=True); the affine-free InstanceNorm
            # cancels the bias exactly, so the fused kernel never reads it.
            self.biases.append(
                scale * jax.random.normal(kb_key, (cout,), dtype=param_dtype))

    def __call__(self, x):
        k, p = self.kernel_size, self.padding
        x5, flat, layout, valid = x, None, None, None
        for i, w in enumerate(self.weights):
            if flat is None:
                if p > 0:
                    x5 = jnp.pad(x5, ((0, 0), (0, 0), (p, p), (p, p), (p, p)))
                layout = tuple(int(d) for d in x5.shape[2:])
                valid = layout
                flat = _to_flat(x5, k)
            flat = conv3d_instnorm_act_flat(
                flat, w, layout=layout, valid=valid,
                negative_slope=self.negative_slope,
                conv_dtype=self.conv_dtype, cout_block=self.cout_block)
            valid = tuple(v - (k - 1) for v in valid)
            # Dropout: identity at inference.
            if p > 0 and i + 1 < self.down_times:
                # padding > 0 needs a re-pad between stages; padding == 0 (default)
                # keeps the flat layout end-to-end with no extra HBM round trips.
                x5 = _from_flat(flat, layout, valid, k)
                flat = None
        return _from_flat(flat, layout, valid, k)


# ----------------------------------------------------------------------------
# Pure-JAX reference (lax.conv + bias + instance-norm + leaky-relu) for validation
# ----------------------------------------------------------------------------
def _reference_block(x, weights, biases, negative_slope, padding=0, eps=1e-5):
    y = x.astype(jnp.float32)
    for w, b in zip(weights, biases):
        y = jax.lax.conv_general_dilated(
            y, w.astype(jnp.float32), window_strides=(1, 1, 1),
            padding=[(padding, padding)] * 3,
            dimension_numbers=('NCDHW', 'OIDHW', 'NCDHW'),
            preferred_element_type=jnp.float32,
            precision=jax.lax.Precision.HIGHEST)
        y = y + b.astype(jnp.float32)[None, :, None, None, None]
        mean = y.mean(axis=(2, 3, 4), keepdims=True)
        var = y.var(axis=(2, 3, 4), keepdims=True)
        y = (y - mean) * jax.lax.rsqrt(var + eps)
        y = jnp.where(y >= 0.0, y, negative_slope * y)
    return y


if __name__ == "__main__":
    key = jax.random.PRNGKey(0)
    param_key, data_key = jax.random.split(key)

    # Small NCDHW input: batch=2, channels=4, spatial 12^3 -> output (2, 16, 8, 8, 8).
    block = DownEmbedBlock(in_channels=4, out_channels=16, down_times=2,
                           kernel_size=3, stride=1, padding=0, dropout=0.1,
                           activation='leakyrelu', key=param_key)
    x = jax.random.normal(data_key, (2, 4, 12, 12, 12), dtype=jnp.float32)

    ref = jax.block_until_ready(
        _reference_block(x, block.weights, block.biases, block.negative_slope,
                         padding=block.padding))

    # 1) Default path: bf16 MXU operands, f32 accumulation / stats.  Outputs are
    #    unit-variance, so the bound reflects bf16 rounding of the conv operands.
    out = jax.block_until_ready(block(x))
    assert out.shape == (2, 16, 8, 8, 8), out.shape
    diff = jnp.abs(out.astype(jnp.float32) - ref)
    max_err_bf16 = float(jnp.max(diff))
    mean_err_bf16 = float(jnp.mean(diff))
    assert max_err_bf16 < 8e-2 and mean_err_bf16 < 1e-2, (max_err_bf16, mean_err_bf16)

    # 2) f32 MXU path: tight algorithmic check against the f32 reference.
    block.conv_dtype = jnp.float32
    out_f32 = jax.block_until_ready(block(x))
    max_err_f32 = float(jnp.max(jnp.abs(out_f32.astype(jnp.float32) - ref)))
    assert max_err_f32 < 5e-3, max_err_f32

    # 3) Cout-tiled grid path (second "parallel" grid axis, e.g. for v7x megacore).
    block.cout_block = 8
    out_ct = jax.block_until_ready(block(x))
    max_err_ct = float(jnp.max(jnp.abs(out_ct.astype(jnp.float32) - ref)))
    assert max_err_ct < 5e-3, max_err_ct

    print("KERNEL_OK")
</pallas_src>

<mosaic_0001>
module attributes {stable_mosaic.version = 11 : i64} {
  func.func @_conv_in_act_kernel(%arg0: i32, %arg1: i32, %arg2: memref<1x4x3712xf32, #tpu.memory_space<vmem>>, %arg3: memref<3x8x36xbf16, #tpu.memory_space<vmem>>, %arg4: memref<1x3072xf32, #tpu.memory_space<vmem>>, %arg5: memref<1x8x3712xf32, #tpu.memory_space<vmem>>, %arg6: memref<36x3584xbf16, #tpu.memory_space<vmem>>) attributes {dimension_semantics = [#tpu.dimension_semantics<parallel>, #tpu.dimension_semantics<parallel>], iteration_bounds = array<i64: 2, 1>, scalar_prefetch = 0 : i64, scratch_operands = 1 : i64, tpu.core_type = #tpu.core_type<tc>, window_params = [{transform_indices = @transform_0, window_bounds = array<i64: 1, 4, 3712>}, {transform_indices = @transform_1, window_bounds = array<i64: 3, 8, 36>}, {pipeline_mode = #tpu.pipeline_mode<synchronous>, transform_indices = @transform_2, window_bounds = array<i64: 1, 3072>}, {transform_indices = @transform_3, window_bounds = array<i64: 1, 8, 3712>}]} {
    %c0 = arith.constant 0 : index
    %c0_0 = arith.constant 0 : index
    %c0_1 = arith.constant 0 : index
    %0 = vector.load %arg2[%c0, %c0_0, %c0_1] : memref<1x4x3712xf32, #tpu.memory_space<vmem>>, vector<1x4x3584xf32>
    %1 = vector.shape_cast %0 : vector<1x4x3584xf32> to vector<4x3584xf32>
    %2 = arith.truncf %1 : vector<4x3584xf32> to vector<4x3584xbf16>
    %c0_2 = arith.constant 0 : index
    %c0_3 = arith.constant 0 : index
    %3 = vector.load %arg6[%c0_2, %c0_3] : memref<36x3584xbf16, #tpu.memory_space<vmem>>, vector<4x3584xbf16>
    tpu.vector_store %arg6[%c0_2, %c0_3], %2 {strides = array<i32>} : memref<36x3584xbf16, #tpu.memory_space<vmem>>, vector<4x3584xbf16>,
    %c0_4 = arith.constant 0 : index
    %c0_5 = arith.constant 0 : index
    %c1 = arith.constant 1 : index
    %4 = vector.load %arg2[%c0_4, %c0_5, %c1] : memref<1x4x3712xf32, #tpu.memory_space<vmem>>, vector<1x4x3584xf32>
    %5 = vector.shape_cast %4 : vector<1x4x3584xf32> to vector<4x3584xf32>
    %6 = arith.truncf %5 : vector<4x3584xf32> to vector<4x3584xbf16>
    %c4 = arith.constant 4 : index
    %c0_6 = arith.constant 0 : index
    %7 = vector.load %arg6[%c4, %c0_6] : memref<36x3584xbf16, #tpu.memory_space<vmem>>, vector<4x3584xbf16>
    tpu.vector_store %arg6[%c4, %c0_6], %6 {strides = array<i32>} : memref<36x3584xbf16, #tpu.memory_space<vmem>>, vector<4x3584xbf16>,
    %c0_7 = arith.constant 0 : index
    %c0_8 = arith.constant 0 : index
    %c2 = arith.constant 2 : index
    %8 = vector.load %arg2[%c0_7, %c0_8, %c2] : memref<1x4x3712xf32, #tpu.memory_space<vmem>>, vector<1x4x3584xf32>
    %9 = vector.shape_cast %8 : vector<1x4x3584xf32> to vector<4x3584xf32>
    %10 = arith.truncf %9 : vector<4x3584xf32> to vector<4x3584xbf16>
    %c8 = arith.constant 8 : index
    %c0_9 = arith.constant 0 : index
    %11 = vector.load %arg6[%c8, %c0_9] : memref<36x3584xbf16, #tpu.memory_space<vmem>>, vector<4x3584xbf16>
    tpu.vector_store %arg6[%c8, %c0_9], %10 {strides = array<i32>} : memref<36x3584xbf16, #tpu.memory_space<vmem>>, vector<4x3584xbf16>,
    %c0_10 = arith.constant 0 : index
    %c0_11 = arith.constant 0 : index
    %c12 = arith.constant 12 : index
    %12 = vector.load %arg2[%c0_10, %c0_11, %c12] : memref<1x4x3712xf32, #tpu.memory_space<vmem>>, vector<1x4x3584xf32>
    %13 = vector.shape_cast %12 : vector<1x4x3584xf32> to vector<4x3584xf32>
    %14 = arith.truncf %13 : vector<4x3584xf32> to vector<4x3584xbf16>
    %c12_12 = arith.constant 12 : index
    %c0_13 = arith.constant 0 : index
    %15 = vector.load %arg6[%c12_12, %c0_13] : memref<36x3584xbf16, #tpu.memory_space<vmem>>, vector<4x3584xbf16>
    tpu.vector_store %arg6[%c12_12, %c0_13], %14 {strides = array<i32>} : memref<36x3584xbf16, #tpu.memory_space<vmem>>, vector<4x3584xbf16>,
    %c0_14 = arith.constant 0 : index
    %c0_15 = arith.constant 0 : index
    %c13 = arith.constant 13 : index
    %16 = vector.load %arg2[%c0_14, %c0_15, %c13] : memref<1x4x3712xf32, #tpu.memory_space<vmem>>, vector<1x4x3584xf32>
    %17 = vector.shape_cast %16 : vector<1x4x3584xf32> to vector<4x3584xf32>
    %18 = arith.truncf %17 : vector<4x3584xf32> to vector<4x3584xbf16>
    %c16 = arith.constant 16 : index
    %c0_16 = arith.constant 0 : index
    %19 = vector.load %arg6[%c16, %c0_16] : memref<36x3584xbf16, #tpu.memory_space<vmem>>, vector<4x3584xbf16>
    tpu.vector_store %arg6[%c16, %c0_16], %18 {strides = array<i32>} : memref<36x3584xbf16, #tpu.memory_space<vmem>>, vector<4x3584xbf16>,
    %c0_17 = arith.constant 0 : index
    %c0_18 = arith.constant 0 : index
    %c14 = arith.constant 14 : index
    %20 = vector.load %arg2[%c0_17, %c0_18, %c14] : memref<1x4x3712xf32, #tpu.memory_space<vmem>>, vector<1x4x3584xf32>
    %21 = vector.shape_cast %20 : vector<1x4x3584xf32> to vector<4x3584xf32>
    %22 = arith.truncf %21 : vector<4x3584xf32> to vector<4x3584xbf16>
    %c20 = arith.constant 20 : index
    %c0_19 = arith.constant 0 : index
    %23 = vector.load %arg6[%c20, %c0_19] : memref<36x3584xbf16, #tpu.memory_space<vmem>>, vector<4x3584xbf16>
    tpu.vector_store %arg6[%c20, %c0_19], %22 {strides = array<i32>} : memref<36x3584xbf16, #tpu.memory_space<vmem>>, vector<4x3584xbf16>,
    %c0_20 = arith.constant 0 : index
    %c0_21 = arith.constant 0 : index
    %c24 = arith.constant 24 : index
    %24 = vector.load %arg2[%c0_20, %c0_21, %c24] : memref<1x4x3712xf32, #tpu.memory_space<vmem>>, vector<1x4x3584xf32>
    %25 = vector.shape_cast %24 : vector<1x4x3584xf32> to vector<4x3584xf32>
    %26 = arith.truncf %25 : vector<4x3584xf32> to vector<4x3584xbf16>
    %c24_22 = arith.constant 24 : index
    %c0_23 = arith.constant 0 : index
    %27 = vector.load %arg6[%c24_22, %c0_23] : memref<36x3584xbf16, #tpu.memory_space<vmem>>, vector<4x3584xbf16>
    tpu.vector_store %arg6[%c24_22, %c0_23], %26 {strides = array<i32>} : memref<36x3584xbf16, #tpu.memory_space<vmem>>, vector<4x3584xbf16>,
    %c0_24 = arith.constant 0 : index
    %c0_25 = arith.constant 0 : index
    %c25 = arith.constant 25 : index
    %28 = vector.load %arg2[%c0_24, %c0_25, %c25] : memref<1x4x3712xf32, #tpu.memory_space<vmem>>, vector<1x4x3584xf32>
    %29 = vector.shape_cast %28 : vector<1x4x3584xf32> to vector<4x3584xf32>
    %30 = arith.truncf %29 : vector<4x3584xf32> to vector<4x3584xbf16>
    %c28 = arith.constant 28 : index
    %c0_26 = arith.constant 0 : index
    %31 = vector.load %arg6[%c28, %c0_26] : memref<36x3584xbf16, #tpu.memory_space<vmem>>, vector<4x3584xbf16>
    tpu.vector_store %arg6[%c28, %c0_26], %30 {strides = array<i32>} : memref<36x3584xbf16, #tpu.memory_space<vmem>>, vector<4x3584xbf16>,
    %c0_27 = arith.constant 0 : index
    %c0_28 = arith.constant 0 : index
    %c26 = arith.constant 26 : index
    %32 = vector.load %arg2[%c0_27, %c0_28, %c26] : memref<1x4x3712xf32, #tpu.memory_space<vmem>>, vector<1x4x3584xf32>
    %33 = vector.shape_cast %32 : vector<1x4x3584xf32> to vector<4x3584xf32>
    %34 = arith.truncf %33 : vector<4x3584xf32> to vector<4x3584xbf16>
    %c32 = arith.constant 32 : index
    %c0_29 = arith.constant 0 : index
    %35 = vector.load %arg6[%c32, %c0_29] : memref<36x3584xbf16, #tpu.memory_space<vmem>>, vector<4x3584xbf16>
    tpu.vector_store %arg6[%c32, %c0_29], %34 {strides = array<i32>} : memref<36x3584xbf16, #tpu.memory_space<vmem>>, vector<4x3584xbf16>,
    %c0_30 = arith.constant 0 : index
    %c0_31 = arith.constant 0 : index
    %c0_32 = arith.constant 0 : index
    %36 = vector.load %arg3[%c0_30, %c0_31, %c0_32] : memref<3x8x36xbf16, #tpu.memory_space<vmem>>, vector<1x8x36xbf16>
    %37 = vector.shape_cast %36 : vector<1x8x36xbf16> to vector<8x36xbf16>
    %c0_33 = arith.constant 0 : index
    %c0_34 = arith.constant 0 : index
    %38 = vector.load %arg6[%c0_33, %c0_34] : memref<36x3584xbf16, #tpu.memory_space<vmem>>, vector<36x3072xbf16>
    %cst = arith.constant dense<0.000000e+00> : vector<8x3072xf32>
    %39 = tpu.matmul %37, %38, %cst {dimension_numbers = #tpu.dot_dimension_numbers<[1], [0], [0], [1], [0, 0, 1, 1], [], []>} : vector<8x36xbf16>, vector<36x3072xbf16>, vector<8x3072xf32> -> vector<8x3072xf32>
    %c1_35 = arith.constant 1 : index
    %c0_36 = arith.constant 0 : index
    %c0_37 = arith.constant 0 : index
    %40 = vector.load %arg3[%c1_35, %c0_36, %c0_37] : memref<3x8x36xbf16, #tpu.memory_space<vmem>>, vector<1x8x36xbf16>
    %41 = vector.shape_cast %40 : vector<1x8x36xbf16> to vector<8x36xbf16>
    %c0_38 = arith.constant 0 : index
    %c256 = arith.constant 256 : index
    %42 = vector.load %arg6[%c0_38, %c256] : memref<36x3584xbf16, #tpu.memory_space<vmem>>, vector<36x3072xbf16>
    %cst_39 = arith.constant dense<0.000000e+00> : vector<8x3072xf32>
    %43 = tpu.matmul %41, %42, %cst_39 {dimension_numbers = #tpu.dot_dimension_numbers<[1], [0], [0], [1], [0, 0, 1, 1], [], []>} : vector<8x36xbf16>, vector<36x3072xbf16>, vector<8x3072xf32> -> vector<8x3072xf32>
    %44 = arith.addf %39, %43 : vector<8x3072xf32>
    %c2_40 = arith.constant 2 : index
    %c0_41 = arith.constant 0 : index
    %c0_42 = arith.constant 0 : index
    %45 = vector.load %arg3[%c2_40, %c0_41, %c0_42] : memref<3x8x36xbf16, #tpu.memory_space<vmem>>, vector<1x8x36xbf16>
    %46 = vector.shape_cast %45 : vector<1x8x36xbf16> to vector<8x36xbf16>
    %c0_43 = arith.constant 0 : index
    %c512 = arith.constant 512 : index
    %47 = vector.load %arg6[%c0_43, %c512] : memref<36x3584xbf16, #tpu.memory_space<vmem>>, vector<36x3072xbf16>
    %cst_44 = arith.constant dense<0.000000e+00> : vector<8x3072xf32>
    %48 = tpu.matmul %46, %47, %cst_44 {dimension_numbers = #tpu.dot_dimension_numbers<[1], [0], [0], [1], [0, 0, 1, 1], [], []>} : vector<8x36xbf16>, vector<36x3072xbf16>, vector<8x3072xf32> -> vector<8x3072xf32>
    %49 = arith.addf %44, %48 : vector<8x3072xf32>
    %c0_45 = arith.constant 0 : index
    %c0_46 = arith.constant 0 : index
    %50 = vector.load %arg4[%c0_45, %c0_46] : memref<1x3072xf32, #tpu.memory_space<vmem>>, vector<1x3072xf32>
    %51 = vector.broadcast %50 : vector<1x3072xf32> to vector<8x3072xf32>
    %52 = arith.mulf %49, %51 : vector<8x3072xf32>
    %cst_47 = arith.constant dense<0.000000e+00> : vector<8xf32>
    %53 = vector.multi_reduction <add>, %52, %cst_47 [1] : vector<8x3072xf32> to vector<8xf32>
    %54 = vector.shape_cast %53 : vector<8xf32> to vector<8x1xf32>
    %cst_48 = arith.constant 1.000000e-03 : f32
    %55 = vector.broadcast %cst_48 : f32 to vector<8x1xf32>
    %56 = arith.mulf %54, %55 : vector<8x1xf32>
    %57 = arith.mulf %52, %49 : vector<8x3072xf32>
    %cst_49 = arith.constant dense<0.000000e+00> : vector<8xf32>
    %58 = vector.multi_reduction <add>, %57, %cst_49 [1] : vector<8x3072xf32> to vector<8xf32>
    %59 = vector.shape_cast %58 : vector<8xf32> to vector<8x1xf32>
    %cst_50 = arith.constant 1.000000e-03 : f32
    %60 = vector.broadcast %cst_50 : f32 to vector<8x1xf32>
    %61 = arith.mulf %59, %60 : vector<8x1xf32>
    %62 = arith.mulf %56, %56 : vector<8x1xf32>
    %63 = arith.subf %61, %62 : vector<8x1xf32>
    %cst_51 = arith.constant 0.000000e+00 : f32
    %64 = vector.broadcast %cst_51 : f32 to vector<8x1xf32>
    %65 = arith.maximumf %63, %64 : vector<8x1xf32>
    %66 = vector.broadcast %56 : vector<8x1xf32> to vector<8x3072xf32>
    %67 = arith.subf %49, %66 : vector<8x3072xf32>
    %cst_52 = arith.constant 9.99999974E-6 : f32
    %68 = vector.broadcast %cst_52 : f32 to vector<8x1xf32>
    %69 = arith.addf %65, %68 : vector<8x1xf32>
    %70 = math.rsqrt %69 : vector<8x1xf32>
    %71 = vector.broadcast %70 : vector<8x1xf32> to vector<8x3072xf32>
    %72 = arith.mulf %67, %71 : vector<8x3072xf32>
    %cst_53 = arith.constant 0.000000e+00 : f32
    %73 = vector.broadcast %cst_53 : f32 to vector<8x3072xf32>
    %74 = arith.cmpf oge, %72, %73 : vector<8x3072xf32>
    %cst_54 = arith.constant 0.00999999977 : f32
    %75 = vector.broadcast %cst_54 : f32 to vector<8x3072xf32>
    %76 = arith.mulf %75, %72 : vector<8x3072xf32>
    %77 = arith.select %74, %72, %76 : vector<8x3072xi1>, vector<8x3072xf32>
    %78 = vector.broadcast %50 : vector<1x3072xf32> to vector<8x3072xf32>
    %79 = arith.mulf %77, %78 : vector<8x3072xf32>
    %c0_55 = arith.constant 0 : index
    %c0_56 = arith.constant 0 : index
    %c0_57 = arith.constant 0 : index
    %80 = vector.load %arg5[%c0_55, %c0_56, %c0_57] : memref<1x8x3712xf32, #tpu.memory_space<vmem>>, vector<1x8x3072xf32>
    %81 = vector.shape_cast %80 : vector<1x8x3072xf32> to vector<8x3072xf32>
    %82 = vector.shape_cast %79 : vector<8x3072xf32> to vector<1x8x3072xf32>
    tpu.vector_store %arg5[%c0_55, %c0_56, %c0_57], %82 {strides = array<i32>} : memref<1x8x3712xf32, #tpu.memory_space<vmem>>, vector<1x8x3072xf32>,
    %cst_58 = arith.constant 0.000000e+00 : f32
    %83 = vector.broadcast %cst_58 : f32 to vector<8x640xf32>
    %c0_59 = arith.constant 0 : index
    %c0_60 = arith.constant 0 : index
    %c3072 = arith.constant 3072 : index
    %84 = vector.load %arg5[%c0_59, %c0_60, %c3072] : memref<1x8x3712xf32, #tpu.memory_space<vmem>>, vector<1x8x640xf32>
    %85 = vector.shape_cast %84 : vector<1x8x640xf32> to vector<8x640xf32>
    %86 = vector.shape_cast %83 : vector<8x640xf32> to vector<1x8x640xf32>
    tpu.vector_store %arg5[%c0_59, %c0_60, %c3072], %86 {strides = array<i32>} : memref<1x8x3712xf32, #tpu.memory_space<vmem>>, vector<1x8x640xf32>,
    return
  }
  func.func @transform_0(%arg0: i32, %arg1: i32) -> (i32, i32, i32) {
    %c0_i32 = arith.constant 0 : i32
    %c0_i32_0 = arith.constant 0 : i32
    %c0_i32_1 = arith.constant 0 : i32
    return %arg0, %c0_i32, %c0_i32_0 : i32, i32, i32
  }
  func.func @transform_1(%arg0: i32, %arg1: i32) -> (i32, i32, i32) {
    %c0_i32 = arith.constant 0 : i32
    %c0_i32_0 = arith.constant 0 : i32
    %c0_i32_1 = arith.constant 0 : i32
    return %c0_i32, %arg1, %c0_i32_0 : i32, i32, i32
  }
  func.func @transform_2(%arg0: i32, %arg1: i32) -> (i32, i32) {
    %c0_i32 = arith.constant 0 : i32
    %c0_i32_0 = arith.constant 0 : i32
    %c0_i32_1 = arith.constant 0 : i32
    return %c0_i32, %c0_i32_0 : i32, i32
  }
  func.func @transform_3(%arg0: i32, %arg1: i32) -> (i32, i32, i32) {
    %c0_i32 = arith.constant 0 : i32
    %c0_i32_0 = arith.constant 0 : i32
    return %arg0, %arg1, %c0_i32 : i32, i32, i32
  }
}

</mosaic_0001>

<llo_original>
// kernel: tpu_custom_call.1
$region0: #{tpu_custom_call.1}
  #allocation0 [shape = 'u32[]', space=smem, size = 0x4, offset = 0x4, fixed_abs, tag = 'smem constant byte address 0x4 - core index']
  #allocation1 [shape = 'u32[72,128]{1,0:T(1,128)}', space=vmem, size = 0x9000, scoped, tag = 'internal scratch']
  #allocation2 [shape = 'bf16[36,3584]{1,0:T(8,128)(2,1)}', space=vmem, size = 0x46000, scoped, tag = 'scratch operand']
  %s0 = inlined_call_operand.hbm [shape: f32[2,4,3712], index: 0, kind: input, shape index: {}]
  %s1 = inlined_call_operand.hbm [shape: bf16[3,8,36], index: 1, kind: input, shape index: {}]
  %s2 = inlined_call_operand.hbm [shape: f32[1,3072], index: 2, kind: input, shape index: {}]
  %s3 = inlined_call_operand.hbm [shape: f32[2,8,3712], index: 3, kind: output, shape index: {}]
  %s4 = sld [smem:[#allocation0]]
  $region57: #{tpu_custom_call.1} parent=0
    _
  %s6 = ssub.s32 1, %s4
  %s7 = scalar_select 0, %s6, %s4
  $region1: #{tpu_custom_call.1} parent=0
    #allocation3 [shape = 'u8[118784]{0}', space=vmem, size = 0x1d000, scoped, tag = 'input window, operand 0']
    #allocation4 [shape = 's32[2]{0}', space=sflag, size = 0x8, scoped, tag = 'scoped memory for tpu_custom_call.1']
    #allocation5 [shape = 's32[2]{0}', space=sflag, size = 0x8, scoped, tag = 'scoped memory for tpu_custom_call.1']
    #allocation6 [shape = 'u8[6144]{0}', space=vmem, size = 0x1800, scoped, tag = 'input window, operand 1, single buffered']
    #allocation7 [shape = 's32[1]{0}', space=sflag, size = 0x4, scoped, tag = 'scoped memory for tpu_custom_call.1']
    #allocation8 [shape = 'u8[12288]{0}', space=vmem, size = 0x3000, scoped, tag = 'input window, operand 2, single buffered']
    #allocation9 [shape = 'u8[237568]{0}', space=vmem, size = 0x3a000, scoped, tag = 'output window, operand 0']
    %8 = vsyncpa [#allocation4], 0
    %s9 = scalar_lea.sflag [#allocation4], 1
    %10 = vsyncpa %s9, 0
    %11 = vsyncpa [#allocation7], 0
    %12 = vsyncpa [#allocation5], 0
    %s13 = scalar_lea.sflag [#allocation5], 1
    %14 = vsyncpa %s13, 0
    loop: start=0, step=1, limit=4
    $region2: #{tpu_custom_call.1} parent=1 // loop_pre_header
      _
    $region3: #{tpu_custom_call.1} parent=1 // loop_header
      %s16 = sphi 0, %s20
      %p17 = scmp.ge.s32.totalorder %s16, 4
      %s23 = sphi 0, %s35
      %s24 = sphi 0, %s31
      %s25 = sphi 0, %s23
      %s26 = sphi 0, %s24
      %s27 = sphi 0, %s25
      %s28 = sphi 0, %s26
      %s38 = sphi 0, %s40
      %s41 = sphi 0, %s38
      %s42 = sphi 0, %s41
      %s58 = sphi 0, %s42
      %s64 = sphi 0, %s66
      %s67 = sphi 0, %s64
      %s68 = sphi 0, %s67
      %s84 = sphi 0, %s68
      %s88 = sphi 0, %s88
      %s90 = sphi 0, %s88
      %s91 = sphi 0, %s90
      %s105 = sphi 0, %s91
      %s113 = sphi 0, %s115
      %s116 = sphi 0, %s113
      %s117 = sphi 0, %s116
      %s133 = sphi 0, %s117
    $region4: #{tpu_custom_call.1} parent=1 // loop_header_branch
      %19 = sbr.rel (%p17) target = $region8
    $region5: #{tpu_custom_call.1} parent=1 // loop_body
      %s21 = ssub.s32 %s16, 1
      %s22 = ssub.s32 %s16, 2
      %s29 = sadd.s32 1, %s24
      %p30 = scmp.ge.s32.totalorder %s29, 1
      %s31 = scalar_select %p30, 0, %s29
      %s32 = sadd.s32 1, %s23
      %s33 = scalar_select %p30, %s32, %s23
      %p34 = scmp.ge.s32.totalorder %s33, 2
      %s35 = scalar_select %p34, 0, %s33
      %s36 = ssub.s32 %s23, %s35
      %p37 = scmp.eq.s32.totalorder %s36, 0
      %s39 = sadd.s32 %s38, 1
      %s40 = scalar_select %p37, %s38, %s39
      %p43 = pneg %p37
      %p44 = scmp.eq.s32.totalorder %s16, 1
      %p45 = por %p43, %p44
      %p46 = scmp.ne.s32.totalorder %s38, %s41
      %p47 = scmp.eq.s32.totalorder %s16, 0
      %p48 = por %p46, %p47
      %p49 = scmp.ne.s32.totalorder %s38, %s41
      %p50 = scmp.eq.s32.totalorder %s21, 1
      %p51 = por %p49, %p50
      %p52 = scmp.ne.s32.totalorder %s41, %s42
      %p53 = scmp.eq.s32.totalorder %s21, 0
      %p54 = por %p52, %p53
      %p55 = scmp.ne.s32.totalorder %s41, %s42
      %p56 = scmp.eq.s32.totalorder %s22, 1
      %p57 = por %p55, %p56
      %p59 = scmp.ne.s32.totalorder %s42, %s58
      %p60 = scmp.eq.s32.totalorder %s22, 0
      %p61 = por %p59, %p60
      %s62 = ssub.s32 %s24, %s31
      %p63 = scmp.eq.s32.totalorder %s62, 0
      %s65 = sadd.s32 %s64, 1
      %s66 = scalar_select %p63, %s64, %s65
      %p69 = pneg %p63
      %p70 = scmp.eq.s32.totalorder %s16, 1
      %p71 = por %p69, %p70
      %p72 = scmp.ne.s32.totalorder %s64, %s67
      %p73 = scmp.eq.s32.totalorder %s16, 0
      %p74 = por %p72, %p73
      %p75 = scmp.ne.s32.totalorder %s64, %s67
      %p76 = scmp.eq.s32.totalorder %s21, 1
      %p77 = por %p75, %p76
      %p78 = scmp.ne.s32.totalorder %s67, %s68
      %p79 = scmp.eq.s32.totalorder %s21, 0
      %p80 = por %p78, %p79
      %p81 = scmp.ne.s32.totalorder %s67, %s68
      %p82 = scmp.eq.s32.totalorder %s22, 1
      %p83 = por %p81, %p82
      %p85 = scmp.ne.s32.totalorder %s68, %s84
      %p86 = scmp.eq.s32.totalorder %s22, 0
      %p87 = por %p85, %p86
      %s89 = sadd.s32 %s88, 1
      %p92 = scmp.eq.s32.totalorder %s16, 1
      %p93 = scmp.ne.s32.totalorder %s88, %s90
      %p94 = scmp.eq.s32.totalorder %s16, 0
      %p95 = por %p93, %p94
      %p96 = scmp.ne.s32.totalorder %s88, %s90
      %p97 = scmp.eq.s32.totalorder %s21, 1
      %p98 = por %p96, %p97
      %p99 = scmp.ne.s32.totalorder %s90, %s91
      %p100 = scmp.eq.s32.totalorder %s21, 0
      %p101 = por %p99, %p100
      %p102 = scmp.ne.s32.totalorder %s90, %s91
      %p103 = scmp.eq.s32.totalorder %s22, 1
      %p104 = por %p102, %p103
      %p106 = scmp.ne.s32.totalorder %s91, %s105
      %p107 = scmp.eq.s32.totalorder %s22, 0
      %p108 = por %p106, %p107
      %s109 = ssub.s32 %s23, %s35
      %s110 = ssub.s32 %s24, %s31
      %s111 = sor.u32 %s109, %s110
      %p112 = scmp.eq.s32.totalorder %s111, 0
      %s114 = sadd.s32 %s113, 1
      %s115 = scalar_select %p112, %s113, %s114
      %p118 = pneg %p112
      %p119 = scmp.eq.s32.totalorder %s16, 1
      %p120 = por %p118, %p119
      %p121 = scmp.ne.s32.totalorder %s113, %s116
      %p122 = scmp.eq.s32.totalorder %s16, 0
      %p123 = por %p121, %p122
      %p124 = scmp.ne.s32.totalorder %s113, %s116
      %p125 = scmp.eq.s32.totalorder %s21, 1
      %p126 = por %p124, %p125
      %p127 = scmp.ne.s32.totalorder %s116, %s117
      %p128 = scmp.eq.s32.totalorder %s21, 0
      %p129 = por %p127, %p128
      %p130 = scmp.ne.s32.totalorder %s116, %s117
      %p131 = scmp.eq.s32.totalorder %s22, 1
      %p132 = por %p130, %p131
      %p134 = scmp.ne.s32.totalorder %s117, %s133
      %p135 = scmp.eq.s32.totalorder %s22, 0
      %p136 = por %p134, %p135
      %p137 = scmp.le.s32.totalorder 1, %s16
      %p138 = scmp.lt.s32.totalorder %s16, 3
      %p139 = pnand %p137, %p138
      %p140 = pneg %p139
      // Predicated region
      $region9: #{tpu_custom_call.1} parent=5 // pred_check
        _
      $region10: #{tpu_custom_call.1} parent=5 // pred_check_branch
        %142 = sbr.rel (%p139) target = $region12
      $region11: #{tpu_custom_call.1} parent=5 // pred_region
        %s143 = ssub.s32 %s16, 1
        // Predicated region
        $region13: #{tpu_custom_call.1} parent=11 // pred_check
          %p144 = pneg %p80
        $region14: #{tpu_custom_call.1} parent=11 // pred_check_branch
          %146 = sbr.rel (%p144) target = $region16
        $region15: #{tpu_custom_call.1} parent=11 // pred_region
          %148 = vsyncadd [#allocation7], 0
          %s149 = smul.addr %s26, 4
          %s150 = scalar_lea.hbm %s1, %s149
          %s151 = sshll.u32 %s150, 4
          %s152 = int_to_ptr.hbm [resolvable:$true] %s151
          %s153 = sshll.u32 [#allocation6], 4
          %s154 = int_to_ptr.vmem [resolvable:$true] %s153
          %159 = dma.hbm_to_vmem [thread:$0]  %s152, 192, %s154, [#allocation7], 64, 64, 4
        $region16: #{tpu_custom_call.1} parent=11 // pred_fallthru
          _
        // Predicated region
        $region17: #{tpu_custom_call.1} parent=11 // pred_check
          %p160 = pneg %p101
        $region18: #{tpu_custom_call.1} parent=11 // pred_check_branch
          %162 = sbr.rel (%p160) target = $region20
        $region19: #{tpu_custom_call.1} parent=11 // pred_region
          %164 = vsyncadd [#allocation7], 0
          %s166 = sshll.u32 %s2, 4
          %s167 = int_to_ptr.hbm [resolvable:$true] %s166
          %s168 = sshll.u32 [#allocation8], 4
          %s169 = int_to_ptr.vmem [resolvable:$true] %s168
          %171 = dma.hbm_to_vmem [thread:$0]  %s167, 384, %s169, [#allocation7]
        $region20: #{tpu_custom_call.1} parent=11 // pred_fallthru
          _
      $region12: #{tpu_custom_call.1} parent=5 // pred_fallthru
        _
      %p172 = scmp.lt.s32.totalorder %s16, 2
      // Predicated region
      $region21: #{tpu_custom_call.1} parent=5 // pred_check
        %p173 = pneg %p172
      $region22: #{tpu_custom_call.1} parent=5 // pred_check_branch
        %175 = sbr.rel (%p173) target = $region24
      $region23: #{tpu_custom_call.1} parent=5 // pred_region
        // Predicated region
        $region25: #{tpu_custom_call.1} parent=23 // pred_check
          %p176 = pneg %p48
        $region26: #{tpu_custom_call.1} parent=23 // pred_check_branch
          %178 = sbr.rel (%p176) target = $region28
        $region27: #{tpu_custom_call.1} parent=23 // pred_region
          %s179 = sand.u32 %s38, 1
          %s180 = scalar_lea.sflag [#allocation4], %s179
          %s181 = sand.u32 %s38, 1
          %s182 = smul.addr %s181, 116
          %s183 = scalar_lea.vmem [#allocation3], %s182
          %185 = vsyncadd %s180, 0
          %s186 = smul.addr %s23, 29
          %s187 = smul.addr %s186, 4
          %s188 = scalar_lea.hbm %s0, %s187
          %s190 = sshll.u32 %s188, 4
          %s191 = int_to_ptr.hbm [resolvable:$true] %s190
          %s192 = sshll.u32 %s183, 4
          %s193 = int_to_ptr.vmem [resolvable:$true] %s192
          %195 = dma.hbm_to_vmem [thread:$0]  %s191, 1856, %s193, %s180
        $region28: #{tpu_custom_call.1} parent=23 // pred_fallthru
          _
      $region24: #{tpu_custom_call.1} parent=5 // pred_fallthru
        _
      %p196 = scmp.le.s32.totalorder 1, %s16
      %p197 = scmp.lt.s32.totalorder %s16, 3
      %p198 = pnand %p196, %p197
      %p199 = pneg %p198
      // Predicated region
      $region29: #{tpu_custom_call.1} parent=5 // pred_check
        _
      $region30: #{tpu_custom_call.1} parent=5 // pred_check_branch
        %201 = sbr.rel (%p198) target = $region32
      $region31: #{tpu_custom_call.1} parent=5 // pred_region
        %s202 = ssub.s32 %s16, 1
        %s203 = sand.u32 %s41, 1
        %s204 = scalar_lea.sflag [#allocation4], %s203
        %s205 = sand.u32 %s41, 1
        %s206 = smul.addr %s205, 116
        %s207 = scalar_lea.vmem [#allocation3], %s206
        // Predicated region
        $region33: #{tpu_custom_call.1} parent=31 // pred_check
          %p208 = pneg %p54
        $region34: #{tpu_custom_call.1} parent=31 // pred_check_branch
          %210 = sbr.rel (%p208) target = $region36
        $region35: #{tpu_custom_call.1} parent=31 // pred_region
          %212 = dma.done %s204, 1856
        $region36: #{tpu_custom_call.1} parent=31 // pred_fallthru
          _
        // Predicated region
        $region37: #{tpu_custom_call.1} parent=31 // pred_check
          %p213 = pneg %p80
        $region38: #{tpu_custom_call.1} parent=31 // pred_check_branch
          %215 = sbr.rel (%p213) target = $region40
        $region39: #{tpu_custom_call.1} parent=31 // pred_region
          %217 = dma.done [#allocation7], 192
        $region40: #{tpu_custom_call.1} parent=31 // pred_fallthru
          _
        // Predicated region
        $region41: #{tpu_custom_call.1} parent=31 // pred_check
          %p218 = pneg %p101
        $region42: #{tpu_custom_call.1} parent=31 // pred_check_branch
          %220 = sbr.rel (%p218) target = $region44
        $region43: #{tpu_custom_call.1} parent=31 // pred_region
          %222 = dma.done [#allocation7], 384
        $region44: #{tpu_custom_call.1} parent=31 // pred_fallthru
          _
        %s223 = sand.u32 %s41, 1
        %s224 = scalar_lea.sflag [#allocation4], %s223
        %s225 = sand.u32 %s41, 1
        %s226 = smul.addr %s225, 116
        %s227 = scalar_lea.vmem [#allocation3], %s226
        %p228 = pneg %p54
        %p229 = pneg %p51
        %p230 = pneg %p80
        %p231 = pneg %p77
        %p232 = pneg %p101
        %p233 = pneg %p98
        %p234 = pneg %p129
        %p235 = pneg %p126
        %s236 = sand.u32 %s116, 1
        %s237 = scalar_lea.sflag [#allocation5], %s236
        %s238 = sand.u32 %s116, 1
        %s239 = smul.addr %s238, 232
        %s240 = scalar_lea.vmem [#allocation9], %s239
        %v242 = vld [vmem:[%s207] sm:$0xff]
        %v243 = vld [vmem:[%s207 + $0x8] sm:$0xff]
        %v244 = vld [vmem:[%s207 + $0x10] sm:$0xff]
        %v245 = vld [vmem:[%s207 + $0x18] sm:$0xff]
        %v246 = vld [vmem:[%s207 + $0x20] sm:$0xff]
        %v247 = vld [vmem:[%s207 + $0x28] sm:$0xff]
        %v248 = vld [vmem:[%s207 + $0x30] sm:$0xff]
        %v249 = vld [vmem:[%s207 + $0x38] sm:$0xff]
        %v250 = vld [vmem:[%s207 + $0x40] sm:$0xff]
        %v251 = vld [vmem:[%s207 + $0x48] sm:$0xff]
        %v252 = vld [vmem:[%s207 + $0x50] sm:$0xff]
        %v253 = vld [vmem:[%s207 + $0x58] sm:$0xff]
        %v254 = vld [vmem:[%s207 + $0x60] sm:$0xff]
        %v255 = vld [vmem:[%s207 + $0x68] sm:$0xff]
        %270 = vst [vmem:[#allocation1] ss:$2 sm:$0xff] %v242
        %s271 = scalar_lea.vmem [#allocation1], 16
        %272 = vst [vmem:[%s271] ss:$2 sm:$0xff] %v243
        %s273 = scalar_lea.vmem [#allocation1], 32
        %274 = vst [vmem:[%s273] ss:$2 sm:$0xff] %v244
        %s275 = scalar_lea.vmem [#allocation1], 48
        %276 = vst [vmem:[%s275] ss:$2 sm:$0xff] %v245
        %v277 = vld.sshfl [vmem:[#allocation1] sm:$0xff pattern:$0x75316420]
        %v278 = vld.sshfl [vmem:[#allocation1 + $0x8] sm:$0xff pattern:$0x75316420]
        %v279 = vld.sshfl [vmem:[#allocation1 + $0x10] sm:$0xff pattern:$0x75316420]
        %v280 = vld.sshfl [vmem:[#allocation1 + $0x18] sm:$0xff pattern:$0x75316420]
        %v281 = vld.sshfl [vmem:[#allocation1 + $0x20] sm:$0xff pattern:$0x75316420]
        %v282 = vld.sshfl [vmem:[#allocation1 + $0x28] sm:$0xff pattern:$0x75316420]
        %v283 = vld.sshfl [vmem:[#allocation1 + $0x30] sm:$0xff pattern:$0x75316420]
        %v284 = vld.sshfl [vmem:[#allocation1 + $0x38] sm:$0xff pattern:$0x75316420]
        %285 = vst [vmem:[#allocation1] ss:$2 sm:$0xff] %v246
        %286 = vst [vmem:[%s271] ss:$2 sm:$0xff] %v247
        %287 = vst [vmem:[%s273] ss:$2 sm:$0xff] %v248
        %288 = vst [vmem:[%s275] ss:$2 sm:$0xff] %v249
        %v289 = vld.sshfl [vmem:[#allocation1] sm:$0xff pattern:$0x75316420]
        %v290 = vld.sshfl [vmem:[#allocation1 + $0x8] sm:$0xff pattern:$0x75316420]
        %v291 = vld.sshfl [vmem:[#allocation1 + $0x10] sm:$0xff pattern:$0x75316420]
        %v292 = vld.sshfl [vmem:[#allocation1 + $0x18] sm:$0xff pattern:$0x75316420]
        %v293 = vld.sshfl [vmem:[#allocation1 + $0x20] sm:$0xff pattern:$0x75316420]
        %v294 = vld.sshfl [vmem:[#allocation1 + $0x28] sm:$0xff pattern:$0x75316420]
        %v295 = vld.sshfl [vmem:[#allocation1 + $0x30] sm:$0xff pattern:$0x75316420]
        %v296 = vld.sshfl [vmem:[#allocation1 + $0x38] sm:$0xff pattern:$0x75316420]
        %297 = vst [vmem:[#allocation1] ss:$2 sm:$0xff] %v250
        %298 = vst [vmem:[%s271] ss:$2 sm:$0xff] %v251
        %299 = vst [vmem:[%s273] ss:$2 sm:$0xff] %v252
        %300 = vst [vmem:[%s275] ss:$2 sm:$0xff] %v253
        %v301 = vld.sshfl [vmem:[#allocation1] sm:$0xff pattern:$0x75316420]
        %v302 = vld.sshfl [vmem:[#allocation1 + $0x8] sm:$0xff pattern:$0x75316420]
        %v303 = vld.sshfl [vmem:[#allocation1 + $0x10] sm:$0xff pattern:$0x75316420]
        %v304 = vld.sshfl [vmem:[#allocation1 + $0x18] sm:$0xff pattern:$0x75316420]
        %v305 = vld.sshfl [vmem:[#allocation1 + $0x20] sm:$0xff pattern:$0x75316420]
        %v306 = vld.sshfl [vmem:[#allocation1 + $0x28] sm:$0xff pattern:$0x75316420]
        %v307 = vld.sshfl [vmem:[#allocation1 + $0x30] sm:$0xff pattern:$0x75316420]
        %v308 = vld.sshfl [vmem:[#allocation1 + $0x38] sm:$0xff pattern:$0x75316420]
        %309 = vst [vmem:[#allocation1] ss:$2 sm:$0xff] %v254
        %310 = vst [vmem:[%s271] ss:$2 sm:$0xff] %v255
        %v311 = vld.sshfl [vmem:[#allocation1] sm:$0xff pattern:$0x75316420]
        %v312 = vld.sshfl [vmem:[#allocation1 + $0x8] sm:$0xff pattern:$0x75316420]
        %v313 = vld.sshfl [vmem:[#allocation1 + $0x10] sm:$0xff pattern:$0x75316420]
        %v314 = vld.sshfl [vmem:[#allocation1 + $0x18] sm:$0xff pattern:$0x75316420]
        %v343 = vpack.c.bf16 %v278, %v277
        %v344 = vpack.c.bf16 %v280, %v279
        %v345 = vpack.c.bf16 %v282, %v281
        %v346 = vpack.c.bf16 %v284, %v283
        %v347 = vpack.c.bf16 %v290, %v289
        %v348 = vpack.c.bf16 %v292, %v291
        %v349 = vpack.c.bf16 %v294, %v293
        %v350 = vpack.c.bf16 %v296, %v295
        %v351 = vpack.c.bf16 %v302, %v301
        %v352 = vpack.c.bf16 %v304, %v303
        %v353 = vpack.c.bf16 %v306, %v305
        %v354 = vpack.c.bf16 %v308, %v307
        %v355 = vpack.c.bf16 %v312, %v311
        %v356 = vpack.c.bf16 %v314, %v313
        %357 = vst [vmem:[#allocation2] sm:$0x33] %v343
        %358 = vst [vmem:[#allocation2 + $0x8] sm:$0x33] %v344
        %359 = vst [vmem:[#allocation2 + $0x10] sm:$0x33] %v345
        %360 = vst [vmem:[#allocation2 + $0x18] sm:$0x33] %v346
        %361 = vst [vmem:[#allocation2 + $0x20] sm:$0x33] %v347
        %362 = vst [vmem:[#allocation2 + $0x28] sm:$0x33] %v348
        %363 = vst [vmem:[#allocation2 + $0x30] sm:$0x33] %v349
        %364 = vst [vmem:[#allocation2 + $0x38] sm:$0x33] %v350
        %365 = vst [vmem:[#allocation2 + $0x40] sm:$0x33] %v351
        %366 = vst [vmem:[#allocation2 + $0x48] sm:$0x33] %v352
        %367 = vst [vmem:[#allocation2 + $0x50] sm:$0x33] %v353
        %368 = vst [vmem:[#allocation2 + $0x58] sm:$0x33] %v354
        %369 = vst [vmem:[#allocation2 + $0x60] sm:$0x33] %v355
        %370 = vst [vmem:[#allocation2 + $0x68] sm:$0x33] %v356
        %v371 = vld [vmem:[%s207] sm:$0xff]
        %v372 = vld [vmem:[%s207 + $0x8] sm:$0xff]
        %v373 = vld [vmem:[%s207 + $0x10] sm:$0xff]
        %v374 = vld [vmem:[%s207 + $0x18] sm:$0xff]
        %v375 = vld [vmem:[%s207 + $0x20] sm:$0xff]
        %v376 = vld [vmem:[%s207 + $0x28] sm:$0xff]
        %v377 = vld [vmem:[%s207 + $0x30] sm:$0xff]
        %v378 = vld [vmem:[%s207 + $0x38] sm:$0xff]
        %v379 = vld [vmem:[%s207 + $0x40] sm:$0xff]
        %v380 = vld [vmem:[%s207 + $0x48] sm:$0xff]
        %v381 = vld [vmem:[%s207 + $0x50] sm:$0xff]
        %v382 = vld [vmem:[%s207 + $0x58] sm:$0xff]
        %v383 = vld [vmem:[%s207 + $0x60] sm:$0xff]
        %v384 = vld [vmem:[%s207 + $0x68] sm:$0xff]
        %v385 = vld [vmem:[%s207 + $0x70] sm:$0xf]
        %401 = vst [vmem:[#allocation1] ss:$2 sm:$0xff] %v371
        %s402 = scalar_lea.vmem [#allocation1], 16
        %403 = vst [vmem:[%s402] ss:$2 sm:$0xff] %v372
        %s404 = scalar_lea.vmem [#allocation1], 32
        %405 = vst [vmem:[%s404] ss:$2 sm:$0xff] %v373
        %s406 = scalar_lea.vmem [#allocation1], 48
        %407 = vst [vmem:[%s406] ss:$2 sm:$0xff] %v374
        %v408 = vld.sshfl [vmem:[#allocation1] sm:$0xff pattern:$0x75316420]
        %v409 = vld.sshfl [vmem:[#allocation1 + $0x8] sm:$0xff pattern:$0x75316420]
        %v410 = vld.sshfl [vmem:[#allocation1 + $0x10] sm:$0xff pattern:$0x75316420]
        %v411 = vld.sshfl [vmem:[#allocation1 + $0x18] sm:$0xff pattern:$0x75316420]
        %v412 = vld.sshfl [vmem:[#allocation1 + $0x20] sm:$0xff pattern:$0x75316420]
        %v413 = vld.sshfl [vmem:[#allocation1 + $0x28] sm:$0xff pattern:$0x75316420]
        %v414 = vld.sshfl [vmem:[#allocation1 + $0x30] sm:$0xff pattern:$0x75316420]
        %v415 = vld.sshfl [vmem:[#allocation1 + $0x38] sm:$0xff pattern:$0x75316420]
        %416 = vst [vmem:[#allocation1] ss:$2 sm:$0xff] %v375
        %417 = vst [vmem:[%s402] ss:$2 sm:$0xff] %v376
        %418 = vst [vmem:[%s404] ss:$2 sm:$0xff] %v377
        %419 = vst [vmem:[%s406] ss:$2 sm:$0xff] %v378
        %v420 = vld.sshfl [vmem:[#allocation1] sm:$0xff pattern:$0x75316420]
        %v421 = vld.sshfl [vmem:[#allocation1 + $0x8] sm:$0xff pattern:$0x75316420]
        %v422 = vld.sshfl [vmem:[#allocation1 + $0x10] sm:$0xff pattern:$0x75316420]
        %v423 = vld.sshfl [vmem:[#allocation1 + $0x18] sm:$0xff pattern:$0x75316420]
        %v424 = vld.sshfl [vmem:[#allocation1 + $0x20] sm:$0xff pattern:$0x75316420]
        %v425 = vld.sshfl [vmem:[#allocation1 + $0x28] sm:$0xff pattern:$0x75316420]
        %v426 = vld.sshfl [vmem:[#allocation1 + $0x30] sm:$0xff pattern:$0x75316420]
        %v427 = vld.sshfl [vmem:[#allocation1 + $0x38] sm:$0xff pattern:$0x75316420]
        %428 = vst [vmem:[#allocation1] ss:$2 sm:$0xff] %v379
        %429 = vst [vmem:[%s402] ss:$2 sm:$0xff] %v380
        %430 = vst [vmem:[%s404] ss:$2 sm:$0xff] %v381
        %431 = vst [vmem:[%s406] ss:$2 sm:$0xff] %v382
        %v432 = vld.sshfl [vmem:[#allocation1] sm:$0xff pattern:$0x75316420]
        %v433 = vld.sshfl [vmem:[#allocation1 + $0x8] sm:$0xff pattern:$0x75316420]
        %v434 = vld.sshfl [vmem:[#allocation1 + $0x10] sm:$0xff pattern:$0x75316420]
        %v435 = vld.sshfl [vmem:[#allocation1 + $0x18] sm:$0xff pattern:$0x75316420]
        %v436 = vld.sshfl [vmem:[#allocation1 + $0x20] sm:$0xff pattern:$0x75316420]
        %v437 = vld.sshfl [vmem:[#allocation1 + $0x28] sm:$0xff pattern:$0x75316420]
        %v438 = vld.sshfl [vmem:[#allocation1 + $0x30] sm:$0xff pattern:$0x75316420]
        %v439 = vld.sshfl [vmem:[#allocation1 + $0x38] sm:$0xff pattern:$0x75316420]
        %440 = vst [vmem:[#allocation1] ss:$2 sm:$0xff] %v383
        %441 = vst [vmem:[%s402] ss:$2 sm:$0xff] %v384
        %442 = vst [vmem:[%s404] ss:$2 sm:$0xff] %v385
        %v443 = vld.sshfl [vmem:[#allocation1] sm:$0xff pattern:$0x75316420]
        %v444 = vld.sshfl [vmem:[#allocation1 + $0x8] sm:$0xff pattern:$0x75316420]
        %v445 = vld.sshfl [vmem:[#allocation1 + $0x10] sm:$0xff pattern:$0x75316420]
        %v446 = vld.sshfl [vmem:[#allocation1 + $0x18] sm:$0xff pattern:$0x75316420]
        %v447 = vld.sshfl [vmem:[#allocation1 + $0x20] sm:$0xff pattern:$0x75316420]
        %v477 = vpack.c.bf16 %v409, %v408
        %v478 = vpack.c.bf16 %v411, %v410
        %v479 = vpack.c.bf16 %v413, %v412
        %v480 = vpack.c.bf16 %v415, %v414
        %v481 = vpack.c.bf16 %v421, %v420
        %v482 = vpack.c.bf16 %v423, %v422
        %v483 = vpack.c.bf16 %v425, %v424
        %v484 = vpack.c.bf16 %v427, %v426
        %v485 = vpack.c.bf16 %v433, %v432
        %v486 = vpack.c.bf16 %v435, %v434
        %v487 = vpack.c.bf16 %v437, %v436
        %v488 = vpack.c.bf16 %v439, %v438
        %v489 = vpack.c.bf16 %v444, %v443
        %v490 = vpack.c.bf16 %v446, %v445
        %v491 = vpack.c.bf16 %v447, %v447
        %v507 = vrot.slane %v477, 6
        %v508 = vrot.slane %v478, 6
        %v509 = vrot.slane %v479, 6
        %v510 = vrot.slane %v480, 6
        %v511 = vrot.slane %v481, 6
        %v512 = vrot.slane %v482, 6
        %v513 = vrot.slane %v483, 6
        %v514 = vrot.slane %v484, 6
        %v515 = vrot.slane %v485, 6
        %v516 = vrot.slane %v486, 6
        %v517 = vrot.slane %v487, 6
        %v518 = vrot.slane %v488, 6
        %v519 = vrot.slane %v489, 6
        %v520 = vrot.slane %v490, 6
        %v521 = vrot.slane %v491, 6
        %522 = vrot.lane.b32.xlu0 %v507, 127
        %v523 = vpop.permute.xlu0 %522
        %524 = vrot.lane.b32.xlu0 %v508, 127
        %v525 = vpop.permute.xlu0 %524
        %526 = vrot.lane.b32.xlu0 %v509, 127
        %v527 = vpop.permute.xlu0 %526
        %528 = vrot.lane.b32.xlu0 %v510, 127
        %v529 = vpop.permute.xlu0 %528
        %530 = vrot.lane.b32.xlu0 %v511, 127
        %v531 = vpop.permute.xlu0 %530
        %532 = vrot.lane.b32.xlu0 %v512, 127
        %v533 = vpop.permute.xlu0 %532
        %534 = vrot.lane.b32.xlu0 %v513, 127
        %v535 = vpop.permute.xlu0 %534
        %536 = vrot.lane.b32.xlu0 %v514, 127
        %v537 = vpop.permute.xlu0 %536
        %538 = vrot.lane.b32.xlu0 %v515, 127
        %v539 = vpop.permute.xlu0 %538
        %540 = vrot.lane.b32.xlu0 %v516, 127
        %v541 = vpop.permute.xlu0 %540
        %542 = vrot.lane.b32.xlu0 %v517, 127
        %v543 = vpop.permute.xlu0 %542
        %544 = vrot.lane.b32.xlu0 %v518, 127
        %v545 = vpop.permute.xlu0 %544
        %546 = vrot.lane.b32.xlu0 %v519, 127
        %v547 = vpop.permute.xlu0 %546
        %548 = vrot.lane.b32.xlu0 %v520, 127
        %v549 = vpop.permute.xlu0 %548
        %550 = vrot.lane.b32.xlu0 %v521, 127
        %v551 = vpop.permute.xlu0 %550
        %v552 = vrot.slane %v523, 4
        %v553 = vrot.slane %v525, 4
        %v554 = vrot.slane %v527, 4
        %v555 = vrot.slane %v529, 4
        %v556 = vrot.slane %v531, 4
        %v557 = vrot.slane %v533, 4
        %v558 = vrot.slane %v535, 4
        %v559 = vrot.slane %v537, 4
        %v560 = vrot.slane %v539, 4
        %v561 = vrot.slane %v541, 4
        %v562 = vrot.slane %v543, 4
        %v563 = vrot.slane %v545, 4
        %v564 = vrot.slane %v547, 4
        %v565 = vrot.slane %v549, 4
        %v566 = vrot.slane %v551, 4
        %vm567 = vcmask 1043456
        %v568 = vsel %vm567, %v552, %v553
        %vm569 = vcmask 1039360
        %v570 = vsel %vm569, %v523, %v568
        %v571 = vsel %vm567, %v553, %v554
        %v572 = vsel %vm569, %v525, %v571
        %v573 = vsel %vm567, %v554, %v555
        %v574 = vsel %vm569, %v527, %v573
        %v575 = vsel %vm567, %v555, %v556
        %v576 = vsel %vm569, %v529, %v575
        %v577 = vsel %vm567, %v556, %v557
        %v578 = vsel %vm569, %v531, %v577
        %v579 = vsel %vm567, %v557, %v558
        %v580 = vsel %vm569, %v533, %v579
        %v581 = vsel %vm567, %v558, %v559
        %v582 = vsel %vm569, %v535, %v581
        %v583 = vsel %vm567, %v559, %v560
        %v584 = vsel %vm569, %v537, %v583
        %v585 = vsel %vm567, %v560, %v561
        %v586 = vsel %vm569, %v539, %v585
        %v587 = vsel %vm567, %v561, %v562
        %v588 = vsel %vm569, %v541, %v587
        %v589 = vsel %vm567, %v562, %v563
        %v590 = vsel %vm569, %v543, %v589
        %v591 = vsel %vm567, %v563, %v564
        %v592 = vsel %vm569, %v545, %v591
        %v593 = vsel %vm567, %v564, %v565
        %v594 = vsel %vm569, %v547, %v593
        %v595 = vsel %vm567, %v565, %v566
        %v596 = vsel %vm569, %v549, %v595
        %611 = vst [vmem:[#allocation2] sm:$0xcc] %v570
        %612 = vst [vmem:[#allocation2 + $0x8] sm:$0xcc] %v572
        %613 = vst [vmem:[#allocation2 + $0x10] sm:$0xcc] %v574
        %614 = vst [vmem:[#allocation2 + $0x18] sm:$0xcc] %v576
        %615 = vst [vmem:[#allocation2 + $0x20] sm:$0xcc] %v578
        %616 = vst [vmem:[#allocation2 + $0x28] sm:$0xcc] %v580
        %617 = vst [vmem:[#allocation2 + $0x30] sm:$0xcc] %v582
        %618 = vst [vmem:[#allocation2 + $0x38] sm:$0xcc] %v584
        %619 = vst [vmem:[#allocation2 + $0x40] sm:$0xcc] %v586
        %620 = vst [vmem:[#allocation2 + $0x48] sm:$0xcc] %v588
        %621 = vst [vmem:[#allocation2 + $0x50] sm:$0xcc] %v590
        %622 = vst [vmem:[#allocation2 + $0x58] sm:$0xcc] %v592
        %623 = vst [vmem:[#allocation2 + $0x60] sm:$0xcc] %v594
        %624 = vst [vmem:[#allocation2 + $0x68] sm:$0xcc] %v596
        %v625 = vld [vmem:[%s207] sm:$0xff]
        %v626 = vld [vmem:[%s207 + $0x8] sm:$0xff]
        %v627 = vld [vmem:[%s207 + $0x10] sm:$0xff]
        %v628 = vld [vmem:[%s207 + $0x18] sm:$0xff]
        %v629 = vld [vmem:[%s207 + $0x20] sm:$0xff]
        %v630 = vld [vmem:[%s207 + $0x28] sm:$0xff]
        %v631 = vld [vmem:[%s207 + $0x30] sm:$0xff]
        %v632 = vld [vmem:[%s207 + $0x38] sm:$0xff]
        %v633 = vld [vmem:[%s207 + $0x40] sm:$0xff]
        %v634 = vld [vmem:[%s207 + $0x48] sm:$0xff]
        %v635 = vld [vmem:[%s207 + $0x50] sm:$0xff]
        %v636 = vld [vmem:[%s207 + $0x58] sm:$0xff]
        %v637 = vld [vmem:[%s207 + $0x60] sm:$0xff]
        %v638 = vld [vmem:[%s207 + $0x68] sm:$0xff]
        %v639 = vld [vmem:[%s207 + $0x70] sm:$0xf]
        %655 = vst [vmem:[#allocation1] ss:$2 sm:$0xff] %v625
        %s656 = scalar_lea.vmem [#allocation1], 16
        %657 = vst [vmem:[%s656] ss:$2 sm:$0xff] %v626
        %s658 = scalar_lea.vmem [#allocation1], 32
        %659 = vst [vmem:[%s658] ss:$2 sm:$0xff] %v627
        %s660 = scalar_lea.vmem [#allocation1], 48
        %661 = vst [vmem:[%s660] ss:$2 sm:$0xff] %v628
        %v662 = vld.sshfl [vmem:[#allocation1] sm:$0xff pattern:$0x75316420]
        %v663 = vld.sshfl [vmem:[#allocation1 + $0x8] sm:$0xff pattern:$0x75316420]
        %v664 = vld.sshfl [vmem:[#allocation1 + $0x10] sm:$0xff pattern:$0x75316420]
        %v665 = vld.sshfl [vmem:[#allocation1 + $0x18] sm:$0xff pattern:$0x75316420]
        %v666 = vld.sshfl [vmem:[#allocation1 + $0x20] sm:$0xff pattern:$0x75316420]
        %v667 = vld.sshfl [vmem:[#allocation1 + $0x28] sm:$0xff pattern:$0x75316420]
        %v668 = vld.sshfl [vmem:[#allocation1 + $0x30] sm:$0xff pattern:$0x75316420]
        %v669 = vld.sshfl [vmem:[#allocation1 + $0x38] sm:$0xff pattern:$0x75316420]
        %670 = vst [vmem:[#allocation1] ss:$2 sm:$0xff] %v629
        %671 = vst [vmem:[%s656] ss:$2 sm:$0xff] %v630
        %672 = vst [vmem:[%s658] ss:$2 sm:$0xff] %v631
        %673 = vst [vmem:[%s660] ss:$2 sm:$0xff] %v632
        %v674 = vld.sshfl [vmem:[#allocation1] sm:$0xff pattern:$0x75316420]
        %v675 = vld.sshfl [vmem:[#allocation1 + $0x8] sm:$0xff pattern:$0x75316420]
        %v676 = vld.sshfl [vmem:[#allocation1 + $0x10] sm:$0xff pattern:$0x75316420]
        %v677 = vld.sshfl [vmem:[#allocation1 + $0x18] sm:$0xff pattern:$0x75316420]
        %v678 = vld.sshfl [vmem:[#allocation1 + $0x20] sm:$0xff pattern:$0x75316420]
        %v679 = vld.sshfl [vmem:[#allocation1 + $0x28] sm:$0xff pattern:$0x75316420]
        %v680 = vld.sshfl [vmem:[#allocation1 + $0x30] sm:$0xff pattern:$0x75316420]
        %v681 = vld.sshfl [vmem:[#allocation1 + $0x38] sm:$0xff pattern:$0x75316420]
        %682 = vst [vmem:[#allocation1] ss:$2 sm:$0xff] %v633
        %683 = vst [vmem:[%s656] ss:$2 sm:$0xff] %v634
        %684 = vst [vmem:[%s658] ss:$2 sm:$0xff] %v635
        %685 = vst [vmem:[%s660] ss:$2 sm:$0xff] %v636
        %v686 = vld.sshfl [vmem:[#allocation1] sm:$0xff pattern:$0x75316420]
        %v687 = vld.sshfl [vmem:[#allocation1 + $0x8] sm:$0xff pattern:$0x75316420]
        %v688 = vld.sshfl [vmem:[#allocation1 + $0x10] sm:$0xff pattern:$0x75316420]
        %v689 = vld.sshfl [vmem:[#allocation1 + $0x18] sm:$0xff pattern:$0x75316420]
        %v690 = vld.sshfl [vmem:[#allocation1 + $0x20] sm:$0xff pattern:$0x75316420]
        %v691 = vld.sshfl [vmem:[#allocation1 + $0x28] sm:$0xff pattern:$0x75316420]
        %v692 = vld.sshfl [vmem:[#allocation1 + $0x30] sm:$0xff pattern:$0x75316420]
        %v693 = vld.sshfl [vmem:[#allocation1 + $0x38] sm:$0xff pattern:$0x75316420]
        %694 = vst [vmem:[#allocation1] ss:$2 sm:$0xff] %v637
        %695 = vst [vmem:[%s656] ss:$2 sm:$0xff] %v638
        %696 = vst [vmem:[%s658] ss:$2 sm:$0xff] %v639
        %v697 = vld.sshfl [vmem:[#allocation1] sm:$0xff pattern:$0x75316420]
        %v698 = vld.sshfl [vmem:[#allocation1 + $0x8] sm:$0xff pattern:$0x75316420]
        %v699 = vld.sshfl [vmem:[#allocation1 + $0x10] sm:$0xff pattern:$0x75316420]
        %v700 = vld.sshfl [vmem:[#allocation1 + $0x18] sm:$0xff pattern:$0x75316420]
        %v701 = vld.sshfl [vmem:[#allocation1 + $0x20] sm:$0xff pattern:$0x75316420]
        %v731 = vpack.c.bf16 %v663, %v662
        %v732 = vpack.c.bf16 %v665, %v664
        %v733 = vpack.c.bf16 %v667, %v666
        %v734 = vpack.c.bf16 %v669, %v668
        %v735 = vpack.c.bf16 %v675, %v674
        %v736 = vpack.c.bf16 %v677, %v676
        %v737 = vpack.c.bf16 %v679, %v678
        %v738 = vpack.c.bf16 %v681, %v680
        %v739 = vpack.c.bf16 %v687, %v686
        %v740 = vpack.c.bf16 %v689, %v688
        %v741 = vpack.c.bf16 %v691, %v690
        %v742 = vpack.c.bf16 %v693, %v692
        %v743 = vpack.c.bf16 %v698, %v697
        %v744 = vpack.c.bf16 %v700, %v699
        %v745 = vpack.c.bf16 %v701, %v701
        %761 = vrot.lane.b32.xlu0 %v731, 126
        %v762 = vpop.permute.xlu0 %761
        %763 = vrot.lane.b32.xlu0 %v732, 126
        %v764 = vpop.permute.xlu0 %763
        %765 = vrot.lane.b32.xlu0 %v733, 126
        %v766 = vpop.permute.xlu0 %765
        %767 = vrot.lane.b32.xlu0 %v734, 126
        %v768 = vpop.permute.xlu0 %767
        %769 = vrot.lane.b32.xlu0 %v735, 126
        %v770 = vpop.permute.xlu0 %769
        %771 = vrot.lane.b32.xlu0 %v736, 126
        %v772 = vpop.permute.xlu0 %771
        %773 = vrot.lane.b32.xlu0 %v737, 126
        %v774 = vpop.permute.xlu0 %773
        %775 = vrot.lane.b32.xlu0 %v738, 126
        %v776 = vpop.permute.xlu0 %775
        %777 = vrot.lane.b32.xlu0 %v739, 126
        %v778 = vpop.permute.xlu0 %777
        %779 = vrot.lane.b32.xlu0 %v740, 126
        %v780 = vpop.permute.xlu0 %779
        %781 = vrot.lane.b32.xlu0 %v741, 126
        %v782 = vpop.permute.xlu0 %781
        %783 = vrot.lane.b32.xlu0 %v742, 126
        %v784 = vpop.permute.xlu0 %783
        %785 = vrot.lane.b32.xlu0 %v743, 126
        %v786 = vpop.permute.xlu0 %785
        %787 = vrot.lane.b32.xlu0 %v744, 126
        %v788 = vpop.permute.xlu0 %787
        %789 = vrot.lane.b32.xlu0 %v745, 126
        %v790 = vpop.permute.xlu0 %789
        %v791 = vrot.slane %v762, 4
        %v792 = vrot.slane %v764, 4
        %v793 = vrot.slane %v766, 4
        %v794 = vrot.slane %v768, 4
        %v795 = vrot.slane %v770, 4
        %v796 = vrot.slane %v772, 4
        %v797 = vrot.slane %v774, 4
        %v798 = vrot.slane %v776, 4
        %v799 = vrot.slane %v778, 4
        %v800 = vrot.slane %v780, 4
        %v801 = vrot.slane %v782, 4
        %v802 = vrot.slane %v784, 4
        %v803 = vrot.slane %v786, 4
        %v804 = vrot.slane %v788, 4
        %v805 = vrot.slane %v790, 4
        %v806 = vsel %vm567, %v791, %v792
        %vm807 = vcmask 1031168
        %v808 = vsel %vm807, %v762, %v806
        %v809 = vsel %vm567, %v792, %v793
        %v810 = vsel %vm807, %v764, %v809
        %v811 = vsel %vm567, %v793, %v794
        %v812 = vsel %vm807, %v766, %v811
        %v813 = vsel %vm567, %v794, %v795
        %v814 = vsel %vm807, %v768, %v813
        %v815 = vsel %vm567, %v795, %v796
        %v816 = vsel %vm807, %v770, %v815
        %v817 = vsel %vm567, %v796, %v797
        %v818 = vsel %vm807, %v772, %v817
        %v819 = vsel %vm567, %v797, %v798
        %v820 = vsel %vm807, %v774, %v819
        %v821 = vsel %vm567, %v798, %v799
        %v822 = vsel %vm807, %v776, %v821
        %v823 = vsel %vm567, %v799, %v800
        %v824 = vsel %vm807, %v778, %v823
        %v825 = vsel %vm567, %v800, %v801
        %v826 = vsel %vm807, %v780, %v825
        %v827 = vsel %vm567, %v801, %v802
        %v828 = vsel %vm807, %v782, %v827
        %v829 = vsel %vm567, %v802, %v803
        %v830 = vsel %vm807, %v784, %v829
        %v831 = vsel %vm567, %v803, %v804
        %v832 = vsel %vm807, %v786, %v831
        %v833 = vsel %vm567, %v804, %v805
        %v834 = vsel %vm807, %v788, %v833
        %849 = vst [vmem:[#allocation2 + $0x70] sm:$0x33] %v808
        %850 = vst [vmem:[#allocation2 + $0x78] sm:$0x33] %v810
        %851 = vst [vmem:[#allocation2 + $0x80] sm:$0x33] %v812
        %852 = vst [vmem:[#allocation2 + $0x88] sm:$0x33] %v814
        %853 = vst [vmem:[#allocation2 + $0x90] sm:$0x33] %v816
        %854 = vst [vmem:[#allocation2 + $0x98] sm:$0x33] %v818
        %855 = vst [vmem:[#allocation2 + $0xa0] sm:$0x33] %v820
        %856 = vst [vmem:[#allocation2 + $0xa8] sm:$0x33] %v822
        %857 = vst [vmem:[#allocation2 + $0xb0] sm:$0x33] %v824
        %858 = vst [vmem:[#allocation2 + $0xb8] sm:$0x33] %v826
        %859 = vst [vmem:[#allocation2 + $0xc0] sm:$0x33] %v828
        %860 = vst [vmem:[#allocation2 + $0xc8] sm:$0x33] %v830
        %861 = vst [vmem:[#allocation2 + $0xd0] sm:$0x33] %v832
        %862 = vst [vmem:[#allocation2 + $0xd8] sm:$0x33] %v834
        %v863 = vld [vmem:[%s207] sm:$0xff]
        %v864 = vld [vmem:[%s207 + $0x8] sm:$0xff]
        %v865 = vld [vmem:[%s207 + $0x10] sm:$0xff]
        %v866 = vld [vmem:[%s207 + $0x18] sm:$0xff]
        %v867 = vld [vmem:[%s207 + $0x20] sm:$0xff]
        %v868 = vld [vmem:[%s207 + $0x28] sm:$0xff]
        %v869 = vld [vmem:[%s207 + $0x30] sm:$0xff]
        %v870 = vld [vmem:[%s207 + $0x38] sm:$0xff]
        %v871 = vld [vmem:[%s207 + $0x40] sm:$0xff]
        %v872 = vld [vmem:[%s207 + $0x48] sm:$0xff]
        %v873 = vld [vmem:[%s207 + $0x50] sm:$0xff]
        %v874 = vld [vmem:[%s207 + $0x58] sm:$0xff]
        %v875 = vld [vmem:[%s207 + $0x60] sm:$0xff]
        %v876 = vld [vmem:[%s207 + $0x68] sm:$0xff]
        %v877 = vld [vmem:[%s207 + $0x70] sm:$0xf]
        %893 = vst [vmem:[#allocation1] ss:$2 sm:$0xff] %v863
        %s894 = scalar_lea.vmem [#allocation1], 16
        %895 = vst [vmem:[%s894] ss:$2 sm:$0xff] %v864
        %s896 = scalar_lea.vmem [#allocation1], 32
        %897 = vst [vmem:[%s896] ss:$2 sm:$0xff] %v865
        %s898 = scalar_lea.vmem [#allocation1], 48
        %899 = vst [vmem:[%s898] ss:$2 sm:$0xff] %v866
        %v900 = vld.sshfl [vmem:[#allocation1] sm:$0xff pattern:$0x75316420]
        %v901 = vld.sshfl [vmem:[#allocation1 + $0x8] sm:$0xff pattern:$0x75316420]
        %v902 = vld.sshfl [vmem:[#allocation1 + $0x10] sm:$0xff pattern:$0x75316420]
        %v903 = vld.sshfl [vmem:[#allocation1 + $0x18] sm:$0xff pattern:$0x75316420]
        %v904 = vld.sshfl [vmem:[#allocation1 + $0x20] sm:$0xff pattern:$0x75316420]
        %v905 = vld.sshfl [vmem:[#allocation1 + $0x28] sm:$0xff pattern:$0x75316420]
        %v906 = vld.sshfl [vmem:[#allocation1 + $0x30] sm:$0xff pattern:$0x75316420]
        %v907 = vld.sshfl [vmem:[#allocation1 + $0x38] sm:$0xff pattern:$0x75316420]
        %908 = vst [vmem:[#allocation1] ss:$2 sm:$0xff] %v867
        %909 = vst [vmem:[%s894] ss:$2 sm:$0xff] %v868
        %910 = vst [vmem:[%s896] ss:$2 sm:$0xff] %v869
        %911 = vst [vmem:[%s898] ss:$2 sm:$0xff] %v870
        %v912 = vld.sshfl [vmem:[#allocation1] sm:$0xff pattern:$0x75316420]
        %v913 = vld.sshfl [vmem:[#allocation1 + $0x8] sm:$0xff pattern:$0x75316420]
        %v914 = vld.sshfl [vmem:[#allocation1 + $0x10] sm:$0xff pattern:$0x75316420]
        %v915 = vld.sshfl [vmem:[#allocation1 + $0x18] sm:$0xff pattern:$0x75316420]
        %v916 = vld.sshfl [vmem:[#allocation1 + $0x20] sm:$0xff pattern:$0x75316420]
        %v917 = vld.sshfl [vmem:[#allocation1 + $0x28] sm:$0xff pattern:$0x75316420]
        %v918 = vld.sshfl [vmem:[#allocation1 + $0x30] sm:$0xff pattern:$0x75316420]
        %v919 = vld.sshfl [vmem:[#allocation1 + $0x38] sm:$0xff pattern:$0x75316420]
        %920 = vst [vmem:[#allocation1] ss:$2 sm:$0xff] %v871
        %921 = vst [vmem:[%s894] ss:$2 sm:$0xff] %v872
        %922 = vst [vmem:[%s896] ss:$2 sm:$0xff] %v873
        %923 = vst [vmem:[%s898] ss:$2 sm:$0xff] %v874
        %v924 = vld.sshfl [vmem:[#allocation1] sm:$0xff pattern:$0x75316420]
        %v925 = vld.sshfl [vmem:[#allocation1 + $0x8] sm:$0xff pattern:$0x75316420]
        %v926 = vld.sshfl [vmem:[#allocation1 + $0x10] sm:$0xff pattern:$0x75316420]
        %v927 = vld.sshfl [vmem:[#allocation1 + $0x18] sm:$0xff pattern:$0x75316420]
        %v928 = vld.sshfl [vmem:[#allocation1 + $0x20] sm:$0xff pattern:$0x75316420]
        %v929 = vld.sshfl [vmem:[#allocation1 + $0x28] sm:$0xff pattern:$0x75316420]
        %v930 = vld.sshfl [vmem:[#allocation1 + $0x30] sm:$0xff pattern:$0x75316420]
        %v931 = vld.sshfl [vmem:[#allocation1 + $0x38] sm:$0xff pattern:$0x75316420]
        %932 = vst [vmem:[#allocation1] ss:$2 sm:$0xff] %v875
        %933 = vst [vmem:[%s894] ss:$2 sm:$0xff] %v876
        %934 = vst [vmem:[%s896] ss:$2 sm:$0xff] %v877
        %v935 = vld.sshfl [vmem:[#allocation1] sm:$0xff pattern:$0x75316420]
        %v936 = vld.sshfl [vmem:[#allocation1 + $0x8] sm:$0xff pattern:$0x75316420]
        %v937 = vld.sshfl [vmem:[#allocation1 + $0x10] sm:$0xff pattern:$0x75316420]
        %v938 = vld.sshfl [vmem:[#allocation1 + $0x18] sm:$0xff pattern:$0x75316420]
        %v939 = vld.sshfl [vmem:[#allocation1 + $0x20] sm:$0xff pattern:$0x75316420]
        %v969 = vpack.c.bf16 %v901, %v900
        %v970 = vpack.c.bf16 %v903, %v902
        %v971 = vpack.c.bf16 %v905, %v904
        %v972 = vpack.c.bf16 %v907, %v906
        %v973 = vpack.c.bf16 %v913, %v912
        %v974 = vpack.c.bf16 %v915, %v914
        %v975 = vpack.c.bf16 %v917, %v916
        %v976 = vpack.c.bf16 %v919, %v918
        %v977 = vpack.c.bf16 %v925, %v924
        %v978 = vpack.c.bf16 %v927, %v926
        %v979 = vpack.c.bf16 %v929, %v928
        %v980 = vpack.c.bf16 %v931, %v930
        %v981 = vpack.c.bf16 %v936, %v935
        %v982 = vpack.c.bf16 %v938, %v937
        %v983 = vpack.c.bf16 %v939, %v939
        %v999 = vrot.slane %v969, 6
        %v1000 = vrot.slane %v970, 6
        %v1001 = vrot.slane %v971, 6
        %v1002 = vrot.slane %v972, 6
        %v1003 = vrot.slane %v973, 6
        %v1004 = vrot.slane %v974, 6
        %v1005 = vrot.slane %v975, 6
        %v1006 = vrot.slane %v976, 6
        %v1007 = vrot.slane %v977, 6
        %v1008 = vrot.slane %v978, 6
        %v1009 = vrot.slane %v979, 6
        %v1010 = vrot.slane %v980, 6
        %v1011 = vrot.slane %v981, 6
        %v1012 = vrot.slane %v982, 6
        %v1013 = vrot.slane %v983, 6
        %1014 = vrot.lane.b32.xlu0 %v999, 116
        %v1015 = vpop.permute.xlu0 %1014
        %1016 = vrot.lane.b32.xlu0 %v1000, 116
        %v1017 = vpop.permute.xlu0 %1016
        %1018 = vrot.lane.b32.xlu0 %v1001, 116
        %v1019 = vpop.permute.xlu0 %1018
        %1020 = vrot.lane.b32.xlu0 %v1002, 116
        %v1021 = vpop.permute.xlu0 %1020
        %1022 = vrot.lane.b32.xlu0 %v1003, 116
        %v1023 = vpop.permute.xlu0 %1022
        %1024 = vrot.lane.b32.xlu0 %v1004, 116
        %v1025 = vpop.permute.xlu0 %1024
        %1026 = vrot.lane.b32.xlu0 %v1005, 116
        %v1027 = vpop.permute.xlu0 %1026
        %1028 = vrot.lane.b32.xlu0 %v1006, 116
        %v1029 = vpop.permute.xlu0 %1028
        %1030 = vrot.lane.b32.xlu0 %v1007, 116
        %v1031 = vpop.permute.xlu0 %1030
        %1032 = vrot.lane.b32.xlu0 %v1008, 116
        %v1033 = vpop.permute.xlu0 %1032
        %1034 = vrot.lane.b32.xlu0 %v1009, 116
        %v1035 = vpop.permute.xlu0 %1034
        %1036 = vrot.lane.b32.xlu0 %v1010, 116
        %v1037 = vpop.permute.xlu0 %1036
        %1038 = vrot.lane.b32.xlu0 %v1011, 116
        %v1039 = vpop.permute.xlu0 %1038
        %1040 = vrot.lane.b32.xlu0 %v1012, 116
        %v1041 = vpop.permute.xlu0 %1040
        %1042 = vrot.lane.b32.xlu0 %v1013, 116
        %v1043 = vpop.permute.xlu0 %1042
        %v1044 = vrot.slane %v1015, 4
        %v1045 = vrot.slane %v1017, 4
        %v1046 = vrot.slane %v1019, 4
        %v1047 = vrot.slane %v1021, 4
        %v1048 = vrot.slane %v1023, 4
        %v1049 = vrot.slane %v1025, 4
        %v1050 = vrot.slane %v1027, 4
        %v1051 = vrot.slane %v1029, 4
        %v1052 = vrot.slane %v1031, 4
        %v1053 = vrot.slane %v1033, 4
        %v1054 = vrot.slane %v1035, 4
        %v1055 = vrot.slane %v1037, 4
        %v1056 = vrot.slane %v1039, 4
        %v1057 = vrot.slane %v1041, 4
        %v1058 = vrot.slane %v1043, 4
        %v1059 = vsel %vm567, %v1044, %v1045
        %vm1060 = vcmask 949248
        %v1061 = vsel %vm1060, %v1015, %v1059
        %v1062 = vsel %vm567, %v1045, %v1046
        %v1063 = vsel %vm1060, %v1017, %v1062
        %v1064 = vsel %vm567, %v1046, %v1047
        %v1065 = vsel %vm1060, %v1019, %v1064
        %v1066 = vsel %vm567, %v1047, %v1048
        %v1067 = vsel %vm1060, %v1021, %v1066
        %v1068 = vsel %vm567, %v1048, %v1049
        %v1069 = vsel %vm1060, %v1023, %v1068
        %v1070 = vsel %vm567, %v1049, %v1050
        %v1071 = vsel %vm1060, %v1025, %v1070
        %v1072 = vsel %vm567, %v1050, %v1051
        %v1073 = vsel %vm1060, %v1027, %v1072
        %v1074 = vsel %vm567, %v1051, %v1052
        %v1075 = vsel %vm1060, %v1029, %v1074
        %v1076 = vsel %vm567, %v1052, %v1053
        %v1077 = vsel %vm1060, %v1031, %v1076
        %v1078 = vsel %vm567, %v1053, %v1054
        %v1079 = vsel %vm1060, %v1033, %v1078
        %v1080 = vsel %vm567, %v1054, %v1055
        %v1081 = vsel %vm1060, %v1035, %v1080
        %v1082 = vsel %vm567, %v1055, %v1056
        %v1083 = vsel %vm1060, %v1037, %v1082
        %v1084 = vsel %vm567, %v1056, %v1057
        %v1085 = vsel %vm1060, %v1039, %v1084
        %v1086 = vsel %vm567, %v1057, %v1058
        %v1087 = vsel %vm1060, %v1041, %v1086
        %1102 = vst [vmem:[#allocation2 + $0x70] sm:$0xcc] %v1061
        %1103 = vst [vmem:[#allocation2 + $0x78] sm:$0xcc] %v1063
        %1104 = vst [vmem:[#allocation2 + $0x80] sm:$0xcc] %v1065
        %1105 = vst [vmem:[#allocation2 + $0x88] sm:$0xcc] %v1067
        %1106 = vst [vmem:[#allocation2 + $0x90] sm:$0xcc] %v1069
        %1107 = vst [vmem:[#allocation2 + $0x98] sm:$0xcc] %v1071
        %1108 = vst [vmem:[#allocation2 + $0xa0] sm:$0xcc] %v1073
        %1109 = vst [vmem:[#allocation2 + $0xa8] sm:$0xcc] %v1075
        %1110 = vst [vmem:[#allocation2 + $0xb0] sm:$0xcc] %v1077
        %1111 = vst [vmem:[#allocation2 + $0xb8] sm:$0xcc] %v1079
        %1112 = vst [vmem:[#allocation2 + $0xc0] sm:$0xcc] %v1081
        %1113 = vst [vmem:[#allocation2 + $0xc8] sm:$0xcc] %v1083
        %1114 = vst [vmem:[#allocation2 + $0xd0] sm:$0xcc] %v1085
        %1115 = vst [vmem:[#allocation2 + $0xd8] sm:$0xcc] %v1087
        %v1116 = vld [vmem:[%s207] sm:$0xff]
        %v1117 = vld [vmem:[%s207 + $0x8] sm:$0xff]
        %v1118 = vld [vmem:[%s207 + $0x10] sm:$0xff]
        %v1119 = vld [vmem:[%s207 + $0x18] sm:$0xff]
        %v1120 = vld [vmem:[%s207 + $0x20] sm:$0xff]
        %v1121 = vld [vmem:[%s207 + $0x28] sm:$0xff]
        %v1122 = vld [vmem:[%s207 + $0x30] sm:$0xff]
        %v1123 = vld [vmem:[%s207 + $0x38] sm:$0xff]
        %v1124 = vld [vmem:[%s207 + $0x40] sm:$0xff]
        %v1125 = vld [vmem:[%s207 + $0x48] sm:$0xff]
        %v1126 = vld [vmem:[%s207 + $0x50] sm:$0xff]
        %v1127 = vld [vmem:[%s207 + $0x58] sm:$0xff]
        %v1128 = vld [vmem:[%s207 + $0x60] sm:$0xff]
        %v1129 = vld [vmem:[%s207 + $0x68] sm:$0xff]
        %v1130 = vld [vmem:[%s207 + $0x70] sm:$0xf]
        %1146 = vst [vmem:[#allocation1] ss:$2 sm:$0xff] %v1116
        %s1147 = scalar_lea.vmem [#allocation1], 16
        %1148 = vst [vmem:[%s1147] ss:$2 sm:$0xff] %v1117
        %s1149 = scalar_lea.vmem [#allocation1], 32
        %1150 = vst [vmem:[%s1149] ss:$2 sm:$0xff] %v1118
        %s1151 = scalar_lea.vmem [#allocation1], 48
        %1152 = vst [vmem:[%s1151] ss:$2 sm:$0xff] %v1119
        %v1153 = vld.sshfl [vmem:[#allocation1] sm:$0xff pattern:$0x75316420]
        %v1154 = vld.sshfl [vmem:[#allocation1 + $0x8] sm:$0xff pattern:$0x75316420]
        %v1155 = vld.sshfl [vmem:[#allocation1 + $0x10] sm:$0xff pattern:$0x75316420]
        %v1156 = vld.sshfl [vmem:[#allocation1 + $0x18] sm:$0xff pattern:$0x75316420]
        %v1157 = vld.sshfl [vmem:[#allocation1 + $0x20] sm:$0xff pattern:$0x75316420]
        %v1158 = vld.sshfl [vmem:[#allocation1 + $0x28] sm:$0xff pattern:$0x75316420]
        %v1159 = vld.sshfl [vmem:[#allocation1 + $0x30] sm:$0xff pattern:$0x75316420]
        %v1160 = vld.sshfl [vmem:[#allocation1 + $0x38] sm:$0xff pattern:$0x75316420]
        %1161 = vst [vmem:[#allocation1] ss:$2 sm:$0xff] %v1120
        %1162 = vst [vmem:[%s1147] ss:$2 sm:$0xff] %v1121
        %1163 = vst [vmem:[%s1149] ss:$2 sm:$0xff] %v1122
        %1164 = vst [vmem:[%s1151] ss:$2 sm:$0xff] %v1123
        %v1165 = vld.sshfl [vmem:[#allocation1] sm:$0xff pattern:$0x75316420]
        %v1166 = vld.sshfl [vmem:[#allocation1 + $0x8] sm:$0xff pattern:$0x75316420]
        %v1167 = vld.sshfl [vmem:[#allocation1 + $0x10] sm:$0xff pattern:$0x75316420]
        %v1168 = vld.sshfl [vmem:[#allocation1 + $0x18] sm:$0xff pattern:$0x75316420]
        %v1169 = vld.sshfl [vmem:[#allocation1 + $0x20] sm:$0xff pattern:$0x75316420]
        %v1170 = vld.sshfl [vmem:[#allocation1 + $0x28] sm:$0xff pattern:$0x75316420]
        %v1171 = vld.sshfl [vmem:[#allocation1 + $0x30] sm:$0xff pattern:$0x75316420]
        %v1172 = vld.sshfl [vmem:[#allocation1 + $0x38] sm:$0xff pattern:$0x75316420]
        %1173 = vst [vmem:[#allocation1] ss:$2 sm:$0xff] %v1124
        %1174 = vst [vmem:[%s1147] ss:$2 sm:$0xff] %v1125
        %1175 = vst [vmem:[%s1149] ss:$2 sm:$0xff] %v1126
        %1176 = vst [vmem:[%s1151] ss:$2 sm:$0xff] %v1127
        %v1177 = vld.sshfl [vmem:[#allocation1] sm:$0xff pattern:$0x75316420]
        %v1178 = vld.sshfl [vmem:[#allocation1 + $0x8] sm:$0xff pattern:$0x75316420]
        %v1179 = vld.sshfl [vmem:[#allocation1 + $0x10] sm:$0xff pattern:$0x75316420]
        %v1180 = vld.sshfl [vmem:[#allocation1 + $0x18] sm:$0xff pattern:$0x75316420]
        %v1181 = vld.sshfl [vmem:[#allocation1 + $0x20] sm:$0xff pattern:$0x75316420]
        %v1182 = vld.sshfl [vmem:[#allocation1 + $0x28] sm:$0xff pattern:$0x75316420]
        %v1183 = vld.sshfl [vmem:[#allocation1 + $0x30] sm:$0xff pattern:$0x75316420]
        %v1184 = vld.sshfl [vmem:[#allocation1 + $0x38] sm:$0xff pattern:$0x75316420]
        %1185 = vst [vmem:[#allocation1] ss:$2 sm:$0xff] %v1128
        %1186 = vst [vmem:[%s1147] ss:$2 sm:$0xff] %v1129
        %1187 = vst [vmem:[%s1149] ss:$2 sm:$0xff] %v1130
        %v1188 = vld.sshfl [vmem:[#allocation1] sm:$0xff pattern:$0x75316420]
        %v1189 = vld.sshfl [vmem:[#allocation1 + $0x8] sm:$0xff pattern:$0x75316420]
        %v1190 = vld.sshfl [vmem:[#allocation1 + $0x10] sm:$0xff pattern:$0x75316420]
        %v1191 = vld.sshfl [vmem:[#allocation1 + $0x18] sm:$0xff pattern:$0x75316420]
        %v1192 = vld.sshfl [vmem:[#allocation1 + $0x20] sm:$0xff pattern:$0x75316420]
        %v1222 = vpack.c.bf16 %v1154, %v1153
        %v1223 = vpack.c.bf16 %v1156, %v1155
        %v1224 = vpack.c.bf16 %v1158, %v1157
        %v1225 = vpack.c.bf16 %v1160, %v1159
        %v1226 = vpack.c.bf16 %v1166, %v1165
        %v1227 = vpack.c.bf16 %v1168, %v1167
        %v1228 = vpack.c.bf16 %v1170, %v1169
        %v1229 = vpack.c.bf16 %v1172, %v1171
        %v1230 = vpack.c.bf16 %v1178, %v1177
        %v1231 = vpack.c.bf16 %v1180, %v1179
        %v1232 = vpack.c.bf16 %v1182, %v1181
        %v1233 = vpack.c.bf16 %v1184, %v1183
        %v1234 = vpack.c.bf16 %v1189, %v1188
        %v1235 = vpack.c.bf16 %v1191, %v1190
        %v1236 = vpack.c.bf16 %v1192, %v1192
        %1252 = vrot.lane.b32.xlu0 %v1222, 115
        %v1253 = vpop.permute.xlu0 %1252
        %1254 = vrot.lane.b32.xlu0 %v1223, 115
        %v1255 = vpop.permute.xlu0 %1254
        %1256 = vrot.lane.b32.xlu0 %v1224, 115
        %v1257 = vpop.permute.xlu0 %1256
        %1258 = vrot.lane.b32.xlu0 %v1225, 115
        %v1259 = vpop.permute.xlu0 %1258
        %1260 = vrot.lane.b32.xlu0 %v1226, 115
        %v1261 = vpop.permute.xlu0 %1260
        %1262 = vrot.lane.b32.xlu0 %v1227, 115
        %v1263 = vpop.permute.xlu0 %1262
        %1264 = vrot.lane.b32.xlu0 %v1228, 115
        %v1265 = vpop.permute.xlu0 %1264
        %1266 = vrot.lane.b32.xlu0 %v1229, 115
        %v1267 = vpop.permute.xlu0 %1266
        %1268 = vrot.lane.b32.xlu0 %v1230, 115
        %v1269 = vpop.permute.xlu0 %1268
        %1270 = vrot.lane.b32.xlu0 %v1231, 115
        %v1271 = vpop.permute.xlu0 %1270
        %1272 = vrot.lane.b32.xlu0 %v1232, 115
        %v1273 = vpop.permute.xlu0 %1272
        %1274 = vrot.lane.b32.xlu0 %v1233, 115
        %v1275 = vpop.permute.xlu0 %1274
        %1276 = vrot.lane.b32.xlu0 %v1234, 115
        %v1277 = vpop.permute.xlu0 %1276
        %1278 = vrot.lane.b32.xlu0 %v1235, 115
        %v1279 = vpop.permute.xlu0 %1278
        %1280 = vrot.lane.b32.xlu0 %v1236, 115
        %v1281 = vpop.permute.xlu0 %1280
        %v1282 = vrot.slane %v1253, 4
        %v1283 = vrot.slane %v1255, 4
        %v1284 = vrot.slane %v1257, 4
        %v1285 = vrot.slane %v1259, 4
        %v1286 = vrot.slane %v1261, 4
        %v1287 = vrot.slane %v1263, 4
        %v1288 = vrot.slane %v1265, 4
        %v1289 = vrot.slane %v1267, 4
        %v1290 = vrot.slane %v1269, 4
        %v1291 = vrot.slane %v1271, 4
        %v1292 = vrot.slane %v1273, 4
        %v1293 = vrot.slane %v1275, 4
        %v1294 = vrot.slane %v1277, 4
        %v1295 = vrot.slane %v1279, 4
        %v1296 = vrot.slane %v1281, 4
        %v1297 = vsel %vm567, %v1282, %v1283
        %vm1298 = vcmask 941056
        %v1299 = vsel %vm1298, %v1253, %v1297
        %v1300 = vsel %vm567, %v1283, %v1284
        %v1301 = vsel %vm1298, %v1255, %v1300
        %v1302 = vsel %vm567, %v1284, %v1285
        %v1303 = vsel %vm1298, %v1257, %v1302
        %v1304 = vsel %vm567, %v1285, %v1286
        %v1305 = vsel %vm1298, %v1259, %v1304
        %v1306 = vsel %vm567, %v1286, %v1287
        %v1307 = vsel %vm1298, %v1261, %v1306
        %v1308 = vsel %vm567, %v1287, %v1288
        %v1309 = vsel %vm1298, %v1263, %v1308
        %v1310 = vsel %vm567, %v1288, %v1289
        %v1311 = vsel %vm1298, %v1265, %v1310
        %v1312 = vsel %vm567, %v1289, %v1290
        %v1313 = vsel %vm1298, %v1267, %v1312
        %v1314 = vsel %vm567, %v1290, %v1291
        %v1315 = vsel %vm1298, %v1269, %v1314
        %v1316 = vsel %vm567, %v1291, %v1292
        %v1317 = vsel %vm1298, %v1271, %v1316
        %v1318 = vsel %vm567, %v1292, %v1293
        %v1319 = vsel %vm1298, %v1273, %v1318
        %v1320 = vsel %vm567, %v1293, %v1294
        %v1321 = vsel %vm1298, %v1275, %v1320
        %v1322 = vsel %vm567, %v1294, %v1295
        %v1323 = vsel %vm1298, %v1277, %v1322
        %v1324 = vsel %vm567, %v1295, %v1296
        %v1325 = vsel %vm1298, %v1279, %v1324
        %1340 = vst [vmem:[#allocation2 + $0xe0] sm:$0x33] %v1299
        %1341 = vst [vmem:[#allocation2 + $0xe8] sm:$0x33] %v1301
        %1342 = vst [vmem:[#allocation2 + $0xf0] sm:$0x33] %v1303
        %1343 = vst [vmem:[#allocation2 + $0xf8] sm:$0x33] %v1305
        %1344 = vst [vmem:[#allocation2 + $0x100] sm:$0x33] %v1307
        %1345 = vst [vmem:[#allocation2 + $0x108] sm:$0x33] %v1309
        %1346 = vst [vmem:[#allocation2 + $0x110] sm:$0x33] %v1311
        %1347 = vst [vmem:[#allocation2 + $0x118] sm:$0x33] %v1313
        %1348 = vst [vmem:[#allocation2 + $0x120] sm:$0x33] %v1315
        %1349 = vst [vmem:[#allocation2 + $0x128] sm:$0x33] %v1317
        %1350 = vst [vmem:[#allocation2 + $0x130] sm:$0x33] %v1319
        %1351 = vst [vmem:[#allocation2 + $0x138] sm:$0x33] %v1321
        %1352 = vst [vmem:[#allocation2 + $0x140] sm:$0x33] %v1323
        %1353 = vst [vmem:[#allocation2 + $0x148] sm:$0x33] %v1325
        %v1354 = vld [vmem:[%s207] sm:$0xff]
        %v1355 = vld [vmem:[%s207 + $0x8] sm:$0xff]
        %v1356 = vld [vmem:[%s207 + $0x10] sm:$0xff]
        %v1357 = vld [vmem:[%s207 + $0x18] sm:$0xff]
        %v1358 = vld [vmem:[%s207 + $0x20] sm:$0xff]
        %v1359 = vld [vmem:[%s207 + $0x28] sm:$0xff]
        %v1360 = vld [vmem:[%s207 + $0x30] sm:$0xff]
        %v1361 = vld [vmem:[%s207 + $0x38] sm:$0xff]
        %v1362 = vld [vmem:[%s207 + $0x40] sm:$0xff]
        %v1363 = vld [vmem:[%s207 + $0x48] sm:$0xff]
        %v1364 = vld [vmem:[%s207 + $0x50] sm:$0xff]
        %v1365 = vld [vmem:[%s207 + $0x58] sm:$0xff]
        %v1366 = vld [vmem:[%s207 + $0x60] sm:$0xff]
        %v1367 = vld [vmem:[%s207 + $0x68] sm:$0xff]
        %v1368 = vld [vmem:[%s207 + $0x70] sm:$0xf]
        %1384 = vst [vmem:[#allocation1] ss:$2 sm:$0xff] %v1354
        %s1385 = scalar_lea.vmem [#allocation1], 16
        %1386 = vst [vmem:[%s1385] ss:$2 sm:$0xff] %v1355
        %s1387 = scalar_lea.vmem [#allocation1], 32
        %1388 = vst [vmem:[%s1387] ss:$2 sm:$0xff] %v1356
        %s1389 = scalar_lea.vmem [#allocation1], 48
        %1390 = vst [vmem:[%s1389] ss:$2 sm:$0xff] %v1357
        %v1391 = vld.sshfl [vmem:[#allocation1] sm:$0xff pattern:$0x75316420]
        %v1392 = vld.sshfl [vmem:[#allocation1 + $0x8] sm:$0xff pattern:$0x75316420]
        %v1393 = vld.sshfl [vmem:[#allocation1 + $0x10] sm:$0xff pattern:$0x75316420]
        %v1394 = vld.sshfl [vmem:[#allocation1 + $0x18] sm:$0xff pattern:$0x75316420]
        %v1395 = vld.sshfl [vmem:[#allocation1 + $0x20] sm:$0xff pattern:$0x75316420]
        %v1396 = vld.sshfl [vmem:[#allocation1 + $0x28] sm:$0xff pattern:$0x75316420]
        %v1397 = vld.sshfl [vmem:[#allocation1 + $0x30] sm:$0xff pattern:$0x75316420]
        %v1398 = vld.sshfl [vmem:[#allocation1 + $0x38] sm:$0xff pattern:$0x75316420]
        %1399 = vst [vmem:[#allocation1] ss:$2 sm:$0xff] %v1358
        %1400 = vst [vmem:[%s1385] ss:$2 sm:$0xff] %v1359
        %1401 = vst [vmem:[%s1387] ss:$2 sm:$0xff] %v1360
        %1402 = vst [vmem:[%s1389] ss:$2 sm:$0xff] %v1361
        %v1403 = vld.sshfl [vmem:[#allocation1] sm:$0xff pattern:$0x75316420]
        %v1404 = vld.sshfl [vmem:[#allocation1 + $0x8] sm:$0xff pattern:$0x75316420]
        %v1405 = vld.sshfl [vmem:[#allocation1 + $0x10] sm:$0xff pattern:$0x75316420]
        %v1406 = vld.sshfl [vmem:[#allocation1 + $0x18] sm:$0xff pattern:$0x75316420]
        %v1407 = vld.sshfl [vmem:[#allocation1 + $0x20] sm:$0xff pattern:$0x75316420]
        %v1408 = vld.sshfl [vmem:[#allocation1 + $0x28] sm:$0xff pattern:$0x75316420]
        %v1409 = vld.sshfl [vmem:[#allocation1 + $0x30] sm:$0xff pattern:$0x75316420]
        %v1410 = vld.sshfl [vmem:[#allocation1 + $0x38] sm:$0xff pattern:$0x75316420]
        %1411 = vst [vmem:[#allocation1] ss:$2 sm:$0xff] %v1362
        %1412 = vst [vmem:[%s1385] ss:$2 sm:$0xff] %v1363
        %1413 = vst [vmem:[%s1387] ss:$2 sm:$0xff] %v1364
        %1414 = vst [vmem:[%s1389] ss:$2 sm:$0xff] %v1365
        %v1415 = vld.sshfl [vmem:[#allocation1] sm:$0xff pattern:$0x75316420]
        %v1416 = vld.sshfl [vmem:[#allocation1 + $0x8] sm:$0xff pattern:$0x75316420]
        %v1417 = vld.sshfl [vmem:[#allocation1 + $0x10] sm:$0xff pattern:$0x75316420]
        %v1418 = vld.sshfl [vmem:[#allocation1 + $0x18] sm:$0xff pattern:$0x75316420]
        %v1419 = vld.sshfl [vmem:[#allocation1 + $0x20] sm:$0xff pattern:$0x75316420]
        %v1420 = vld.sshfl [vmem:[#allocation1 + $0x28] sm:$0xff pattern:$0x75316420]
        %v1421 = vld.sshfl [vmem:[#allocation1 + $0x30] sm:$0xff pattern:$0x75316420]
        %v1422 = vld.sshfl [vmem:[#allocation1 + $0x38] sm:$0xff pattern:$0x75316420]
        %1423 = vst [vmem:[#allocation1] ss:$2 sm:$0xff] %v1366
        %1424 = vst [vmem:[%s1385] ss:$2 sm:$0xff] %v1367
        %1425 = vst [vmem:[%s1387] ss:$2 sm:$0xff] %v1368
        %v1426 = vld.sshfl [vmem:[#allocation1] sm:$0xff pattern:$0x75316420]
        %v1427 = vld.sshfl [vmem:[#allocation1 + $0x8] sm:$0xff pattern:$0x75316420]
        %v1428 = vld.sshfl [vmem:[#allocation1 + $0x10] sm:$0xff pattern:$0x75316420]
        %v1429 = vld.sshfl [vmem:[#allocation1 + $0x18] sm:$0xff pattern:$0x75316420]
        %v1430 = vld.sshfl [vmem:[#allocation1 + $0x20] sm:$0xff pattern:$0x75316420]
        %v1460 = vpack.c.bf16 %v1392, %v1391
        %v1461 = vpack.c.bf16 %v1394, %v1393
        %v1462 = vpack.c.bf16 %v1396, %v1395
        %v1463 = vpack.c.bf16 %v1398, %v1397
        %v1464 = vpack.c.bf16 %v1404, %v1403
        %v1465 = vpack.c.bf16 %v1406, %v1405
        %v1466 = vpack.c.bf16 %v1408, %v1407
        %v1467 = vpack.c.bf16 %v1410, %v1409
        %v1468 = vpack.c.bf16 %v1416, %v1415
        %v1469 = vpack.c.bf16 %v1418, %v1417
        %v1470 = vpack.c.bf16 %v1420, %v1419
        %v1471 = vpack.c.bf16 %v1422, %v1421
        %v1472 = vpack.c.bf16 %v1427, %v1426
        %v1473 = vpack.c.bf16 %v1429, %v1428
        %v1474 = vpack.c.bf16 %v1430, %v1430
        %v1490 = vrot.slane %v1460, 6
        %v1491 = vrot.slane %v1461, 6
        %v1492 = vrot.slane %v1462, 6
        %v1493 = vrot.slane %v1463, 6
        %v1494 = vrot.slane %v1464, 6
        %v1495 = vrot.slane %v1465, 6
        %v1496 = vrot.slane %v1466, 6
        %v1497 = vrot.slane %v1467, 6
        %v1498 = vrot.slane %v1468, 6
        %v1499 = vrot.slane %v1469, 6
        %v1500 = vrot.slane %v1470, 6
        %v1501 = vrot.slane %v1471, 6
        %v1502 = vrot.slane %v1472, 6
        %v1503 = vrot.slane %v1473, 6
        %v1504 = vrot.slane %v1474, 6
        %1505 = vrot.lane.b32.xlu0 %v1490, 114
        %v1506 = vpop.permute.xlu0 %1505
        %1507 = vrot.lane.b32.xlu0 %v1491, 114
        %v1508 = vpop.permute.xlu0 %1507
        %1509 = vrot.lane.b32.xlu0 %v1492, 114
        %v1510 = vpop.permute.xlu0 %1509
        %1511 = vrot.lane.b32.xlu0 %v1493, 114
        %v1512 = vpop.permute.xlu0 %1511
        %1513 = vrot.lane.b32.xlu0 %v1494, 114
        %v1514 = vpop.permute.xlu0 %1513
        %1515 = vrot.lane.b32.xlu0 %v1495, 114
        %v1516 = vpop.permute.xlu0 %1515
        %1517 = vrot.lane.b32.xlu0 %v1496, 114
        %v1518 = vpop.permute.xlu0 %1517
        %1519 = vrot.lane.b32.xlu0 %v1497, 114
        %v1520 = vpop.permute.xlu0 %1519
        %1521 = vrot.lane.b32.xlu0 %v1498, 114
        %v1522 = vpop.permute.xlu0 %1521
        %1523 = vrot.lane.b32.xlu0 %v1499, 114
        %v1524 = vpop.permute.xlu0 %1523
        %1525 = vrot.lane.b32.xlu0 %v1500, 114
        %v1526 = vpop.permute.xlu0 %1525
        %1527 = vrot.lane.b32.xlu0 %v1501, 114
        %v1528 = vpop.permute.xlu0 %1527
        %1529 = vrot.lane.b32.xlu0 %v1502, 114
        %v1530 = vpop.permute.xlu0 %1529
        %1531 = vrot.lane.b32.xlu0 %v1503, 114
        %v1532 = vpop.permute.xlu0 %1531
        %1533 = vrot.lane.b32.xlu0 %v1504, 114
        %v1534 = vpop.permute.xlu0 %1533
        %v1535 = vrot.slane %v1506, 4
        %v1536 = vrot.slane %v1508, 4
        %v1537 = vrot.slane %v1510, 4
        %v1538 = vrot.slane %v1512, 4
        %v1539 = vrot.slane %v1514, 4
        %v1540 = vrot.slane %v1516, 4
        %v1541 = vrot.slane %v1518, 4
        %v1542 = vrot.slane %v1520, 4
        %v1543 = vrot.slane %v1522, 4
        %v1544 = vrot.slane %v1524, 4
        %v1545 = vrot.slane %v1526, 4
        %v1546 = vrot.slane %v1528, 4
        %v1547 = vrot.slane %v1530, 4
        %v1548 = vrot.slane %v1532, 4
        %v1549 = vrot.slane %v1534, 4
        %v1550 = vsel %vm567, %v1535, %v1536
        %vm1551 = vcmask 932864
        %v1552 = vsel %vm1551, %v1506, %v1550
        %v1553 = vsel %vm567, %v1536, %v1537
        %v1554 = vsel %vm1551, %v1508, %v1553
        %v1555 = vsel %vm567, %v1537, %v1538
        %v1556 = vsel %vm1551, %v1510, %v1555
        %v1557 = vsel %vm567, %v1538, %v1539
        %v1558 = vsel %vm1551, %v1512, %v1557
        %v1559 = vsel %vm567, %v1539, %v1540
        %v1560 = vsel %vm1551, %v1514, %v1559
        %v1561 = vsel %vm567, %v1540, %v1541
        %v1562 = vsel %vm1551, %v1516, %v1561
        %v1563 = vsel %vm567, %v1541, %v1542
        %v1564 = vsel %vm1551, %v1518, %v1563
        %v1565 = vsel %vm567, %v1542, %v1543
        %v1566 = vsel %vm1551, %v1520, %v1565
        %v1567 = vsel %vm567, %v1543, %v1544
        %v1568 = vsel %vm1551, %v1522, %v1567
        %v1569 = vsel %vm567, %v1544, %v1545
        %v1570 = vsel %vm1551, %v1524, %v1569
        %v1571 = vsel %vm567, %v1545, %v1546
        %v1572 = vsel %vm1551, %v1526, %v1571
        %v1573 = vsel %vm567, %v1546, %v1547
        %v1574 = vsel %vm1551, %v1528, %v1573
        %v1575 = vsel %vm567, %v1547, %v1548
        %v1576 = vsel %vm1551, %v1530, %v1575
        %v1577 = vsel %vm567, %v1548, %v1549
        %v1578 = vsel %vm1551, %v1532, %v1577
        %1593 = vst [vmem:[#allocation2 + $0xe0] sm:$0xcc] %v1552
        %1594 = vst [vmem:[#allocation2 + $0xe8] sm:$0xcc] %v1554
        %1595 = vst [vmem:[#allocation2 + $0xf0] sm:$0xcc] %v1556
        %1596 = vst [vmem:[#allocation2 + $0xf8] sm:$0xcc] %v1558
        %1597 = vst [vmem:[#allocation2 + $0x100] sm:$0xcc] %v1560
        %1598 = vst [vmem:[#allocation2 + $0x108] sm:$0xcc] %v1562
        %1599 = vst [vmem:[#allocation2 + $0x110] sm:$0xcc] %v1564
        %1600 = vst [vmem:[#allocation2 + $0x118] sm:$0xcc] %v1566
        %1601 = vst [vmem:[#allocation2 + $0x120] sm:$0xcc] %v1568
        %1602 = vst [vmem:[#allocation2 + $0x128] sm:$0xcc] %v1570
        %1603 = vst [vmem:[#allocation2 + $0x130] sm:$0xcc] %v1572
        %1604 = vst [vmem:[#allocation2 + $0x138] sm:$0xcc] %v1574
        %1605 = vst [vmem:[#allocation2 + $0x140] sm:$0xcc] %v1576
        %1606 = vst [vmem:[#allocation2 + $0x148] sm:$0xcc] %v1578
        %v1607 = vld [vmem:[%s207] sm:$0xff]
        %v1608 = vld [vmem:[%s207 + $0x8] sm:$0xff]
        %v1609 = vld [vmem:[%s207 + $0x10] sm:$0xff]
        %v1610 = vld [vmem:[%s207 + $0x18] sm:$0xff]
        %v1611 = vld [vmem:[%s207 + $0x20] sm:$0xff]
        %v1612 = vld [vmem:[%s207 + $0x28] sm:$0xff]
        %v1613 = vld [vmem:[%s207 + $0x30] sm:$0xff]
        %v1614 = vld [vmem:[%s207 + $0x38] sm:$0xff]
        %v1615 = vld [vmem:[%s207 + $0x40] sm:$0xff]
        %v1616 = vld [vmem:[%s207 + $0x48] sm:$0xff]
        %v1617 = vld [vmem:[%s207 + $0x50] sm:$0xff]
        %v1618 = vld [vmem:[%s207 + $0x58] sm:$0xff]
        %v1619 = vld [vmem:[%s207 + $0x60] sm:$0xff]
        %v1620 = vld [vmem:[%s207 + $0x68] sm:$0xff]
        %v1621 = vld [vmem:[%s207 + $0x70] sm:$0xf]
        %1637 = vst [vmem:[#allocation1] ss:$2 sm:$0xff] %v1607
        %s1638 = scalar_lea.vmem [#allocation1], 16
        %1639 = vst [vmem:[%s1638] ss:$2 sm:$0xff] %v1608
        %s1640 = scalar_lea.vmem [#allocation1], 32
        %1641 = vst [vmem:[%s1640] ss:$2 sm:$0xff] %v1609
        %s1642 = scalar_lea.vmem [#allocation1], 48
        %1643 = vst [vmem:[%s1642] ss:$2 sm:$0xff] %v1610
        %v1644 = vld.sshfl [vmem:[#allocation1] sm:$0xff pattern:$0x75316420]
        %v1645 = vld.sshfl [vmem:[#allocation1 + $0x8] sm:$0xff pattern:$0x75316420]
        %v1646 = vld.sshfl [vmem:[#allocation1 + $0x10] sm:$0xff pattern:$0x75316420]
        %v1647 = vld.sshfl [vmem:[#allocation1 + $0x18] sm:$0xff pattern:$0x75316420]
        %v1648 = vld.sshfl [vmem:[#allocation1 + $0x20] sm:$0xff pattern:$0x75316420]
        %v1649 = vld.sshfl [vmem:[#allocation1 + $0x28] sm:$0xff pattern:$0x75316420]
        %v1650 = vld.sshfl [vmem:[#allocation1 + $0x30] sm:$0xff pattern:$0x75316420]
        %v1651 = vld.sshfl [vmem:[#allocation1 + $0x38] sm:$0xff pattern:$0x75316420]
        %1652 = vst [vmem:[#allocation1] ss:$2 sm:$0xff] %v1611
        %1653 = vst [vmem:[%s1638] ss:$2 sm:$0xff] %v1612
        %1654 = vst [vmem:[%s1640] ss:$2 sm:$0xff] %v1613
        %1655 = vst [vmem:[%s1642] ss:$2 sm:$0xff] %v1614
        %v1656 = vld.sshfl [vmem:[#allocation1] sm:$0xff pattern:$0x75316420]
        %v1657 = vld.sshfl [vmem:[#allocation1 + $0x8] sm:$0xff pattern:$0x75316420]
        %v1658 = vld.sshfl [vmem:[#allocation1 + $0x10] sm:$0xff pattern:$0x75316420]
        %v1659 = vld.sshfl [vmem:[#allocation1 + $0x18] sm:$0xff pattern:$0x75316420]
        %v1660 = vld.sshfl [vmem:[#allocation1 + $0x20] sm:$0xff pattern:$0x75316420]
        %v1661 = vld.sshfl [vmem:[#allocation1 + $0x28] sm:$0xff pattern:$0x75316420]
        %v1662 = vld.sshfl [vmem:[#allocation1 + $0x30] sm:$0xff pattern:$0x75316420]
        %v1663 = vld.sshfl [vmem:[#allocation1 + $0x38] sm:$0xff pattern:$0x75316420]
        %1664 = vst [vmem:[#allocation1] ss:$2 sm:$0xff] %v1615
        %1665 = vst [vmem:[%s1638] ss:$2 sm:$0xff] %v1616
        %1666 = vst [vmem:[%s1640] ss:$2 sm:$0xff] %v1617
        %1667 = vst [vmem:[%s1642] ss:$2 sm:$0xff] %v1618
        %v1668 = vld.sshfl [vmem:[#allocation1] sm:$0xff pattern:$0x75316420]
        %v1669 = vld.sshfl [vmem:[#allocation1 + $0x8] sm:$0xff pattern:$0x75316420]
        %v1670 = vld.sshfl [vmem:[#allocation1 + $0x10] sm:$0xff pattern:$0x75316420]
        %v1671 = vld.sshfl [vmem:[#allocation1 + $0x18] sm:$0xff pattern:$0x75316420]
        %v1672 = vld.sshfl [vmem:[#allocation1 + $0x20] sm:$0xff pattern:$0x75316420]
        %v1673 = vld.sshfl [vmem:[#allocation1 + $0x28] sm:$0xff pattern:$0x75316420]
        %v1674 = vld.sshfl [vmem:[#allocation1 + $0x30] sm:$0xff pattern:$0x75316420]
        %v1675 = vld.sshfl [vmem:[#allocation1 + $0x38] sm:$0xff pattern:$0x75316420]
        %1676 = vst [vmem:[#allocation1] ss:$2 sm:$0xff] %v1619
        %1677 = vst [vmem:[%s1638] ss:$2 sm:$0xff] %v1620
        %1678 = vst [vmem:[%s1640] ss:$2 sm:$0xff] %v1621
        %v1679 = vld.sshfl [vmem:[#allocation1] sm:$0xff pattern:$0x75316420]
        %v1680 = vld.sshfl [vmem:[#allocation1 + $0x8] sm:$0xff pattern:$0x75316420]
        %v1681 = vld.sshfl [vmem:[#allocation1 + $0x10] sm:$0xff pattern:$0x75316420]
        %v1682 = vld.sshfl [vmem:[#allocation1 + $0x18] sm:$0xff pattern:$0x75316420]
        %v1683 = vld.sshfl [vmem:[#allocation1 + $0x20] sm:$0xff pattern:$0x75316420]
        %v1713 = vpack.c.bf16 %v1645, %v1644
        %v1714 = vpack.c.bf16 %v1647, %v1646
        %v1715 = vpack.c.bf16 %v1649, %v1648
        %v1716 = vpack.c.bf16 %v1651, %v1650
        %v1717 = vpack.c.bf16 %v1657, %v1656
        %v1718 = vpack.c.bf16 %v1659, %v1658
        %v1719 = vpack.c.bf16 %v1661, %v1660
        %v1720 = vpack.c.bf16 %v1663, %v1662
        %v1721 = vpack.c.bf16 %v1669, %v1668
        %v1722 = vpack.c.bf16 %v1671, %v1670
        %v1723 = vpack.c.bf16 %v1673, %v1672
        %v1724 = vpack.c.bf16 %v1675, %v1674
        %v1725 = vpack.c.bf16 %v1680, %v1679
        %v1726 = vpack.c.bf16 %v1682, %v1681
        %v1727 = vpack.c.bf16 %v1683, %v1683
        %1743 = vrot.lane.b32.xlu0 %v1713, 104
        %v1744 = vpop.permute.xlu0 %1743
        %1745 = vrot.lane.b32.xlu0 %v1714, 104
        %v1746 = vpop.permute.xlu0 %1745
        %1747 = vrot.lane.b32.xlu0 %v1715, 104
        %v1748 = vpop.permute.xlu0 %1747
        %1749 = vrot.lane.b32.xlu0 %v1716, 104
        %v1750 = vpop.permute.xlu0 %1749
        %1751 = vrot.lane.b32.xlu0 %v1717, 104
        %v1752 = vpop.permute.xlu0 %1751
        %1753 = vrot.lane.b32.xlu0 %v1718, 104
        %v1754 = vpop.permute.xlu0 %1753
        %1755 = vrot.lane.b32.xlu0 %v1719, 104
        %v1756 = vpop.permute.xlu0 %1755
        %1757 = vrot.lane.b32.xlu0 %v1720, 104
        %v1758 = vpop.permute.xlu0 %1757
        %1759 = vrot.lane.b32.xlu0 %v1721, 104
        %v1760 = vpop.permute.xlu0 %1759
        %1761 = vrot.lane.b32.xlu0 %v1722, 104
        %v1762 = vpop.permute.xlu0 %1761
        %1763 = vrot.lane.b32.xlu0 %v1723, 104
        %v1764 = vpop.permute.xlu0 %1763
        %1765 = vrot.lane.b32.xlu0 %v1724, 104
        %v1766 = vpop.permute.xlu0 %1765
        %1767 = vrot.lane.b32.xlu0 %v1725, 104
        %v1768 = vpop.permute.xlu0 %1767
        %1769 = vrot.lane.b32.xlu0 %v1726, 104
        %v1770 = vpop.permute.xlu0 %1769
        %1771 = vrot.lane.b32.xlu0 %v1727, 104
        %v1772 = vpop.permute.xlu0 %1771
        %v1773 = vrot.slane %v1744, 4
        %v1774 = vrot.slane %v1746, 4
        %v1775 = vrot.slane %v1748, 4
        %v1776 = vrot.slane %v1750, 4
        %v1777 = vrot.slane %v1752, 4
        %v1778 = vrot.slane %v1754, 4
        %v1779 = vrot.slane %v1756, 4
        %v1780 = vrot.slane %v1758, 4
        %v1781 = vrot.slane %v1760, 4
        %v1782 = vrot.slane %v1762, 4
        %v1783 = vrot.slane %v1764, 4
        %v1784 = vrot.slane %v1766, 4
        %v1785 = vrot.slane %v1768, 4
        %v1786 = vrot.slane %v1770, 4
        %v1787 = vrot.slane %v1772, 4
        %v1788 = vsel %vm567, %v1773, %v1774
        %vm1789 = vcmask 850944
        %v1790 = vsel %vm1789, %v1744, %v1788
        %v1791 = vsel %vm567, %v1774, %v1775
        %v1792 = vsel %vm1789, %v1746, %v1791
        %v1793 = vsel %vm567, %v1775, %v1776
        %v1794 = vsel %vm1789, %v1748, %v1793
        %v1795 = vsel %vm567, %v1776, %v1777
        %v1796 = vsel %vm1789, %v1750, %v1795
        %v1797 = vsel %vm567, %v1777, %v1778
        %v1798 = vsel %vm1789, %v1752, %v1797
        %v1799 = vsel %vm567, %v1778, %v1779
        %v1800 = vsel %vm1789, %v1754, %v1799
        %v1801 = vsel %vm567, %v1779, %v1780
        %v1802 = vsel %vm1789, %v1756, %v1801
        %v1803 = vsel %vm567, %v1780, %v1781
        %v1804 = vsel %vm1789, %v1758, %v1803
        %v1805 = vsel %vm567, %v1781, %v1782
        %v1806 = vsel %vm1789, %v1760, %v1805
        %v1807 = vsel %vm567, %v1782, %v1783
        %v1808 = vsel %vm1789, %v1762, %v1807
        %v1809 = vsel %vm567, %v1783, %v1784
        %v1810 = vsel %vm1789, %v1764, %v1809
        %v1811 = vsel %vm567, %v1784, %v1785
        %v1812 = vsel %vm1789, %v1766, %v1811
        %v1813 = vsel %vm567, %v1785, %v1786
        %v1814 = vsel %vm1789, %v1768, %v1813
        %v1815 = vsel %vm567, %v1786, %v1787
        %v1816 = vsel %vm1789, %v1770, %v1815
        %1831 = vst [vmem:[#allocation2 + $0x150] sm:$0x33] %v1790
        %1832 = vst [vmem:[#allocation2 + $0x158] sm:$0x33] %v1792
        %1833 = vst [vmem:[#allocation2 + $0x160] sm:$0x33] %v1794
        %1834 = vst [vmem:[#allocation2 + $0x168] sm:$0x33] %v1796
        %1835 = vst [vmem:[#allocation2 + $0x170] sm:$0x33] %v1798
        %1836 = vst [vmem:[#allocation2 + $0x178] sm:$0x33] %v1800
        %1837 = vst [vmem:[#allocation2 + $0x180] sm:$0x33] %v1802
        %1838 = vst [vmem:[#allocation2 + $0x188] sm:$0x33] %v1804
        %1839 = vst [vmem:[#allocation2 + $0x190] sm:$0x33] %v1806
        %1840 = vst [vmem:[#allocation2 + $0x198] sm:$0x33] %v1808
        %1841 = vst [vmem:[#allocation2 + $0x1a0] sm:$0x33] %v1810
        %1842 = vst [vmem:[#allocation2 + $0x1a8] sm:$0x33] %v1812
        %1843 = vst [vmem:[#allocation2 + $0x1b0] sm:$0x33] %v1814
        %1844 = vst [vmem:[#allocation2 + $0x1b8] sm:$0x33] %v1816
        %v1845 = vld [vmem:[%s207] sm:$0xff]
        %v1846 = vld [vmem:[%s207 + $0x8] sm:$0xff]
        %v1847 = vld [vmem:[%s207 + $0x10] sm:$0xff]
        %v1848 = vld [vmem:[%s207 + $0x18] sm:$0xff]
        %v1849 = vld [vmem:[%s207 + $0x20] sm:$0xff]
        %v1850 = vld [vmem:[%s207 + $0x28] sm:$0xff]
        %v1851 = vld [vmem:[%s207 + $0x30] sm:$0xff]
        %v1852 = vld [vmem:[%s207 + $0x38] sm:$0xff]
        %v1853 = vld [vmem:[%s207 + $0x40] sm:$0xff]
        %v1854 = vld [vmem:[%s207 + $0x48] sm:$0xff]
        %v1855 = vld [vmem:[%s207 + $0x50] sm:$0xff]
        %v1856 = vld [vmem:[%s207 + $0x58] sm:$0xff]
        %v1857 = vld [vmem:[%s207 + $0x60] sm:$0xff]
        %v1858 = vld [vmem:[%s207 + $0x68] sm:$0xff]
        %v1859 = vld [vmem:[%s207 + $0x70] sm:$0xf]
        %1875 = vst [vmem:[#allocation1] ss:$2 sm:$0xff] %v1845
        %s1876 = scalar_lea.vmem [#allocation1], 16
        %1877 = vst [vmem:[%s1876] ss:$2 sm:$0xff] %v1846
        %s1878 = scalar_lea.vmem [#allocation1], 32
        %1879 = vst [vmem:[%s1878] ss:$2 sm:$0xff] %v1847
        %s1880 = scalar_lea.vmem [#allocation1], 48
        %1881 = vst [vmem:[%s1880] ss:$2 sm:$0xff] %v1848
        %v1882 = vld.sshfl [vmem:[#allocation1] sm:$0xff pattern:$0x75316420]
        %v1883 = vld.sshfl [vmem:[#allocation1 + $0x8] sm:$0xff pattern:$0x75316420]
        %v1884 = vld.sshfl [vmem:[#allocation1 + $0x10] sm:$0xff pattern:$0x75316420]
        %v1885 = vld.sshfl [vmem:[#allocation1 + $0x18] sm:$0xff pattern:$0x75316420]
        %v1886 = vld.sshfl [vmem:[#allocation1 + $0x20] sm:$0xff pattern:$0x75316420]
        %v1887 = vld.sshfl [vmem:[#allocation1 + $0x28] sm:$0xff pattern:$0x75316420]
        %v1888 = vld.sshfl [vmem:[#allocation1 + $0x30] sm:$0xff pattern:$0x75316420]
        %v1889 = vld.sshfl [vmem:[#allocation1 + $0x38] sm:$0xff pattern:$0x75316420]
        %1890 = vst [vmem:[#allocation1] ss:$2 sm:$0xff] %v1849
        %1891 = vst [vmem:[%s1876] ss:$2 sm:$0xff] %v1850
        %1892 = vst [vmem:[%s1878] ss:$2 sm:$0xff] %v1851
        %1893 = vst [vmem:[%s1880] ss:$2 sm:$0xff] %v1852
        %v1894 = vld.sshfl [vmem:[#allocation1] sm:$0xff pattern:$0x75316420]
        %v1895 = vld.sshfl [vmem:[#allocation1 + $0x8] sm:$0xff pattern:$0x75316420]
        %v1896 = vld.sshfl [vmem:[#allocation1 + $0x10] sm:$0xff pattern:$0x75316420]
        %v1897 = vld.sshfl [vmem:[#allocation1 + $0x18] sm:$0xff pattern:$0x75316420]
        %v1898 = vld.sshfl [vmem:[#allocation1 + $0x20] sm:$0xff pattern:$0x75316420]
        %v1899 = vld.sshfl [vmem:[#allocation1 + $0x28] sm:$0xff pattern:$0x75316420]
        %v1900 = vld.sshfl [vmem:[#allocation1 + $0x30] sm:$0xff pattern:$0x75316420]
        %v1901 = vld.sshfl [vmem:[#allocation1 + $0x38] sm:$0xff pattern:$0x75316420]
        %1902 = vst [vmem:[#allocation1] ss:$2 sm:$0xff] %v1853
        %1903 = vst [vmem:[%s1876] ss:$2 sm:$0xff] %v1854
        %1904 = vst [vmem:[%s1878] ss:$2 sm:$0xff] %v1855
        %1905 = vst [vmem:[%s1880] ss:$2 sm:$0xff] %v1856
        %v1906 = vld.sshfl [vmem:[#allocation1] sm:$0xff pattern:$0x75316420]
        %v1907 = vld.sshfl [vmem:[#allocation1 + $0x8] sm:$0xff pattern:$0x75316420]
        %v1908 = vld.sshfl [vmem:[#allocation1 + $0x10] sm:$0xff pattern:$0x75316420]
        %v1909 = vld.sshfl [vmem:[#allocation1 + $0x18] sm:$0xff pattern:$0x75316420]
        %v1910 = vld.sshfl [vmem:[#allocation1 + $0x20] sm:$0xff pattern:$0x75316420]
        %v1911 = vld.sshfl [vmem:[#allocation1 + $0x28] sm:$0xff pattern:$0x75316420]
        %v1912 = vld.sshfl [vmem:[#allocation1 + $0x30] sm:$0xff pattern:$0x75316420]
        %v1913 = vld.sshfl [vmem:[#allocation1 + $0x38] sm:$0xff pattern:$0x75316420]
        %1914 = vst [vmem:[#allocation1] ss:$2 sm:$0xff] %v1857
        %1915 = vst [vmem:[%s1876] ss:$2 sm:$0xff] %v1858
        %1916 = vst [vmem:[%s1878] ss:$2 sm:$0xff] %v1859
        %v1917 = vld.sshfl [vmem:[#allocation1] sm:$0xff pattern:$0x75316420]
        %v1918 = vld.sshfl [vmem:[#allocation1 + $0x8] sm:$0xff pattern:$0x75316420]
        %v1919 = vld.sshfl [vmem:[#allocation1 + $0x10] sm:$0xff pattern:$0x75316420]
        %v1920 = vld.sshfl [vmem:[#allocation1 + $0x18] sm:$0xff pattern:$0x75316420]
        %v1921 = vld.sshfl [vmem:[#allocation1 + $0x20] sm:$0xff pattern:$0x75316420]
        %v1951 = vpack.c.bf16 %v1883, %v1882
        %v1952 = vpack.c.bf16 %v1885, %v1884
        %v1953 = vpack.c.bf16 %v1887, %v1886
        %v1954 = vpack.c.bf16 %v1889, %v1888
        %v1955 = vpack.c.bf16 %v1895, %v1894
        %v1956 = vpack.c.bf16 %v1897, %v1896
        %v1957 = vpack.c.bf16 %v1899, %v1898
        %v1958 = vpack.c.bf16 %v1901, %v1900
        %v1959 = vpack.c.bf16 %v1907, %v1906
        %v1960 = vpack.c.bf16 %v1909, %v1908
        %v1961 = vpack.c.bf16 %v1911, %v1910
        %v1962 = vpack.c.bf16 %v1913, %v1912
        %v1963 = vpack.c.bf16 %v1918, %v1917
        %v1964 = vpack.c.bf16 %v1920, %v1919
        %v1965 = vpack.c.bf16 %v1921, %v1921
        %v1981 = vrot.slane %v1951, 6
        %v1982 = vrot.slane %v1952, 6
        %v1983 = vrot.slane %v1953, 6
        %v1984 = vrot.slane %v1954, 6
        %v1985 = vrot.slane %v1955, 6
        %v1986 = vrot.slane %v1956, 6
        %v1987 = vrot.slane %v1957, 6
        %v1988 = vrot.slane %v1958, 6
        %v1989 = vrot.slane %v1959, 6
        %v1990 = vrot.slane %v1960, 6
        %v1991 = vrot.slane %v1961, 6
        %v1992 = vrot.slane %v1962, 6
        %v1993 = vrot.slane %v1963, 6
        %v1994 = vrot.slane %v1964, 6
        %v1995 = vrot.slane %v1965, 6
        %1996 = vrot.lane.b32.xlu0 %v1981, 103
        %v1997 = vpop.permute.xlu0 %1996
        %1998 = vrot.lane.b32.xlu0 %v1982, 103
        %v1999 = vpop.permute.xlu0 %1998
        %2000 = vrot.lane.b32.xlu0 %v1983, 103
        %v2001 = vpop.permute.xlu0 %2000
        %2002 = vrot.lane.b32.xlu0 %v1984, 103
        %v2003 = vpop.permute.xlu0 %2002
        %2004 = vrot.lane.b32.xlu0 %v1985, 103
        %v2005 = vpop.permute.xlu0 %2004
        %2006 = vrot.lane.b32.xlu0 %v1986, 103
        %v2007 = vpop.permute.xlu0 %2006
        %2008 = vrot.lane.b32.xlu0 %v1987, 103
        %v2009 = vpop.permute.xlu0 %2008
        %2010 = vrot.lane.b32.xlu0 %v1988, 103
        %v2011 = vpop.permute.xlu0 %2010
        %2012 = vrot.lane.b32.xlu0 %v1989, 103
        %v2013 = vpop.permute.xlu0 %2012
        %2014 = vrot.lane.b32.xlu0 %v1990, 103
        %v2015 = vpop.permute.xlu0 %2014
        %2016 = vrot.lane.b32.xlu0 %v1991, 103
        %v2017 = vpop.permute.xlu0 %2016
        %2018 = vrot.lane.b32.xlu0 %v1992, 103
        %v2019 = vpop.permute.xlu0 %2018
        %2020 = vrot.lane.b32.xlu0 %v1993, 103
        %v2021 = vpop.permute.xlu0 %2020
        %2022 = vrot.lane.b32.xlu0 %v1994, 103
        %v2023 = vpop.permute.xlu0 %2022
        %2024 = vrot.lane.b32.xlu0 %v1995, 103
        %v2025 = vpop.permute.xlu0 %2024
        %v2026 = vrot.slane %v1997, 4
        %v2027 = vrot.slane %v1999, 4
        %v2028 = vrot.slane %v2001, 4
        %v2029 = vrot.slane %v2003, 4
        %v2030 = vrot.slane %v2005, 4
        %v2031 = vrot.slane %v2007, 4
        %v2032 = vrot.slane %v2009, 4
        %v2033 = vrot.slane %v2011, 4
        %v2034 = vrot.slane %v2013, 4
        %v2035 = vrot.slane %v2015, 4
        %v2036 = vrot.slane %v2017, 4
        %v2037 = vrot.slane %v2019, 4
        %v2038 = vrot.slane %v2021, 4
        %v2039 = vrot.slane %v2023, 4
        %v2040 = vrot.slane %v2025, 4
        %v2041 = vsel %vm567, %v2026, %v2027
        %vm2042 = vcmask 842752
        %v2043 = vsel %vm2042, %v1997, %v2041
        %v2044 = vsel %vm567, %v2027, %v2028
        %v2045 = vsel %vm2042, %v1999, %v2044
        %v2046 = vsel %vm567, %v2028, %v2029
        %v2047 = vsel %vm2042, %v2001, %v2046
        %v2048 = vsel %vm567, %v2029, %v2030
        %v2049 = vsel %vm2042, %v2003, %v2048
        %v2050 = vsel %vm567, %v2030, %v2031
        %v2051 = vsel %vm2042, %v2005, %v2050
        %v2052 = vsel %vm567, %v2031, %v2032
        %v2053 = vsel %vm2042, %v2007, %v2052
        %v2054 = vsel %vm567, %v2032, %v2033
        %v2055 = vsel %vm2042, %v2009, %v2054
        %v2056 = vsel %vm567, %v2033, %v2034
        %v2057 = vsel %vm2042, %v2011, %v2056
        %v2058 = vsel %vm567, %v2034, %v2035
        %v2059 = vsel %vm2042, %v2013, %v2058
        %v2060 = vsel %vm567, %v2035, %v2036
        %v2061 = vsel %vm2042, %v2015, %v2060
        %v2062 = vsel %vm567, %v2036, %v2037
        %v2063 = vsel %vm2042, %v2017, %v2062
        %v2064 = vsel %vm567, %v2037, %v2038
        %v2065 = vsel %vm2042, %v2019, %v2064
        %v2066 = vsel %vm567, %v2038, %v2039
        %v2067 = vsel %vm2042, %v2021, %v2066
        %v2068 = vsel %vm567, %v2039, %v2040
        %v2069 = vsel %vm2042, %v2023, %v2068
        %2084 = vst [vmem:[#allocation2 + $0x150] sm:$0xcc] %v2043
        %2085 = vst [vmem:[#allocation2 + $0x158] sm:$0xcc] %v2045
        %2086 = vst [vmem:[#allocation2 + $0x160] sm:$0xcc] %v2047
        %2087 = vst [vmem:[#allocation2 + $0x168] sm:$0xcc] %v2049
        %2088 = vst [vmem:[#allocation2 + $0x170] sm:$0xcc] %v2051
        %2089 = vst [vmem:[#allocation2 + $0x178] sm:$0xcc] %v2053
        %2090 = vst [vmem:[#allocation2 + $0x180] sm:$0xcc] %v2055
        %2091 = vst [vmem:[#allocation2 + $0x188] sm:$0xcc] %v2057
        %2092 = vst [vmem:[#allocation2 + $0x190] sm:$0xcc] %v2059
        %2093 = vst [vmem:[#allocation2 + $0x198] sm:$0xcc] %v2061
        %2094 = vst [vmem:[#allocation2 + $0x1a0] sm:$0xcc] %v2063
        %2095 = vst [vmem:[#allocation2 + $0x1a8] sm:$0xcc] %v2065
        %2096 = vst [vmem:[#allocation2 + $0x1b0] sm:$0xcc] %v2067
        %2097 = vst [vmem:[#allocation2 + $0x1b8] sm:$0xcc] %v2069
        %v2098 = vld [vmem:[%s207] sm:$0xff]
        %v2099 = vld [vmem:[%s207 + $0x8] sm:$0xff]
        %v2100 = vld [vmem:[%s207 + $0x10] sm:$0xff]
        %v2101 = vld [vmem:[%s207 + $0x18] sm:$0xff]
        %v2102 = vld [vmem:[%s207 + $0x20] sm:$0xff]
        %v2103 = vld [vmem:[%s207 + $0x28] sm:$0xff]
        %v2104 = vld [vmem:[%s207 + $0x30] sm:$0xff]
        %v2105 = vld [vmem:[%s207 + $0x38] sm:$0xff]
        %v2106 = vld [vmem:[%s207 + $0x40] sm:$0xff]
        %v2107 = vld [vmem:[%s207 + $0x48] sm:$0xff]
        %v2108 = vld [vmem:[%s207 + $0x50] sm:$0xff]
        %v2109 = vld [vmem:[%s207 + $0x58] sm:$0xff]
        %v2110 = vld [vmem:[%s207 + $0x60] sm:$0xff]
        %v2111 = vld [vmem:[%s207 + $0x68] sm:$0xff]
        %v2112 = vld [vmem:[%s207 + $0x70] sm:$0xf]
        %2128 = vst [vmem:[#allocation1] ss:$2 sm:$0xff] %v2098
        %s2129 = scalar_lea.vmem [#allocation1], 16
        %2130 = vst [vmem:[%s2129] ss:$2 sm:$0xff] %v2099
        %s2131 = scalar_lea.vmem [#allocation1], 32
        %2132 = vst [vmem:[%s2131] ss:$2 sm:$0xff] %v2100
        %s2133 = scalar_lea.vmem [#allocation1], 48
        %2134 = vst [vmem:[%s2133] ss:$2 sm:$0xff] %v2101
        %v2135 = vld.sshfl [vmem:[#allocation1] sm:$0xff pattern:$0x75316420]
        %v2136 = vld.sshfl [vmem:[#allocation1 + $0x8] sm:$0xff pattern:$0x75316420]
        %v2137 = vld.sshfl [vmem:[#allocation1 + $0x10] sm:$0xff pattern:$0x75316420]
        %v2138 = vld.sshfl [vmem:[#allocation1 + $0x18] sm:$0xff pattern:$0x75316420]
        %v2139 = vld.sshfl [vmem:[#allocation1 + $0x20] sm:$0xff pattern:$0x75316420]
        %v2140 = vld.sshfl [vmem:[#allocation1 + $0x28] sm:$0xff pattern:$0x75316420]
        %v2141 = vld.sshfl [vmem:[#allocation1 + $0x30] sm:$0xff pattern:$0x75316420]
        %v2142 = vld.sshfl [vmem:[#allocation1 + $0x38] sm:$0xff pattern:$0x75316420]
        %2143 = vst [vmem:[#allocation1] ss:$2 sm:$0xff] %v2102
        %2144 = vst [vmem:[%s2129] ss:$2 sm:$0xff] %v2103
        %2145 = vst [vmem:[%s2131] ss:$2 sm:$0xff] %v2104
        %2146 = vst [vmem:[%s2133] ss:$2 sm:$0xff] %v2105
        %v2147 = vld.sshfl [vmem:[#allocation1] sm:$0xff pattern:$0x75316420]
        %v2148 = vld.sshfl [vmem:[#allocation1 + $0x8] sm:$0xff pattern:$0x75316420]
        %v2149 = vld.sshfl [vmem:[#allocation1 + $0x10] sm:$0xff pattern:$0x75316420]
        %v2150 = vld.sshfl [vmem:[#allocation1 + $0x18] sm:$0xff pattern:$0x75316420]
        %v2151 = vld.sshfl [vmem:[#allocation1 + $0x20] sm:$0xff pattern:$0x75316420]
        %v2152 = vld.sshfl [vmem:[#allocation1 + $0x28] sm:$0xff pattern:$0x75316420]
        %v2153 = vld.sshfl [vmem:[#allocation1 + $0x30] sm:$0xff pattern:$0x75316420]
        %v2154 = vld.sshfl [vmem:[#allocation1 + $0x38] sm:$0xff pattern:$0x75316420]
        %2155 = vst [vmem:[#allocation1] ss:$2 sm:$0xff] %v2106
        %2156 = vst [vmem:[%s2129] ss:$2 sm:$0xff] %v2107
        %2157 = vst [vmem:[%s2131] ss:$2 sm:$0xff] %v2108
        %2158 = vst [vmem:[%s2133] ss:$2 sm:$0xff] %v2109
        %v2159 = vld.sshfl [vmem:[#allocation1] sm:$0xff pattern:$0x75316420]
        %v2160 = vld.sshfl [vmem:[#allocation1 + $0x8] sm:$0xff pattern:$0x75316420]
        %v2161 = vld.sshfl [vmem:[#allocation1 + $0x10] sm:$0xff pattern:$0x75316420]
        %v2162 = vld.sshfl [vmem:[#allocation1 + $0x18] sm:$0xff pattern:$0x75316420]
        %v2163 = vld.sshfl [vmem:[#allocation1 + $0x20] sm:$0xff pattern:$0x75316420]
        %v2164 = vld.sshfl [vmem:[#allocation1 + $0x28] sm:$0xff pattern:$0x75316420]
        %v2165 = vld.sshfl [vmem:[#allocation1 + $0x30] sm:$0xff pattern:$0x75316420]
        %v2166 = vld.sshfl [vmem:[#allocation1 + $0x38] sm:$0xff pattern:$0x75316420]
        %2167 = vst [vmem:[#allocation1] ss:$2 sm:$0xff] %v2110
        %2168 = vst [vmem:[%s2129] ss:$2 sm:$0xff] %v2111
        %2169 = vst [vmem:[%s2131] ss:$2 sm:$0xff] %v2112
        %v2170 = vld.sshfl [vmem:[#allocation1] sm:$0xff pattern:$0x75316420]
        %v2171 = vld.sshfl [vmem:[#allocation1 + $0x8] sm:$0xff pattern:$0x75316420]
        %v2172 = vld.sshfl [vmem:[#allocation1 + $0x10] sm:$0xff pattern:$0x75316420]
        %v2173 = vld.sshfl [vmem:[#allocation1 + $0x18] sm:$0xff pattern:$0x75316420]
        %v2174 = vld.sshfl [vmem:[#allocation1 + $0x20] sm:$0xff pattern:$0x75316420]
        %v2204 = vpack.c.bf16 %v2136, %v2135
        %v2205 = vpack.c.bf16 %v2138, %v2137
        %v2206 = vpack.c.bf16 %v2140, %v2139
        %v2207 = vpack.c.bf16 %v2142, %v2141
        %v2208 = vpack.c.bf16 %v2148, %v2147
        %v2209 = vpack.c.bf16 %v2150, %v2149
        %v2210 = vpack.c.bf16 %v2152, %v2151
        %v2211 = vpack.c.bf16 %v2154, %v2153
        %v2212 = vpack.c.bf16 %v2160, %v2159
        %v2213 = vpack.c.bf16 %v2162, %v2161
        %v2214 = vpack.c.bf16 %v2164, %v2163
        %v2215 = vpack.c.bf16 %v2166, %v2165
        %v2216 = vpack.c.bf16 %v2171, %v2170
        %v2217 = vpack.c.bf16 %v2173, %v2172
        %v2218 = vpack.c.bf16 %v2174, %v2174
        %2234 = vrot.lane.b32.xlu0 %v2204, 102
        %v2235 = vpop.permute.xlu0 %2234
        %2236 = vrot.lane.b32.xlu0 %v2205, 102
        %v2237 = vpop.permute.xlu0 %2236
        %2238 = vrot.lane.b32.xlu0 %v2206, 102
        %v2239 = vpop.permute.xlu0 %2238
        %2240 = vrot.lane.b32.xlu0 %v2207, 102
        %v2241 = vpop.permute.xlu0 %2240
        %2242 = vrot.lane.b32.xlu0 %v2208, 102
        %v2243 = vpop.permute.xlu0 %2242
        %2244 = vrot.lane.b32.xlu0 %v2209, 102
        %v2245 = vpop.permute.xlu0 %2244
        %2246 = vrot.lane.b32.xlu0 %v2210, 102
        %v2247 = vpop.permute.xlu0 %2246
        %2248 = vrot.lane.b32.xlu0 %v2211, 102
        %v2249 = vpop.permute.xlu0 %2248
        %2250 = vrot.lane.b32.xlu0 %v2212, 102
        %v2251 = vpop.permute.xlu0 %2250
        %2252 = vrot.lane.b32.xlu0 %v2213, 102
        %v2253 = vpop.permute.xlu0 %2252
        %2254 = vrot.lane.b32.xlu0 %v2214, 102
        %v2255 = vpop.permute.xlu0 %2254
        %2256 = vrot.lane.b32.xlu0 %v2215, 102
        %v2257 = vpop.permute.xlu0 %2256
        %2258 = vrot.lane.b32.xlu0 %v2216, 102
        %v2259 = vpop.permute.xlu0 %2258
        %2260 = vrot.lane.b32.xlu0 %v2217, 102
        %v2261 = vpop.permute.xlu0 %2260
        %2262 = vrot.lane.b32.xlu0 %v2218, 102
        %v2263 = vpop.permute.xlu0 %2262
        %v2264 = vrot.slane %v2235, 4
        %v2265 = vrot.slane %v2237, 4
        %v2266 = vrot.slane %v2239, 4
        %v2267 = vrot.slane %v2241, 4
        %v2268 = vrot.slane %v2243, 4
        %v2269 = vrot.slane %v2245, 4
        %v2270 = vrot.slane %v2247, 4
        %v2271 = vrot.slane %v2249, 4
        %v2272 = vrot.slane %v2251, 4
        %v2273 = vrot.slane %v2253, 4
        %v2274 = vrot.slane %v2255, 4
        %v2275 = vrot.slane %v2257, 4
        %v2276 = vrot.slane %v2259, 4
        %v2277 = vrot.slane %v2261, 4
        %v2278 = vrot.slane %v2263, 4
        %v2279 = vsel %vm567, %v2264, %v2265
        %vm2280 = vcmask 834560
        %v2281 = vsel %vm2280, %v2235, %v2279
        %v2282 = vsel %vm567, %v2265, %v2266
        %v2283 = vsel %vm2280, %v2237, %v2282
        %v2284 = vsel %vm567, %v2266, %v2267
        %v2285 = vsel %vm2280, %v2239, %v2284
        %v2286 = vsel %vm567, %v2267, %v2268
        %v2287 = vsel %vm2280, %v2241, %v2286
        %v2288 = vsel %vm567, %v2268, %v2269
        %v2289 = vsel %vm2280, %v2243, %v2288
        %v2290 = vsel %vm567, %v2269, %v2270
        %v2291 = vsel %vm2280, %v2245, %v2290
        %v2292 = vsel %vm567, %v2270, %v2271
        %v2293 = vsel %vm2280, %v2247, %v2292
        %v2294 = vsel %vm567, %v2271, %v2272
        %v2295 = vsel %vm2280, %v2249, %v2294
        %v2296 = vsel %vm567, %v2272, %v2273
        %v2297 = vsel %vm2280, %v2251, %v2296
        %v2298 = vsel %vm567, %v2273, %v2274
        %v2299 = vsel %vm2280, %v2253, %v2298
        %v2300 = vsel %vm567, %v2274, %v2275
        %v2301 = vsel %vm2280, %v2255, %v2300
        %v2302 = vsel %vm567, %v2275, %v2276
        %v2303 = vsel %vm2280, %v2257, %v2302
        %v2304 = vsel %vm567, %v2276, %v2277
        %v2305 = vsel %vm2280, %v2259, %v2304
        %v2306 = vsel %vm567, %v2277, %v2278
        %v2307 = vsel %vm2280, %v2261, %v2306
        %2322 = vst [vmem:[#allocation2 + $0x1c0] sm:$0x33] %v2281
        %2323 = vst [vmem:[#allocation2 + $0x1c8] sm:$0x33] %v2283
        %2324 = vst [vmem:[#allocation2 + $0x1d0] sm:$0x33] %v2285
        %2325 = vst [vmem:[#allocation2 + $0x1d8] sm:$0x33] %v2287
        %2326 = vst [vmem:[#allocation2 + $0x1e0] sm:$0x33] %v2289
        %2327 = vst [vmem:[#allocation2 + $0x1e8] sm:$0x33] %v2291
        %2328 = vst [vmem:[#allocation2 + $0x1f0] sm:$0x33] %v2293
        %2329 = vst [vmem:[#allocation2 + $0x1f8] sm:$0x33] %v2295
        %2330 = vst [vmem:[#allocation2 + $0x200] sm:$0x33] %v2297
        %2331 = vst [vmem:[#allocation2 + $0x208] sm:$0x33] %v2299
        %2332 = vst [vmem:[#allocation2 + $0x210] sm:$0x33] %v2301
        %2333 = vst [vmem:[#allocation2 + $0x218] sm:$0x33] %v2303
        %2334 = vst [vmem:[#allocation2 + $0x220] sm:$0x33] %v2305
        %2335 = vst [vmem:[#allocation2 + $0x228] sm:$0x33] %v2307
        %v2336 = vld [vmem:[#allocation6] sm:$0xf]
        %v2337 = vld [vmem:[#allocation2] sm:$0xff]
        %v2338 = vld [vmem:[#allocation2 + $0x8] sm:$0xff]
        %v2339 = vld [vmem:[#allocation2 + $0x10] sm:$0xff]
        %v2340 = vld [vmem:[#allocation2 + $0x18] sm:$0xff]
        %v2341 = vld [vmem:[#allocation2 + $0x20] sm:$0xff]
        %v2342 = vld [vmem:[#allocation2 + $0x28] sm:$0xff]
        %v2343 = vld [vmem:[#allocation2 + $0x30] sm:$0xff]
        %v2344 = vld [vmem:[#allocation2 + $0x38] sm:$0xff]
        %v2345 = vld [vmem:[#allocation2 + $0x40] sm:$0xff]
        %v2346 = vld [vmem:[#allocation2 + $0x48] sm:$0xff]
        %v2347 = vld [vmem:[#allocation2 + $0x50] sm:$0xff]
        %v2348 = vld [vmem:[#allocation2 + $0x58] sm:$0xff]
        %v2349 = vld [vmem:[#allocation2 + $0x70] sm:$0xff]
        %v2350 = vld [vmem:[#allocation2 + $0x78] sm:$0xff]
        %v2351 = vld [vmem:[#allocation2 + $0x80] sm:$0xff]
        %v2352 = vld [vmem:[#allocation2 + $0x88] sm:$0xff]
        %v2353 = vld [vmem:[#allocation2 + $0x90] sm:$0xff]
        %v2354 = vld [vmem:[#allocation2 + $0x98] sm:$0xff]
        %v2355 = vld [vmem:[#allocation2 + $0xa0] sm:$0xff]
        %v2356 = vld [vmem:[#allocation2 + $0xa8] sm:$0xff]
        %v2357 = vld [vmem:[#allocation2 + $0xb0] sm:$0xff]
        %v2358 = vld [vmem:[#allocation2 + $0xb8] sm:$0xff]
        %v2359 = vld [vmem:[#allocation2 + $0xc0] sm:$0xff]
        %v2360 = vld [vmem:[#allocation2 + $0xc8] sm:$0xff]
        %v2361 = vld [vmem:[#allocation2 + $0xe0] sm:$0xff]
        %v2362 = vld [vmem:[#allocation2 + $0xe8] sm:$0xff]
        %v2363 = vld [vmem:[#allocation2 + $0xf0] sm:$0xff]
        %v2364 = vld [vmem:[#allocation2 + $0xf8] sm:$0xff]
        %v2365 = vld [vmem:[#allocation2 + $0x100] sm:$0xff]
        %v2366 = vld [vmem:[#allocation2 + $0x108] sm:$0xff]
        %v2367 = vld [vmem:[#allocation2 + $0x110] sm:$0xff]
        %v2368 = vld [vmem:[#allocation2 + $0x118] sm:$0xff]
        %v2369 = vld [vmem:[#allocation2 + $0x120] sm:$0xff]
        %v2370 = vld [vmem:[#allocation2 + $0x128] sm:$0xff]
        %v2371 = vld [vmem:[#allocation2 + $0x130] sm:$0xff]
        %v2372 = vld [vmem:[#allocation2 + $0x138] sm:$0xff]
        %v2373 = vld [vmem:[#allocation2 + $0x150] sm:$0xff]
        %v2374 = vld [vmem:[#allocation2 + $0x158] sm:$0xff]
        %v2375 = vld [vmem:[#allocation2 + $0x160] sm:$0xff]
        %v2376 = vld [vmem:[#allocation2 + $0x168] sm:$0xff]
        %v2377 = vld [vmem:[#allocation2 + $0x170] sm:$0xff]
        %v2378 = vld [vmem:[#allocation2 + $0x178] sm:$0xff]
        %v2379 = vld [vmem:[#allocation2 + $0x180] sm:$0xff]
        %v2380 = vld [vmem:[#allocation2 + $0x188] sm:$0xff]
        %v2381 = vld [vmem:[#allocation2 + $0x190] sm:$0xff]
        %v2382 = vld [vmem:[#allocation2 + $0x198] sm:$0xff]
        %v2383 = vld [vmem:[#allocation2 + $0x1a0] sm:$0xff]
        %v2384 = vld [vmem:[#allocation2 + $0x1a8] sm:$0xff]
        %v2385 = vld [vmem:[#allocation2 + $0x1c0] sm:$0x33]
        %v2386 = vld [vmem:[#allocation2 + $0x1c8] sm:$0x33]
        %v2387 = vld [vmem:[#allocation2 + $0x1d0] sm:$0x33]
        %v2388 = vld [vmem:[#allocation2 + $0x1d8] sm:$0x33]
        %v2389 = vld [vmem:[#allocation2 + $0x1e0] sm:$0x33]
        %v2390 = vld [vmem:[#allocation2 + $0x1e8] sm:$0x33]
        %v2391 = vld [vmem:[#allocation2 + $0x1f0] sm:$0x33]
        %v2392 = vld [vmem:[#allocation2 + $0x1f8] sm:$0x33]
        %v2393 = vld [vmem:[#allocation2 + $0x200] sm:$0x33]
        %v2394 = vld [vmem:[#allocation2 + $0x208] sm:$0x33]
        %v2395 = vld [vmem:[#allocation2 + $0x210] sm:$0x33]
        %v2396 = vld [vmem:[#allocation2 + $0x218] sm:$0x33]
        %s2397 = scalar_lea.vmem [#allocation6], 4
        %v2398 = vld [vmem:[%s2397] sm:$0xf]
        %v2399 = vld [vmem:[#allocation2 + $0x60] sm:$0xff]
        %v2400 = vld [vmem:[#allocation2 + $0xd0] sm:$0xff]
        %v2401 = vld [vmem:[#allocation2 + $0x140] sm:$0xff]
        %v2402 = vld [vmem:[#allocation2 + $0x1b0] sm:$0xff]
        %v2403 = vld [vmem:[#allocation2 + $0x220] sm:$0x33]
        %v2464 = vunpack.c.l.b16 %v2338
        %v2465 = vunpack.c.h.b16 %v2338
        %v2466 = vunpack.c.l.b16 %v2339
        %v2467 = vunpack.c.h.b16 %v2339
        %v2468 = vunpack.c.l.b16 %v2340
        %v2469 = vunpack.c.h.b16 %v2340
        %v2470 = vunpack.c.l.b16 %v2341
        %v2471 = vunpack.c.h.b16 %v2341
        %v2472 = vunpack.c.l.b16 %v2342
        %v2473 = vunpack.c.h.b16 %v2342
        %v2474 = vunpack.c.l.b16 %v2343
        %v2475 = vunpack.c.h.b16 %v2343
        %v2476 = vunpack.c.l.b16 %v2344
        %v2477 = vunpack.c.h.b16 %v2344
        %v2478 = vunpack.c.l.b16 %v2345
        %v2479 = vunpack.c.h.b16 %v2345
        %v2480 = vunpack.c.l.b16 %v2346
        %v2481 = vunpack.c.h.b16 %v2346
        %v2482 = vunpack.c.l.b16 %v2347
        %v2483 = vunpack.c.h.b16 %v2347
        %v2484 = vunpack.c.l.b16 %v2348
        %v2485 = vunpack.c.h.b16 %v2348
        %v2486 = vunpack.c.l.b16 %v2399
        %v2487 = vunpack.c.h.b16 %v2399
        %v2488 = vunpack.c.l.b16 %v2350
        %v2489 = vunpack.c.h.b16 %v2350
        %v2490 = vunpack.c.l.b16 %v2351
        %v2491 = vunpack.c.h.b16 %v2351
        %v2492 = vunpack.c.l.b16 %v2352
        %v2493 = vunpack.c.h.b16 %v2352
        %v2494 = vunpack.c.l.b16 %v2353
        %v2495 = vunpack.c.h.b16 %v2353
        %v2496 = vunpack.c.l.b16 %v2354
        %v2497 = vunpack.c.h.b16 %v2354
        %v2498 = vunpack.c.l.b16 %v2355
        %v2499 = vunpack.c.h.b16 %v2355
        %v2500 = vunpack.c.l.b16 %v2356
        %v2501 = vunpack.c.h.b16 %v2356
        %v2502 = vunpack.c.l.b16 %v2357
        %v2503 = vunpack.c.h.b16 %v2357
        %v2504 = vunpack.c.l.b16 %v2358
        %v2505 = vunpack.c.h.b16 %v2358
        %v2506 = vunpack.c.l.b16 %v2359
        %v2507 = vunpack.c.h.b16 %v2359
        %v2508 = vunpack.c.l.b16 %v2360
        %v2509 = vunpack.c.h.b16 %v2360
        %v2510 = vunpack.c.l.b16 %v2400
        %v2511 = vunpack.c.h.b16 %v2400
        %v2512 = vunpack.c.l.b16 %v2362
        %v2513 = vunpack.c.h.b16 %v2362
        %v2514 = vunpack.c.l.b16 %v2363
        %v2515 = vunpack.c.h.b16 %v2363
        %v2516 = vunpack.c.l.b16 %v2364
        %v2517 = vunpack.c.h.b16 %v2364
        %v2518 = vunpack.c.l.b16 %v2365
        %v2519 = vunpack.c.h.b16 %v2365
        %v2520 = vunpack.c.l.b16 %v2366
        %v2521 = vunpack.c.h.b16 %v2366
        %v2522 = vunpack.c.l.b16 %v2367
        %v2523 = vunpack.c.h.b16 %v2367
        %v2524 = vunpack.c.l.b16 %v2368
        %v2525 = vunpack.c.h.b16 %v2368
        %v2526 = vunpack.c.l.b16 %v2369
        %v2527 = vunpack.c.h.b16 %v2369
        %v2528 = vunpack.c.l.b16 %v2370
        %v2529 = vunpack.c.h.b16 %v2370
        %v2530 = vunpack.c.l.b16 %v2371
        %v2531 = vunpack.c.h.b16 %v2371
        %v2532 = vunpack.c.l.b16 %v2372
        %v2533 = vunpack.c.h.b16 %v2372
        %v2534 = vunpack.c.l.b16 %v2401
        %v2535 = vunpack.c.h.b16 %v2401
        %v2536 = vunpack.c.l.b16 %v2374
        %v2537 = vunpack.c.h.b16 %v2374
        %v2538 = vunpack.c.l.b16 %v2375
        %v2539 = vunpack.c.h.b16 %v2375
        %v2540 = vunpack.c.l.b16 %v2376
        %v2541 = vunpack.c.h.b16 %v2376
        %v2542 = vunpack.c.l.b16 %v2377
        %v2543 = vunpack.c.h.b16 %v2377
        %v2544 = vunpack.c.l.b16 %v2378
        %v2545 = vunpack.c.h.b16 %v2378
        %v2546 = vunpack.c.l.b16 %v2379
        %v2547 = vunpack.c.h.b16 %v2379
        %v2548 = vunpack.c.l.b16 %v2380
        %v2549 = vunpack.c.h.b16 %v2380
        %v2550 = vunpack.c.l.b16 %v2381
        %v2551 = vunpack.c.h.b16 %v2381
        %v2552 = vunpack.c.l.b16 %v2382
        %v2553 = vunpack.c.h.b16 %v2382
        %v2554 = vunpack.c.l.b16 %v2383
        %v2555 = vunpack.c.h.b16 %v2383
        %v2556 = vunpack.c.l.b16 %v2384
        %v2557 = vunpack.c.h.b16 %v2384
        %v2558 = vunpack.c.l.b16 %v2402
        %v2559 = vunpack.c.h.b16 %v2402
        %v2560 = vunpack.c.l.b16 %v2386
        %v2561 = vunpack.c.h.b16 %v2386
        %v2562 = vunpack.c.l.b16 %v2387
        %v2563 = vunpack.c.h.b16 %v2387
        %v2564 = vunpack.c.l.b16 %v2388
        %v2565 = vunpack.c.h.b16 %v2388
        %v2566 = vunpack.c.l.b16 %v2389
        %v2567 = vunpack.c.h.b16 %v2389
        %v2568 = vunpack.c.l.b16 %v2390
        %v2569 = vunpack.c.h.b16 %v2390
        %v2570 = vunpack.c.l.b16 %v2391
        %v2571 = vunpack.c.h.b16 %v2391
        %v2572 = vunpack.c.l.b16 %v2392
        %v2573 = vunpack.c.h.b16 %v2392
        %v2574 = vunpack.c.l.b16 %v2393
        %v2575 = vunpack.c.h.b16 %v2393
        %v2576 = vunpack.c.l.b16 %v2394
        %v2577 = vunpack.c.h.b16 %v2394
        %v2578 = vunpack.c.l.b16 %v2395
        %v2579 = vunpack.c.h.b16 %v2395
        %v2580 = vunpack.c.l.b16 %v2396
        %v2581 = vunpack.c.h.b16 %v2396
        %v2582 = vunpack.c.l.b16 %v2403
        %v2583 = vunpack.c.h.b16 %v2403
        %v2584 = vpack.c.b16 %v2488, %v2464
        %v2585 = vpack.c.b16 %v2489, %v2465
        %v2586 = vpack.c.b16 %v2490, %v2466
        %v2587 = vpack.c.b16 %v2491, %v2467
        %v2588 = vpack.c.b16 %v2492, %v2468
        %v2589 = vpack.c.b16 %v2493, %v2469
        %v2590 = vpack.c.b16 %v2494, %v2470
        %v2591 = vpack.c.b16 %v2495, %v2471
        %v2592 = vpack.c.b16 %v2496, %v2472
        %v2593 = vpack.c.b16 %v2497, %v2473
        %v2594 = vpack.c.b16 %v2498, %v2474
        %v2595 = vpack.c.b16 %v2499, %v2475
        %v2596 = vpack.c.b16 %v2500, %v2476
        %v2597 = vpack.c.b16 %v2501, %v2477
        %v2598 = vpack.c.b16 %v2502, %v2478
        %v2599 = vpack.c.b16 %v2503, %v2479
        %v2600 = vpack.c.b16 %v2504, %v2480
        %v2601 = vpack.c.b16 %v2505, %v2481
        %v2602 = vpack.c.b16 %v2506, %v2482
        %v2603 = vpack.c.b16 %v2507, %v2483
        %v2604 = vpack.c.b16 %v2508, %v2484
        %v2605 = vpack.c.b16 %v2509, %v2485
        %v2606 = vpack.c.b16 %v2510, %v2486
        %v2607 = vpack.c.b16 %v2511, %v2487
        %v2608 = vpack.c.b16 %v2536, %v2512
        %v2609 = vpack.c.b16 %v2537, %v2513
        %v2610 = vpack.c.b16 %v2538, %v2514
        %v2611 = vpack.c.b16 %v2539, %v2515
        %v2612 = vpack.c.b16 %v2540, %v2516
        %v2613 = vpack.c.b16 %v2541, %v2517
        %v2614 = vpack.c.b16 %v2542, %v2518
        %v2615 = vpack.c.b16 %v2543, %v2519
        %v2616 = vpack.c.b16 %v2544, %v2520
        %v2617 = vpack.c.b16 %v2545, %v2521
        %v2618 = vpack.c.b16 %v2546, %v2522
        %v2619 = vpack.c.b16 %v2547, %v2523
        %v2620 = vpack.c.b16 %v2548, %v2524
        %v2621 = vpack.c.b16 %v2549, %v2525
        %v2622 = vpack.c.b16 %v2550, %v2526
        %v2623 = vpack.c.b16 %v2551, %v2527
        %v2624 = vpack.c.b16 %v2552, %v2528
        %v2625 = vpack.c.b16 %v2553, %v2529
        %v2626 = vpack.c.b16 %v2554, %v2530
        %v2627 = vpack.c.b16 %v2555, %v2531
        %v2628 = vpack.c.b16 %v2556, %v2532
        %v2629 = vpack.c.b16 %v2557, %v2533
        %v2630 = vpack.c.b16 %v2558, %v2534
        %v2631 = vpack.c.b16 %v2559, %v2535
        %v2632 = vpack.c.b16 %v2560, %v2560
        %v2633 = vpack.c.b16 %v2561, %v2561
        %v2634 = vpack.c.b16 %v2562, %v2562
        %v2635 = vpack.c.b16 %v2563, %v2563
        %v2636 = vpack.c.b16 %v2564, %v2564
        %v2637 = vpack.c.b16 %v2565, %v2565
        %v2638 = vpack.c.b16 %v2566, %v2566
        %v2639 = vpack.c.b16 %v2567, %v2567
        %v2640 = vpack.c.b16 %v2568, %v2568
        %v2641 = vpack.c.b16 %v2569, %v2569
        %v2642 = vpack.c.b16 %v2570, %v2570
        %v2643 = vpack.c.b16 %v2571, %v2571
        %v2644 = vpack.c.b16 %v2572, %v2572
        %v2645 = vpack.c.b16 %v2573, %v2573
        %v2646 = vpack.c.b16 %v2574, %v2574
        %v2647 = vpack.c.b16 %v2575, %v2575
        %v2648 = vpack.c.b16 %v2576, %v2576
        %v2649 = vpack.c.b16 %v2577, %v2577
        %v2650 = vpack.c.b16 %v2578, %v2578
        %v2651 = vpack.c.b16 %v2579, %v2579
        %v2652 = vpack.c.b16 %v2580, %v2580
        %v2653 = vpack.c.b16 %v2581, %v2581
        %v2654 = vpack.c.b16 %v2582, %v2582
        %v2655 = vpack.c.b16 %v2583, %v2583
        %vm2704 = vcmask 293888
        %v2706 = vsel %vm2704, %v2398, 0
        %vm2708 = vcmask 1041408
        %v2710 = vsel %vm2708, %v2632, 0
        %v2713 = vsel %vm2708, %v2633, 0
        %v2716 = vsel %vm2708, %v2634, 0
        %v2719 = vsel %vm2708, %v2635, 0
        %v2722 = vsel %vm2708, %v2636, 0
        %v2725 = vsel %vm2708, %v2637, 0
        %v2728 = vsel %vm2708, %v2638, 0
        %v2731 = vsel %vm2708, %v2639, 0
        %v2734 = vsel %vm2708, %v2640, 0
        %v2737 = vsel %vm2708, %v2641, 0
        %v2740 = vsel %vm2708, %v2642, 0
        %v2743 = vsel %vm2708, %v2643, 0
        %v2746 = vsel %vm2708, %v2644, 0
        %v2749 = vsel %vm2708, %v2645, 0
        %v2752 = vsel %vm2708, %v2646, 0
        %v2755 = vsel %vm2708, %v2647, 0
        %v2758 = vsel %vm2708, %v2648, 0
        %v2761 = vsel %vm2708, %v2649, 0
        %v2764 = vsel %vm2708, %v2650, 0
        %v2767 = vsel %vm2708, %v2651, 0
        %v2770 = vsel %vm2708, %v2652, 0
        %v2773 = vsel %vm2708, %v2653, 0
        %v2776 = vsel %vm2708, %v2654, 0
        %v2779 = vsel %vm2708, %v2655, 0
        %2781 = vmatpush.bf16.msra.mxu0 0
        %2782 = vmatpush.bf16.msra.mxu0 0
        %2783 = vmatpush.bf16.msra.mxu0 0
        %2784 = vmatpush.bf16.msra.mxu0 0
        %2785 = vmatpush.bf16.msra.mxu0 0
        %2786 = vmatpush.bf16.msra.mxu0 %v2710
        %2787 = vmatpush.bf16.msra.mxu0 %v2608
        %2788 = vmatpush.bf16.msra.mxu0 %v2584
        %2789 = vmatmul.bf16.gmra.mxu0 %v2706
        %v2790 = vpop.f32.mrf.mxu0
        %v2791 = vadd.f32 0.0, %v2790
        %v2792 = vpop.f32.mrf.mxu0
        %2793 = vdwg.mxu0
        %2794 = vmatpush.bf16.msra.mxu0 0
        %2795 = vmatpush.bf16.msra.mxu0 0
        %2796 = vmatpush.bf16.msra.mxu0 0
        %2797 = vmatpush.bf16.msra.mxu0 0
        %2798 = vmatpush.bf16.msra.mxu0 0
        %2799 = vmatpush.bf16.msra.mxu0 %v2713
        %2800 = vmatpush.bf16.msra.mxu0 %v2609
        %2801 = vmatpush.bf16.msra.mxu0 %v2585
        %2802 = vmatmul.bf16.gmra.mxu0 %v2706
        %v2803 = vpop.f32.mrf.mxu0
        %v2804 = vadd.f32 0.0, %v2803
        %v2805 = vpop.f32.mrf.mxu0
        %2806 = vdwg.mxu0
        %2807 = vmatpush.bf16.msra.mxu0 0
        %2808 = vmatpush.bf16.msra.mxu0 0
        %2809 = vmatpush.bf16.msra.mxu0 0
        %2810 = vmatpush.bf16.msra.mxu0 0
        %2811 = vmatpush.bf16.msra.mxu0 0
        %2812 = vmatpush.bf16.msra.mxu0 %v2716
        %2813 = vmatpush.bf16.msra.mxu0 %v2610
        %2814 = vmatpush.bf16.msra.mxu0 %v2586
        %2815 = vmatmul.bf16.gmra.mxu0 %v2706
        %v2816 = vpop.f32.mrf.mxu0
        %v2817 = vadd.f32 0.0, %v2816
        %v2818 = vpop.f32.mrf.mxu0
        %2819 = vdwg.mxu0
        %2820 = vmatpush.bf16.msra.mxu0 0
        %2821 = vmatpush.bf16.msra.mxu0 0
        %2822 = vmatpush.bf16.msra.mxu0 0
        %2823 = vmatpush.bf16.msra.mxu0 0
        %2824 = vmatpush.bf16.msra.mxu0 0
        %2825 = vmatpush.bf16.msra.mxu0 %v2719
        %2826 = vmatpush.bf16.msra.mxu0 %v2611
        %2827 = vmatpush.bf16.msra.mxu0 %v2587
        %2828 = vmatmul.bf16.gmra.mxu0 %v2706
        %v2829 = vpop.f32.mrf.mxu0
        %v2830 = vadd.f32 0.0, %v2829
        %v2831 = vpop.f32.mrf.mxu0
        %2832 = vdwg.mxu0
        %2833 = vmatpush.bf16.msra.mxu0 0
        %2834 = vmatpush.bf16.msra.mxu0 0
        %2835 = vmatpush.bf16.msra.mxu0 0
        %2836 = vmatpush.bf16.msra.mxu0 0
        %2837 = vmatpush.bf16.msra.mxu0 0
        %2838 = vmatpush.bf16.msra.mxu0 %v2722
        %2839 = vmatpush.bf16.msra.mxu0 %v2612
        %2840 = vmatpush.bf16.msra.mxu0 %v2588
        %2841 = vmatmul.bf16.gmra.mxu0 %v2706
        %v2842 = vpop.f32.mrf.mxu0
        %v2843 = vadd.f32 0.0, %v2842
        %v2844 = vpop.f32.mrf.mxu0
        %2845 = vdwg.mxu0
        %2846 = vmatpush.bf16.msra.mxu0 0
        %2847 = vmatpush.bf16.msra.mxu0 0
        %2848 = vmatpush.bf16.msra.mxu0 0
        %2849 = vmatpush.bf16.msra.mxu0 0
        %2850 = vmatpush.bf16.msra.mxu0 0
        %2851 = vmatpush.bf16.msra.mxu0 %v2725
        %2852 = vmatpush.bf16.msra.mxu0 %v2613
        %2853 = vmatpush.bf16.msra.mxu0 %v2589
        %2854 = vmatmul.bf16.gmra.mxu0 %v2706
        %v2855 = vpop.f32.mrf.mxu0
        %v2856 = vadd.f32 0.0, %v2855
        %v2857 = vpop.f32.mrf.mxu0
        %2858 = vdwg.mxu0
        %2859 = vmatpush.bf16.msra.mxu0 0
        %2860 = vmatpush.bf16.msra.mxu0 0
        %2861 = vmatpush.bf16.msra.mxu0 0
        %2862 = vmatpush.bf16.msra.mxu0 0
        %2863 = vmatpush.bf16.msra.mxu0 0
        %2864 = vmatpush.bf16.msra.mxu0 %v2728
        %2865 = vmatpush.bf16.msra.mxu0 %v2614
        %2866 = vmatpush.bf16.msra.mxu0 %v2590
        %2867 = vmatmul.bf16.gmra.mxu0 %v2706
        %v2868 = vpop.f32.mrf.mxu0
        %v2869 = vadd.f32 0.0, %v2868
        %v2870 = vpop.f32.mrf.mxu0
        %2871 = vdwg.mxu0
        %2872 = vmatpush.bf16.msra.mxu0 0
        %2873 = vmatpush.bf16.msra.mxu0 0
        %2874 = vmatpush.bf16.msra.mxu0 0
        %2875 = vmatpush.bf16.msra.mxu0 0
        %2876 = vmatpush.bf16.msra.mxu0 0
        %2877 = vmatpush.bf16.msra.mxu0 %v2731
        %2878 = vmatpush.bf16.msra.mxu0 %v2615
        %2879 = vmatpush.bf16.msra.mxu0 %v2591
        %2880 = vmatmul.bf16.gmra.mxu0 %v2706
        %v2881 = vpop.f32.mrf.mxu0
        %v2882 = vadd.f32 0.0, %v2881
        %v2883 = vpop.f32.mrf.mxu0
        %2884 = vdwg.mxu0
        %2885 = vmatpush.bf16.msra.mxu0 0
        %2886 = vmatpush.bf16.msra.mxu0 0
        %2887 = vmatpush.bf16.msra.mxu0 0
        %2888 = vmatpush.bf16.msra.mxu0 0
        %2889 = vmatpush.bf16.msra.mxu0 0
        %2890 = vmatpush.bf16.msra.mxu0 %v2734
        %2891 = vmatpush.bf16.msra.mxu0 %v2616
        %2892 = vmatpush.bf16.msra.mxu0 %v2592
        %2893 = vmatmul.bf16.gmra.mxu0 %v2706
        %v2894 = vpop.f32.mrf.mxu0
        %v2895 = vadd.f32 0.0, %v2894
        %v2896 = vpop.f32.mrf.mxu0
        %2897 = vdwg.mxu0
        %2898 = vmatpush.bf16.msra.mxu0 0
        %2899 = vmatpush.bf16.msra.mxu0 0
        %2900 = vmatpush.bf16.msra.mxu0 0
        %2901 = vmatpush.bf16.msra.mxu0 0
        %2902 = vmatpush.bf16.msra.mxu0 0
        %2903 = vmatpush.bf16.msra.mxu0 %v2737
        %2904 = vmatpush.bf16.msra.mxu0 %v2617
        %2905 = vmatpush.bf16.msra.mxu0 %v2593
        %2906 = vmatmul.bf16.gmra.mxu0 %v2706
        %v2907 = vpop.f32.mrf.mxu0
        %v2908 = vadd.f32 0.0, %v2907
        %v2909 = vpop.f32.mrf.mxu0
        %2910 = vdwg.mxu0
        %2911 = vmatpush.bf16.msra.mxu0 0
        %2912 = vmatpush.bf16.msra.mxu0 0
        %2913 = vmatpush.bf16.msra.mxu0 0
        %2914 = vmatpush.bf16.msra.mxu0 0
        %2915 = vmatpush.bf16.msra.mxu0 0
        %2916 = vmatpush.bf16.msra.mxu0 %v2740
        %2917 = vmatpush.bf16.msra.mxu0 %v2618
        %2918 = vmatpush.bf16.msra.mxu0 %v2594
        %2919 = vmatmul.bf16.gmra.mxu0 %v2706
        %v2920 = vpop.f32.mrf.mxu0
        %v2921 = vadd.f32 0.0, %v2920
        %v2922 = vpop.f32.mrf.mxu0
        %2923 = vdwg.mxu0
        %2924 = vmatpush.bf16.msra.mxu0 0
        %2925 = vmatpush.bf16.msra.mxu0 0
        %2926 = vmatpush.bf16.msra.mxu0 0
        %2927 = vmatpush.bf16.msra.mxu0 0
        %2928 = vmatpush.bf16.msra.mxu0 0
        %2929 = vmatpush.bf16.msra.mxu0 %v2743
        %2930 = vmatpush.bf16.msra.mxu0 %v2619
        %2931 = vmatpush.bf16.msra.mxu0 %v2595
        %2932 = vmatmul.bf16.gmra.mxu0 %v2706
        %v2933 = vpop.f32.mrf.mxu0
        %v2934 = vadd.f32 0.0, %v2933
        %v2935 = vpop.f32.mrf.mxu0
        %2936 = vdwg.mxu0
        %2937 = vmatpush.bf16.msra.mxu0 0
        %2938 = vmatpush.bf16.msra.mxu0 0
        %2939 = vmatpush.bf16.msra.mxu0 0
        %2940 = vmatpush.bf16.msra.mxu0 0
        %2941 = vmatpush.bf16.msra.mxu0 0
        %2942 = vmatpush.bf16.msra.mxu0 %v2746
        %2943 = vmatpush.bf16.msra.mxu0 %v2620
        %2944 = vmatpush.bf16.msra.mxu0 %v2596
        %2945 = vmatmul.bf16.gmra.mxu0 %v2706
        %v2946 = vpop.f32.mrf.mxu0
        %v2947 = vadd.f32 0.0, %v2946
        %v2948 = vpop.f32.mrf.mxu0
        %2949 = vdwg.mxu0
        %2950 = vmatpush.bf16.msra.mxu0 0
        %2951 = vmatpush.bf16.msra.mxu0 0
        %2952 = vmatpush.bf16.msra.mxu0 0
        %2953 = vmatpush.bf16.msra.mxu0 0
        %2954 = vmatpush.bf16.msra.mxu0 0
        %2955 = vmatpush.bf16.msra.mxu0 %v2749
        %2956 = vmatpush.bf16.msra.mxu0 %v2621
        %2957 = vmatpush.bf16.msra.mxu0 %v2597
        %2958 = vmatmul.bf16.gmra.mxu0 %v2706
        %v2959 = vpop.f32.mrf.mxu0
        %v2960 = vadd.f32 0.0, %v2959
        %v2961 = vpop.f32.mrf.mxu0
        %2962 = vdwg.mxu0
        %2963 = vmatpush.bf16.msra.mxu0 0
        %2964 = vmatpush.bf16.msra.mxu0 0
        %2965 = vmatpush.bf16.msra.mxu0 0
        %2966 = vmatpush.bf16.msra.mxu0 0
        %2967 = vmatpush.bf16.msra.mxu0 0
        %2968 = vmatpush.bf16.msra.mxu0 %v2752
        %2969 = vmatpush.bf16.msra.mxu0 %v2622
        %2970 = vmatpush.bf16.msra.mxu0 %v2598
        %2971 = vmatmul.bf16.gmra.mxu0 %v2706
        %v2972 = vpop.f32.mrf.mxu0
        %v2973 = vadd.f32 0.0, %v2972
        %v2974 = vpop.f32.mrf.mxu0
        %2975 = vdwg.mxu0
        %2976 = vmatpush.bf16.msra.mxu0 0
        %2977 = vmatpush.bf16.msra.mxu0 0
        %2978 = vmatpush.bf16.msra.mxu0 0
        %2979 = vmatpush.bf16.msra.mxu0 0
        %2980 = vmatpush.bf16.msra.mxu0 0
        %2981 = vmatpush.bf16.msra.mxu0 %v2755
        %2982 = vmatpush.bf16.msra.mxu0 %v2623
        %2983 = vmatpush.bf16.msra.mxu0 %v2599
        %2984 = vmatmul.bf16.gmra.mxu0 %v2706
        %v2985 = vpop.f32.mrf.mxu0
        %v2986 = vadd.f32 0.0, %v2985
        %v2987 = vpop.f32.mrf.mxu0
        %2988 = vdwg.mxu0
        %2989 = vmatpush.bf16.msra.mxu0 0
        %2990 = vmatpush.bf16.msra.mxu0 0
        %2991 = vmatpush.bf16.msra.mxu0 0
        %2992 = vmatpush.bf16.msra.mxu0 0
        %2993 = vmatpush.bf16.msra.mxu0 0
        %2994 = vmatpush.bf16.msra.mxu0 %v2758
        %2995 = vmatpush.bf16.msra.mxu0 %v2624
        %2996 = vmatpush.bf16.msra.mxu0 %v2600
        %2997 = vmatmul.bf16.gmra.mxu0 %v2706
        %v2998 = vpop.f32.mrf.mxu0
        %v2999 = vadd.f32 0.0, %v2998
        %v3000 = vpop.f32.mrf.mxu0
        %3001 = vdwg.mxu0
        %3002 = vmatpush.bf16.msra.mxu0 0
        %3003 = vmatpush.bf16.msra.mxu0 0
        %3004 = vmatpush.bf16.msra.mxu0 0
        %3005 = vmatpush.bf16.msra.mxu0 0
        %3006 = vmatpush.bf16.msra.mxu0 0
        %3007 = vmatpush.bf16.msra.mxu0 %v2761
        %3008 = vmatpush.bf16.msra.mxu0 %v2625
        %3009 = vmatpush.bf16.msra.mxu0 %v2601
        %3010 = vmatmul.bf16.gmra.mxu0 %v2706
        %v3011 = vpop.f32.mrf.mxu0
        %v3012 = vadd.f32 0.0, %v3011
        %v3013 = vpop.f32.mrf.mxu0
        %3014 = vdwg.mxu0
        %3015 = vmatpush.bf16.msra.mxu0 0
        %3016 = vmatpush.bf16.msra.mxu0 0
        %3017 = vmatpush.bf16.msra.mxu0 0
        %3018 = vmatpush.bf16.msra.mxu0 0
        %3019 = vmatpush.bf16.msra.mxu0 0
        %3020 = vmatpush.bf16.msra.mxu0 %v2764
        %3021 = vmatpush.bf16.msra.mxu0 %v2626
        %3022 = vmatpush.bf16.msra.mxu0 %v2602
        %3023 = vmatmul.bf16.gmra.mxu0 %v2706
        %v3024 = vpop.f32.mrf.mxu0
        %v3025 = vadd.f32 0.0, %v3024
        %v3026 = vpop.f32.mrf.mxu0
        %3027 = vdwg.mxu0
        %3028 = vmatpush.bf16.msra.mxu0 0
        %3029 = vmatpush.bf16.msra.mxu0 0
        %3030 = vmatpush.bf16.msra.mxu0 0
        %3031 = vmatpush.bf16.msra.mxu0 0
        %3032 = vmatpush.bf16.msra.mxu0 0
        %3033 = vmatpush.bf16.msra.mxu0 %v2767
        %3034 = vmatpush.bf16.msra.mxu0 %v2627
        %3035 = vmatpush.bf16.msra.mxu0 %v2603
        %3036 = vmatmul.bf16.gmra.mxu0 %v2706
        %v3037 = vpop.f32.mrf.mxu0
        %v3038 = vadd.f32 0.0, %v3037
        %v3039 = vpop.f32.mrf.mxu0
        %3040 = vdwg.mxu0
        %3041 = vmatpush.bf16.msra.mxu0 0
        %3042 = vmatpush.bf16.msra.mxu0 0
        %3043 = vmatpush.bf16.msra.mxu0 0
        %3044 = vmatpush.bf16.msra.mxu0 0
        %3045 = vmatpush.bf16.msra.mxu0 0
        %3046 = vmatpush.bf16.msra.mxu0 %v2770
        %3047 = vmatpush.bf16.msra.mxu0 %v2628
        %3048 = vmatpush.bf16.msra.mxu0 %v2604
        %3049 = vmatmul.bf16.gmra.mxu0 %v2706
        %v3050 = vpop.f32.mrf.mxu0
        %v3051 = vadd.f32 0.0, %v3050
        %v3052 = vpop.f32.mrf.mxu0
        %3053 = vdwg.mxu0
        %3054 = vmatpush.bf16.msra.mxu0 0
        %3055 = vmatpush.bf16.msra.mxu0 0
        %3056 = vmatpush.bf16.msra.mxu0 0
        %3057 = vmatpush.bf16.msra.mxu0 0
        %3058 = vmatpush.bf16.msra.mxu0 0
        %3059 = vmatpush.bf16.msra.mxu0 %v2773
        %3060 = vmatpush.bf16.msra.mxu0 %v2629
        %3061 = vmatpush.bf16.msra.mxu0 %v2605
        %3062 = vmatmul.bf16.gmra.mxu0 %v2706
        %v3063 = vpop.f32.mrf.mxu0
        %v3064 = vadd.f32 0.0, %v3063
        %v3065 = vpop.f32.mrf.mxu0
        %3066 = vdwg.mxu0
        %3067 = vmatpush.bf16.msra.mxu0 0
        %3068 = vmatpush.bf16.msra.mxu0 0
        %3069 = vmatpush.bf16.msra.mxu0 0
        %3070 = vmatpush.bf16.msra.mxu0 0
        %3071 = vmatpush.bf16.msra.mxu0 0
        %3072 = vmatpush.bf16.msra.mxu0 %v2776
        %3073 = vmatpush.bf16.msra.mxu0 %v2630
        %3074 = vmatpush.bf16.msra.mxu0 %v2606
        %3075 = vmatmul.bf16.gmra.mxu0 %v2706
        %v3076 = vpop.f32.mrf.mxu0
        %v3077 = vadd.f32 0.0, %v3076
        %v3078 = vpop.f32.mrf.mxu0
        %3079 = vdwg.mxu0
        %3080 = vmatpush.bf16.msra.mxu0 0
        %3081 = vmatpush.bf16.msra.mxu0 0
        %3082 = vmatpush.bf16.msra.mxu0 0
        %3083 = vmatpush.bf16.msra.mxu0 0
        %3084 = vmatpush.bf16.msra.mxu0 0
        %3085 = vmatpush.bf16.msra.mxu0 %v2779
        %3086 = vmatpush.bf16.msra.mxu0 %v2631
        %3087 = vmatpush.bf16.msra.mxu0 %v2607
        %3088 = vmatmul.bf16.gmra.mxu0 %v2706
        %v3089 = vpop.f32.mrf.mxu0
        %v3090 = vadd.f32 0.0, %v3089
        %v3091 = vpop.f32.mrf.mxu0
        %3092 = vdwg.mxu0
        %v3098 = vunpack.c.l.b16 %v2337
        %v3099 = vunpack.c.h.b16 %v2337
        %v3100 = vunpack.c.l.b16 %v2349
        %v3101 = vunpack.c.h.b16 %v2349
        %v3102 = vunpack.c.l.b16 %v2361
        %v3103 = vunpack.c.h.b16 %v2361
        %v3104 = vunpack.c.l.b16 %v2373
        %v3105 = vunpack.c.h.b16 %v2373
        %v3106 = vunpack.c.l.b16 %v2385
        %v3107 = vunpack.c.h.b16 %v2385
        %v3108 = vpack.c.b16 %v3100, %v3098
        %v3109 = vpack.c.b16 %v3101, %v3099
        %v3110 = vpack.c.b16 %v3104, %v3102
        %v3111 = vpack.c.b16 %v3105, %v3103
        %v3112 = vpack.c.b16 %v3106, %v3106
        %v3113 = vpack.c.b16 %v3107, %v3107
        %v3119 = vsel %vm2704, %v2336, 0
        %v3122 = vsel %vm2708, %v3112, 0
        %v3125 = vsel %vm2708, %v3113, 0
        %3127 = vmatpush.bf16.msra.mxu0 0
        %3128 = vmatpush.bf16.msra.mxu0 0
        %3129 = vmatpush.bf16.msra.mxu0 0
        %3130 = vmatpush.bf16.msra.mxu0 0
        %3131 = vmatpush.bf16.msra.mxu0 0
        %3132 = vmatpush.bf16.msra.mxu0 %v3122
        %3133 = vmatpush.bf16.msra.mxu0 %v3110
        %3134 = vmatpush.bf16.msra.mxu0 %v3108
        %3135 = vmatmul.bf16.gmra.mxu0 %v3119
        %v3136 = vpop.f32.mrf.mxu0
        %v3137 = vadd.f32 %v2791, %v3136
        %v3138 = vpop.f32.mrf.mxu0
        %3139 = vdwg.mxu0
        %3140 = vmatpush.bf16.msra.mxu0 0
        %3141 = vmatpush.bf16.msra.mxu0 0
        %3142 = vmatpush.bf16.msra.mxu0 0
        %3143 = vmatpush.bf16.msra.mxu0 0
        %3144 = vmatpush.bf16.msra.mxu0 0
        %3145 = vmatpush.bf16.msra.mxu0 %v3125
        %3146 = vmatpush.bf16.msra.mxu0 %v3111
        %3147 = vmatpush.bf16.msra.mxu0 %v3109
        %3148 = vmatmul.bf16.gmra.mxu0 %v3119
        %v3149 = vpop.f32.mrf.mxu0
        %v3150 = vadd.f32 %v2804, %v3149
        %v3151 = vpop.f32.mrf.mxu0
        %3152 = vdwg.mxu0
        %3153 = vmatpush.bf16.msra.mxu0 0
        %3154 = vmatpush.bf16.msra.mxu0 0
        %3155 = vmatpush.bf16.msra.mxu0 0
        %3156 = vmatpush.bf16.msra.mxu0 0
        %3157 = vmatpush.bf16.msra.mxu0 0
        %3158 = vmatpush.bf16.msra.mxu0 %v2710
        %3159 = vmatpush.bf16.msra.mxu0 %v2608
        %3160 = vmatpush.bf16.msra.mxu0 %v2584
        %3161 = vmatmul.bf16.gmra.mxu0 %v3119
        %v3162 = vpop.f32.mrf.mxu0
        %v3163 = vadd.f32 %v2817, %v3162
        %v3164 = vpop.f32.mrf.mxu0
        %3165 = vdwg.mxu0
        %3166 = vmatpush.bf16.msra.mxu0 0
        %3167 = vmatpush.bf16.msra.mxu0 0
        %3168 = vmatpush.bf16.msra.mxu0 0
        %3169 = vmatpush.bf16.msra.mxu0 0
        %3170 = vmatpush.bf16.msra.mxu0 0
        %3171 = vmatpush.bf16.msra.mxu0 %v2713
        %3172 = vmatpush.bf16.msra.mxu0 %v2609
        %3173 = vmatpush.bf16.msra.mxu0 %v2585
        %3174 = vmatmul.bf16.gmra.mxu0 %v3119
        %v3175 = vpop.f32.mrf.mxu0
        %v3176 = vadd.f32 %v2830, %v3175
        %v3177 = vpop.f32.mrf.mxu0
        %3178 = vdwg.mxu0
        %3179 = vmatpush.bf16.msra.mxu0 0
        %3180 = vmatpush.bf16.msra.mxu0 0
        %3181 = vmatpush.bf16.msra.mxu0 0
        %3182 = vmatpush.bf16.msra.mxu0 0
        %3183 = vmatpush.bf16.msra.mxu0 0
        %3184 = vmatpush.bf16.msra.mxu0 %v2716
        %3185 = vmatpush.bf16.msra.mxu0 %v2610
        %3186 = vmatpush.bf16.msra.mxu0 %v2586
        %3187 = vmatmul.bf16.gmra.mxu0 %v3119
        %v3188 = vpop.f32.mrf.mxu0
        %v3189 = vadd.f32 %v2843, %v3188
        %v3190 = vpop.f32.mrf.mxu0
        %3191 = vdwg.mxu0
        %3192 = vmatpush.bf16.msra.mxu0 0
        %3193 = vmatpush.bf16.msra.mxu0 0
        %3194 = vmatpush.bf16.msra.mxu0 0
        %3195 = vmatpush.bf16.msra.mxu0 0
        %3196 = vmatpush.bf16.msra.mxu0 0
        %3197 = vmatpush.bf16.msra.mxu0 %v2719
        %3198 = vmatpush.bf16.msra.mxu0 %v2611
        %3199 = vmatpush.bf16.msra.mxu0 %v2587
        %3200 = vmatmul.bf16.gmra.mxu0 %v3119
        %v3201 = vpop.f32.mrf.mxu0
        %v3202 = vadd.f32 %v2856, %v3201
        %v3203 = vpop.f32.mrf.mxu0
        %3204 = vdwg.mxu0
        %3205 = vmatpush.bf16.msra.mxu0 0
        %3206 = vmatpush.bf16.msra.mxu0 0
        %3207 = vmatpush.bf16.msra.mxu0 0
        %3208 = vmatpush.bf16.msra.mxu0 0
        %3209 = vmatpush.bf16.msra.mxu0 0
        %3210 = vmatpush.bf16.msra.mxu0 %v2722
        %3211 = vmatpush.bf16.msra.mxu0 %v2612
        %3212 = vmatpush.bf16.msra.mxu0 %v2588
        %3213 = vmatmul.bf16.gmra.mxu0 %v3119
        %v3214 = vpop.f32.mrf.mxu0
        %v3215 = vadd.f32 %v2869, %v3214
        %v3216 = vpop.f32.mrf.mxu0
        %3217 = vdwg.mxu0
        %3218 = vmatpush.bf16.msra.mxu0 0
        %3219 = vmatpush.bf16.msra.mxu0 0
        %3220 = vmatpush.bf16.msra.mxu0 0
        %3221 = vmatpush.bf16.msra.mxu0 0
        %3222 = vmatpush.bf16.msra.mxu0 0
        %3223 = vmatpush.bf16.msra.mxu0 %v2725
        %3224 = vmatpush.bf16.msra.mxu0 %v2613
        %3225 = vmatpush.bf16.msra.mxu0 %v2589
        %3226 = vmatmul.bf16.gmra.mxu0 %v3119
        %v3227 = vpop.f32.mrf.mxu0
        %v3228 = vadd.f32 %v2882, %v3227
        %v3229 = vpop.f32.mrf.mxu0
        %3230 = vdwg.mxu0
        %3231 = vmatpush.bf16.msra.mxu0 0
        %3232 = vmatpush.bf16.msra.mxu0 0
        %3233 = vmatpush.bf16.msra.mxu0 0
        %3234 = vmatpush.bf16.msra.mxu0 0
        %3235 = vmatpush.bf16.msra.mxu0 0
        %3236 = vmatpush.bf16.msra.mxu0 %v2728
        %3237 = vmatpush.bf16.msra.mxu0 %v2614
        %3238 = vmatpush.bf16.msra.mxu0 %v2590
        %3239 = vmatmul.bf16.gmra.mxu0 %v3119
        %v3240 = vpop.f32.mrf.mxu0
        %v3241 = vadd.f32 %v2895, %v3240
        %v3242 = vpop.f32.mrf.mxu0
        %3243 = vdwg.mxu0
        %3244 = vmatpush.bf16.msra.mxu0 0
        %3245 = vmatpush.bf16.msra.mxu0 0
        %3246 = vmatpush.bf16.msra.mxu0 0
        %3247 = vmatpush.bf16.msra.mxu0 0
        %3248 = vmatpush.bf16.msra.mxu0 0
        %3249 = vmatpush.bf16.msra.mxu0 %v2731
        %3250 = vmatpush.bf16.msra.mxu0 %v2615
        %3251 = vmatpush.bf16.msra.mxu0 %v2591
        %3252 = vmatmul.bf16.gmra.mxu0 %v3119
        %v3253 = vpop.f32.mrf.mxu0
        %v3254 = vadd.f32 %v2908, %v3253
        %v3255 = vpop.f32.mrf.mxu0
        %3256 = vdwg.mxu0
        %3257 = vmatpush.bf16.msra.mxu0 0
        %3258 = vmatpush.bf16.msra.mxu0 0
        %3259 = vmatpush.bf16.msra.mxu0 0
        %3260 = vmatpush.bf16.msra.mxu0 0
        %3261 = vmatpush.bf16.msra.mxu0 0
        %3262 = vmatpush.bf16.msra.mxu0 %v2734
        %3263 = vmatpush.bf16.msra.mxu0 %v2616
        %3264 = vmatpush.bf16.msra.mxu0 %v2592
        %3265 = vmatmul.bf16.gmra.mxu0 %v3119
        %v3266 = vpop.f32.mrf.mxu0
        %v3267 = vadd.f32 %v2921, %v3266
        %v3268 = vpop.f32.mrf.mxu0
        %3269 = vdwg.mxu0
        %3270 = vmatpush.bf16.msra.mxu0 0
        %3271 = vmatpush.bf16.msra.mxu0 0
        %3272 = vmatpush.bf16.msra.mxu0 0
        %3273 = vmatpush.bf16.msra.mxu0 0
        %3274 = vmatpush.bf16.msra.mxu0 0
        %3275 = vmatpush.bf16.msra.mxu0 %v2737
        %3276 = vmatpush.bf16.msra.mxu0 %v2617
        %3277 = vmatpush.bf16.msra.mxu0 %v2593
        %3278 = vmatmul.bf16.gmra.mxu0 %v3119
        %v3279 = vpop.f32.mrf.mxu0
        %v3280 = vadd.f32 %v2934, %v3279
        %v3281 = vpop.f32.mrf.mxu0
        %3282 = vdwg.mxu0
        %3283 = vmatpush.bf16.msra.mxu0 0
        %3284 = vmatpush.bf16.msra.mxu0 0
        %3285 = vmatpush.bf16.msra.mxu0 0
        %3286 = vmatpush.bf16.msra.mxu0 0
        %3287 = vmatpush.bf16.msra.mxu0 0
        %3288 = vmatpush.bf16.msra.mxu0 %v2740
        %3289 = vmatpush.bf16.msra.mxu0 %v2618
        %3290 = vmatpush.bf16.msra.mxu0 %v2594
        %3291 = vmatmul.bf16.gmra.mxu0 %v3119
        %v3292 = vpop.f32.mrf.mxu0
        %v3293 = vadd.f32 %v2947, %v3292
        %v3294 = vpop.f32.mrf.mxu0
        %3295 = vdwg.mxu0
        %3296 = vmatpush.bf16.msra.mxu0 0
        %3297 = vmatpush.bf16.msra.mxu0 0
        %3298 = vmatpush.bf16.msra.mxu0 0
        %3299 = vmatpush.bf16.msra.mxu0 0
        %3300 = vmatpush.bf16.msra.mxu0 0
        %3301 = vmatpush.bf16.msra.mxu0 %v2743
        %3302 = vmatpush.bf16.msra.mxu0 %v2619
        %3303 = vmatpush.bf16.msra.mxu0 %v2595
        %3304 = vmatmul.bf16.gmra.mxu0 %v3119
        %v3305 = vpop.f32.mrf.mxu0
        %v3306 = vadd.f32 %v2960, %v3305
        %v3307 = vpop.f32.mrf.mxu0
        %3308 = vdwg.mxu0
        %3309 = vmatpush.bf16.msra.mxu0 0
        %3310 = vmatpush.bf16.msra.mxu0 0
        %3311 = vmatpush.bf16.msra.mxu0 0
        %3312 = vmatpush.bf16.msra.mxu0 0
        %3313 = vmatpush.bf16.msra.mxu0 0
        %3314 = vmatpush.bf16.msra.mxu0 %v2746
        %3315 = vmatpush.bf16.msra.mxu0 %v2620
        %3316 = vmatpush.bf16.msra.mxu0 %v2596
        %3317 = vmatmul.bf16.gmra.mxu0 %v3119
        %v3318 = vpop.f32.mrf.mxu0
        %v3319 = vadd.f32 %v2973, %v3318
        %v3320 = vpop.f32.mrf.mxu0
        %3321 = vdwg.mxu0
        %3322 = vmatpush.bf16.msra.mxu0 0
        %3323 = vmatpush.bf16.msra.mxu0 0
        %3324 = vmatpush.bf16.msra.mxu0 0
        %3325 = vmatpush.bf16.msra.mxu0 0
        %3326 = vmatpush.bf16.msra.mxu0 0
        %3327 = vmatpush.bf16.msra.mxu0 %v2749
        %3328 = vmatpush.bf16.msra.mxu0 %v2621
        %3329 = vmatpush.bf16.msra.mxu0 %v2597
        %3330 = vmatmul.bf16.gmra.mxu0 %v3119
        %v3331 = vpop.f32.mrf.mxu0
        %v3332 = vadd.f32 %v2986, %v3331
        %v3333 = vpop.f32.mrf.mxu0
        %3334 = vdwg.mxu0
        %3335 = vmatpush.bf16.msra.mxu0 0
        %3336 = vmatpush.bf16.msra.mxu0 0
        %3337 = vmatpush.bf16.msra.mxu0 0
        %3338 = vmatpush.bf16.msra.mxu0 0
        %3339 = vmatpush.bf16.msra.mxu0 0
        %3340 = vmatpush.bf16.msra.mxu0 %v2752
        %3341 = vmatpush.bf16.msra.mxu0 %v2622
        %3342 = vmatpush.bf16.msra.mxu0 %v2598
        %3343 = vmatmul.bf16.gmra.mxu0 %v3119
        %v3344 = vpop.f32.mrf.mxu0
        %v3345 = vadd.f32 %v2999, %v3344
        %v3346 = vpop.f32.mrf.mxu0
        %3347 = vdwg.mxu0
        %3348 = vmatpush.bf16.msra.mxu0 0
        %3349 = vmatpush.bf16.msra.mxu0 0
        %3350 = vmatpush.bf16.msra.mxu0 0
        %3351 = vmatpush.bf16.msra.mxu0 0
        %3352 = vmatpush.bf16.msra.mxu0 0
        %3353 = vmatpush.bf16.msra.mxu0 %v2755
        %3354 = vmatpush.bf16.msra.mxu0 %v2623
        %3355 = vmatpush.bf16.msra.mxu0 %v2599
        %3356 = vmatmul.bf16.gmra.mxu0 %v3119
        %v3357 = vpop.f32.mrf.mxu0
        %v3358 = vadd.f32 %v3012, %v3357
        %v3359 = vpop.f32.mrf.mxu0
        %3360 = vdwg.mxu0
        %3361 = vmatpush.bf16.msra.mxu0 0
        %3362 = vmatpush.bf16.msra.mxu0 0
        %3363 = vmatpush.bf16.msra.mxu0 0
        %3364 = vmatpush.bf16.msra.mxu0 0
        %3365 = vmatpush.bf16.msra.mxu0 0
        %3366 = vmatpush.bf16.msra.mxu0 %v2758
        %3367 = vmatpush.bf16.msra.mxu0 %v2624
        %3368 = vmatpush.bf16.msra.mxu0 %v2600
        %3369 = vmatmul.bf16.gmra.mxu0 %v3119
        %v3370 = vpop.f32.mrf.mxu0
        %v3371 = vadd.f32 %v3025, %v3370
        %v3372 = vpop.f32.mrf.mxu0
        %3373 = vdwg.mxu0
        %3374 = vmatpush.bf16.msra.mxu0 0
        %3375 = vmatpush.bf16.msra.mxu0 0
        %3376 = vmatpush.bf16.msra.mxu0 0
        %3377 = vmatpush.bf16.msra.mxu0 0
        %3378 = vmatpush.bf16.msra.mxu0 0
        %3379 = vmatpush.bf16.msra.mxu0 %v2761
        %3380 = vmatpush.bf16.msra.mxu0 %v2625
        %3381 = vmatpush.bf16.msra.mxu0 %v2601
        %3382 = vmatmul.bf16.gmra.mxu0 %v3119
        %v3383 = vpop.f32.mrf.mxu0
        %v3384 = vadd.f32 %v3038, %v3383
        %v3385 = vpop.f32.mrf.mxu0
        %3386 = vdwg.mxu0
        %3387 = vmatpush.bf16.msra.mxu0 0
        %3388 = vmatpush.bf16.msra.mxu0 0
        %3389 = vmatpush.bf16.msra.mxu0 0
        %3390 = vmatpush.bf16.msra.mxu0 0
        %3391 = vmatpush.bf16.msra.mxu0 0
        %3392 = vmatpush.bf16.msra.mxu0 %v2764
        %3393 = vmatpush.bf16.msra.mxu0 %v2626
        %3394 = vmatpush.bf16.msra.mxu0 %v2602
        %3395 = vmatmul.bf16.gmra.mxu0 %v3119
        %v3396 = vpop.f32.mrf.mxu0
        %v3397 = vadd.f32 %v3051, %v3396
        %v3398 = vpop.f32.mrf.mxu0
        %3399 = vdwg.mxu0
        %3400 = vmatpush.bf16.msra.mxu0 0
        %3401 = vmatpush.bf16.msra.mxu0 0
        %3402 = vmatpush.bf16.msra.mxu0 0
        %3403 = vmatpush.bf16.msra.mxu0 0
        %3404 = vmatpush.bf16.msra.mxu0 0
        %3405 = vmatpush.bf16.msra.mxu0 %v2767
        %3406 = vmatpush.bf16.msra.mxu0 %v2627
        %3407 = vmatpush.bf16.msra.mxu0 %v2603
        %3408 = vmatmul.bf16.gmra.mxu0 %v3119
        %v3409 = vpop.f32.mrf.mxu0
        %v3410 = vadd.f32 %v3064, %v3409
        %v3411 = vpop.f32.mrf.mxu0
        %3412 = vdwg.mxu0
        %3413 = vmatpush.bf16.msra.mxu0 0
        %3414 = vmatpush.bf16.msra.mxu0 0
        %3415 = vmatpush.bf16.msra.mxu0 0
        %3416 = vmatpush.bf16.msra.mxu0 0
        %3417 = vmatpush.bf16.msra.mxu0 0
        %3418 = vmatpush.bf16.msra.mxu0 %v2770
        %3419 = vmatpush.bf16.msra.mxu0 %v2628
        %3420 = vmatpush.bf16.msra.mxu0 %v2604
        %3421 = vmatmul.bf16.gmra.mxu0 %v3119
        %v3422 = vpop.f32.mrf.mxu0
        %v3423 = vadd.f32 %v3077, %v3422
        %v3424 = vpop.f32.mrf.mxu0
        %3425 = vdwg.mxu0
        %3426 = vmatpush.bf16.msra.mxu0 0
        %3427 = vmatpush.bf16.msra.mxu0 0
        %3428 = vmatpush.bf16.msra.mxu0 0
        %3429 = vmatpush.bf16.msra.mxu0 0
        %3430 = vmatpush.bf16.msra.mxu0 0
        %3431 = vmatpush.bf16.msra.mxu0 %v2773
        %3432 = vmatpush.bf16.msra.mxu0 %v2629
        %3433 = vmatpush.bf16.msra.mxu0 %v2605
        %3434 = vmatmul.bf16.gmra.mxu0 %v3119
        %v3435 = vpop.f32.mrf.mxu0
        %v3436 = vadd.f32 %v3090, %v3435
        %v3437 = vpop.f32.mrf.mxu0
        %3438 = vdwg.mxu0
        %s3439 = scalar_lea.vmem [#allocation6], 8
        %v3440 = vld [vmem:[%s3439] sm:$0xf]
        %v3441 = vld [vmem:[#allocation2 + $0x10] sm:$0xff]
        %v3442 = vld [vmem:[#allocation2 + $0x18] sm:$0xff]
        %v3443 = vld [vmem:[#allocation2 + $0x20] sm:$0xff]
        %v3444 = vld [vmem:[#allocation2 + $0x28] sm:$0xff]
        %v3445 = vld [vmem:[#allocation2 + $0x30] sm:$0xff]
        %v3446 = vld [vmem:[#allocation2 + $0x38] sm:$0xff]
        %v3447 = vld [vmem:[#allocation2 + $0x40] sm:$0xff]
        %v3448 = vld [vmem:[#allocation2 + $0x48] sm:$0xff]
        %v3449 = vld [vmem:[#allocation2 + $0x50] sm:$0xff]
        %v3450 = vld [vmem:[#allocation2 + $0x58] sm:$0xff]
        %v3451 = vld [vmem:[#allocation2 + $0x60] sm:$0xff]
        %v3452 = vld [vmem:[#allocation2 + $0x68] sm:$0xff]
        %v3453 = vld [vmem:[#allocation2 + $0x80] sm:$0xff]
        %v3454 = vld [vmem:[#allocation2 + $0x88] sm:$0xff]
        %v3455 = vld [vmem:[#allocation2 + $0x90] sm:$0xff]
        %v3456 = vld [vmem:[#allocation2 + $0x98] sm:$0xff]
        %v3457 = vld [vmem:[#allocation2 + $0xa0] sm:$0xff]
        %v3458 = vld [vmem:[#allocation2 + $0xa8] sm:$0xff]
        %v3459 = vld [vmem:[#allocation2 + $0xb0] sm:$0xff]
        %v3460 = vld [vmem:[#allocation2 + $0xb8] sm:$0xff]
        %v3461 = vld [vmem:[#allocation2 + $0xc0] sm:$0xff]
        %v3462 = vld [vmem:[#allocation2 + $0xc8] sm:$0xff]
        %v3463 = vld [vmem:[#allocation2 + $0xd0] sm:$0xff]
        %v3464 = vld [vmem:[#allocation2 + $0xd8] sm:$0xff]
        %v3465 = vld [vmem:[#allocation2 + $0xf0] sm:$0xff]
        %v3466 = vld [vmem:[#allocation2 + $0xf8] sm:$0xff]
        %v3467 = vld [vmem:[#allocation2 + $0x100] sm:$0xff]
        %v3468 = vld [vmem:[#allocation2 + $0x108] sm:$0xff]
        %v3469 = vld [vmem:[#allocation2 + $0x110] sm:$0xff]
        %v3470 = vld [vmem:[#allocation2 + $0x118] sm:$0xff]
        %v3471 = vld [vmem:[#allocation2 + $0x120] sm:$0xff]
        %v3472 = vld [vmem:[#allocation2 + $0x128] sm:$0xff]
        %v3473 = vld [vmem:[#allocation2 + $0x130] sm:$0xff]
        %v3474 = vld [vmem:[#allocation2 + $0x138] sm:$0xff]
        %v3475 = vld [vmem:[#allocation2 + $0x140] sm:$0xff]
        %v3476 = vld [vmem:[#allocation2 + $0x148] sm:$0xff]
        %v3477 = vld [vmem:[#allocation2 + $0x160] sm:$0xff]
        %v3478 = vld [vmem:[#allocation2 + $0x168] sm:$0xff]
        %v3479 = vld [vmem:[#allocation2 + $0x170] sm:$0xff]
        %v3480 = vld [vmem:[#allocation2 + $0x178] sm:$0xff]
        %v3481 = vld [vmem:[#allocation2 + $0x180] sm:$0xff]
        %v3482 = vld [vmem:[#allocation2 + $0x188] sm:$0xff]
        %v3483 = vld [vmem:[#allocation2 + $0x190] sm:$0xff]
        %v3484 = vld [vmem:[#allocation2 + $0x198] sm:$0xff]
        %v3485 = vld [vmem:[#allocation2 + $0x1a0] sm:$0xff]
        %v3486 = vld [vmem:[#allocation2 + $0x1a8] sm:$0xff]
        %v3487 = vld [vmem:[#allocation2 + $0x1b0] sm:$0xff]
        %v3488 = vld [vmem:[#allocation2 + $0x1b8] sm:$0xff]
        %v3489 = vld [vmem:[#allocation2 + $0x1d0] sm:$0x33]
        %v3490 = vld [vmem:[#allocation2 + $0x1d8] sm:$0x33]
        %v3491 = vld [vmem:[#allocation2 + $0x1e0] sm:$0x33]
        %v3492 = vld [vmem:[#allocation2 + $0x1e8] sm:$0x33]
        %v3493 = vld [vmem:[#allocation2 + $0x1f0] sm:$0x33]
        %v3494 = vld [vmem:[#allocation2 + $0x1f8] sm:$0x33]
        %v3495 = vld [vmem:[#allocation2 + $0x200] sm:$0x33]
        %v3496 = vld [vmem:[#allocation2 + $0x208] sm:$0x33]
        %v3497 = vld [vmem:[#allocation2 + $0x210] sm:$0x33]
        %v3498 = vld [vmem:[#allocation2 + $0x218] sm:$0x33]
        %v3499 = vld [vmem:[#allocation2 + $0x220] sm:$0x33]
        %v3500 = vld [vmem:[#allocation2 + $0x228] sm:$0x33]
        %v3561 = vunpack.c.l.b16 %v3441
        %v3562 = vunpack.c.h.b16 %v3441
        %v3563 = vunpack.c.l.b16 %v3442
        %v3564 = vunpack.c.h.b16 %v3442
        %v3565 = vunpack.c.l.b16 %v3443
        %v3566 = vunpack.c.h.b16 %v3443
        %v3567 = vunpack.c.l.b16 %v3444
        %v3568 = vunpack.c.h.b16 %v3444
        %v3569 = vunpack.c.l.b16 %v3445
        %v3570 = vunpack.c.h.b16 %v3445
        %v3571 = vunpack.c.l.b16 %v3446
        %v3572 = vunpack.c.h.b16 %v3446
        %v3573 = vunpack.c.l.b16 %v3447
        %v3574 = vunpack.c.h.b16 %v3447
        %v3575 = vunpack.c.l.b16 %v3448
        %v3576 = vunpack.c.h.b16 %v3448
        %v3577 = vunpack.c.l.b16 %v3449
        %v3578 = vunpack.c.h.b16 %v3449
        %v3579 = vunpack.c.l.b16 %v3450
        %v3580 = vunpack.c.h.b16 %v3450
        %v3581 = vunpack.c.l.b16 %v3451
        %v3582 = vunpack.c.h.b16 %v3451
        %v3583 = vunpack.c.l.b16 %v3452
        %v3584 = vunpack.c.h.b16 %v3452
        %v3585 = vunpack.c.l.b16 %v3453
        %v3586 = vunpack.c.h.b16 %v3453
        %v3587 = vunpack.c.l.b16 %v3454
        %v3588 = vunpack.c.h.b16 %v3454
        %v3589 = vunpack.c.l.b16 %v3455
        %v3590 = vunpack.c.h.b16 %v3455
        %v3591 = vunpack.c.l.b16 %v3456
        %v3592 = vunpack.c.h.b16 %v3456
        %v3593 = vunpack.c.l.b16 %v3457
        %v3594 = vunpack.c.h.b16 %v3457
        %v3595 = vunpack.c.l.b16 %v3458
        %v3596 = vunpack.c.h.b16 %v3458
        %v3597 = vunpack.c.l.b16 %v3459
        %v3598 = vunpack.c.h.b16 %v3459
        %v3599 = vunpack.c.l.b16 %v3460
        %v3600 = vunpack.c.h.b16 %v3460
        %v3601 = vunpack.c.l.b16 %v3461
        %v3602 = vunpack.c.h.b16 %v3461
        %v3603 = vunpack.c.l.b16 %v3462
        %v3604 = vunpack.c.h.b16 %v3462
        %v3605 = vunpack.c.l.b16 %v3463
        %v3606 = vunpack.c.h.b16 %v3463
        %v3607 = vunpack.c.l.b16 %v3464
        %v3608 = vunpack.c.h.b16 %v3464
        %v3609 = vunpack.c.l.b16 %v3465
        %v3610 = vunpack.c.h.b16 %v3465
        %v3611 = vunpack.c.l.b16 %v3466
        %v3612 = vunpack.c.h.b16 %v3466
        %v3613 = vunpack.c.l.b16 %v3467
        %v3614 = vunpack.c.h.b16 %v3467
        %v3615 = vunpack.c.l.b16 %v3468
        %v3616 = vunpack.c.h.b16 %v3468
        %v3617 = vunpack.c.l.b16 %v3469
        %v3618 = vunpack.c.h.b16 %v3469
        %v3619 = vunpack.c.l.b16 %v3470
        %v3620 = vunpack.c.h.b16 %v3470
        %v3621 = vunpack.c.l.b16 %v3471
        %v3622 = vunpack.c.h.b16 %v3471
        %v3623 = vunpack.c.l.b16 %v3472
        %v3624 = vunpack.c.h.b16 %v3472
        %v3625 = vunpack.c.l.b16 %v3473
        %v3626 = vunpack.c.h.b16 %v3473
        %v3627 = vunpack.c.l.b16 %v3474
        %v3628 = vunpack.c.h.b16 %v3474
        %v3629 = vunpack.c.l.b16 %v3475
        %v3630 = vunpack.c.h.b16 %v3475
        %v3631 = vunpack.c.l.b16 %v3476
        %v3632 = vunpack.c.h.b16 %v3476
        %v3633 = vunpack.c.l.b16 %v3477
        %v3634 = vunpack.c.h.b16 %v3477
        %v3635 = vunpack.c.l.b16 %v3478
        %v3636 = vunpack.c.h.b16 %v3478
        %v3637 = vunpack.c.l.b16 %v3479
        %v3638 = vunpack.c.h.b16 %v3479
        %v3639 = vunpack.c.l.b16 %v3480
        %v3640 = vunpack.c.h.b16 %v3480
        %v3641 = vunpack.c.l.b16 %v3481
        %v3642 = vunpack.c.h.b16 %v3481
        %v3643 = vunpack.c.l.b16 %v3482
        %v3644 = vunpack.c.h.b16 %v3482
        %v3645 = vunpack.c.l.b16 %v3483
        %v3646 = vunpack.c.h.b16 %v3483
        %v3647 = vunpack.c.l.b16 %v3484
        %v3648 = vunpack.c.h.b16 %v3484
        %v3649 = vunpack.c.l.b16 %v3485
        %v3650 = vunpack.c.h.b16 %v3485
        %v3651 = vunpack.c.l.b16 %v3486
        %v3652 = vunpack.c.h.b16 %v3486
        %v3653 = vunpack.c.l.b16 %v3487
        %v3654 = vunpack.c.h.b16 %v3487
        %v3655 = vunpack.c.l.b16 %v3488
        %v3656 = vunpack.c.h.b16 %v3488
        %v3657 = vunpack.c.l.b16 %v3489
        %v3658 = vunpack.c.h.b16 %v3489
        %v3659 = vunpack.c.l.b16 %v3490
        %v3660 = vunpack.c.h.b16 %v3490
        %v3661 = vunpack.c.l.b16 %v3491
        %v3662 = vunpack.c.h.b16 %v3491
        %v3663 = vunpack.c.l.b16 %v3492
        %v3664 = vunpack.c.h.b16 %v3492
        %v3665 = vunpack.c.l.b16 %v3493
        %v3666 = vunpack.c.h.b16 %v3493
        %v3667 = vunpack.c.l.b16 %v3494
        %v3668 = vunpack.c.h.b16 %v3494
        %v3669 = vunpack.c.l.b16 %v3495
        %v3670 = vunpack.c.h.b16 %v3495
        %v3671 = vunpack.c.l.b16 %v3496
        %v3672 = vunpack.c.h.b16 %v3496
        %v3673 = vunpack.c.l.b16 %v3497
        %v3674 = vunpack.c.h.b16 %v3497
        %v3675 = vunpack.c.l.b16 %v3498
        %v3676 = vunpack.c.h.b16 %v3498
        %v3677 = vunpack.c.l.b16 %v3499
        %v3678 = vunpack.c.h.b16 %v3499
        %v3679 = vunpack.c.l.b16 %v3500
        %v3680 = vunpack.c.h.b16 %v3500
        %v3681 = vpack.c.b16 %v3585, %v3561
        %v3682 = vpack.c.b16 %v3586, %v3562
        %v3683 = vpack.c.b16 %v3587, %v3563
        %v3684 = vpack.c.b16 %v3588, %v3564
        %v3685 = vpack.c.b16 %v3589, %v3565
        %v3686 = vpack.c.b16 %v3590, %v3566
        %v3687 = vpack.c.b16 %v3591, %v3567
        %v3688 = vpack.c.b16 %v3592, %v3568
        %v3689 = vpack.c.b16 %v3593, %v3569
        %v3690 = vpack.c.b16 %v3594, %v3570
        %v3691 = vpack.c.b16 %v3595, %v3571
        %v3692 = vpack.c.b16 %v3596, %v3572
        %v3693 = vpack.c.b16 %v3597, %v3573
        %v3694 = vpack.c.b16 %v3598, %v3574
        %v3695 = vpack.c.b16 %v3599, %v3575
        %v3696 = vpack.c.b16 %v3600, %v3576
        %v3697 = vpack.c.b16 %v3601, %v3577
        %v3698 = vpack.c.b16 %v3602, %v3578
        %v3699 = vpack.c.b16 %v3603, %v3579
        %v3700 = vpack.c.b16 %v3604, %v3580
        %v3701 = vpack.c.b16 %v3605, %v3581
        %v3702 = vpack.c.b16 %v3606, %v3582
        %v3703 = vpack.c.b16 %v3607, %v3583
        %v3704 = vpack.c.b16 %v3608, %v3584
        %v3705 = vpack.c.b16 %v3633, %v3609
        %v3706 = vpack.c.b16 %v3634, %v3610
        %v3707 = vpack.c.b16 %v3635, %v3611
        %v3708 = vpack.c.b16 %v3636, %v3612
        %v3709 = vpack.c.b16 %v3637, %v3613
        %v3710 = vpack.c.b16 %v3638, %v3614
        %v3711 = vpack.c.b16 %v3639, %v3615
        %v3712 = vpack.c.b16 %v3640, %v3616
        %v3713 = vpack.c.b16 %v3641, %v3617
        %v3714 = vpack.c.b16 %v3642, %v3618
        %v3715 = vpack.c.b16 %v3643, %v3619
        %v3716 = vpack.c.b16 %v3644, %v3620
        %v3717 = vpack.c.b16 %v3645, %v3621
        %v3718 = vpack.c.b16 %v3646, %v3622
        %v3719 = vpack.c.b16 %v3647, %v3623
        %v3720 = vpack.c.b16 %v3648, %v3624
        %v3721 = vpack.c.b16 %v3649, %v3625
        %v3722 = vpack.c.b16 %v3650, %v3626
        %v3723 = vpack.c.b16 %v3651, %v3627
        %v3724 = vpack.c.b16 %v3652, %v3628
        %v3725 = vpack.c.b16 %v3653, %v3629
        %v3726 = vpack.c.b16 %v3654, %v3630
        %v3727 = vpack.c.b16 %v3655, %v3631
        %v3728 = vpack.c.b16 %v3656, %v3632
        %v3729 = vpack.c.b16 %v3657, %v3657
        %v3730 = vpack.c.b16 %v3658, %v3658
        %v3731 = vpack.c.b16 %v3659, %v3659
        %v3732 = vpack.c.b16 %v3660, %v3660
        %v3733 = vpack.c.b16 %v3661, %v3661
        %v3734 = vpack.c.b16 %v3662, %v3662
        %v3735 = vpack.c.b16 %v3663, %v3663
        %v3736 = vpack.c.b16 %v3664, %v3664
        %v3737 = vpack.c.b16 %v3665, %v3665
        %v3738 = vpack.c.b16 %v3666, %v3666
        %v3739 = vpack.c.b16 %v3667, %v3667
        %v3740 = vpack.c.b16 %v3668, %v3668
        %v3741 = vpack.c.b16 %v3669, %v3669
        %v3742 = vpack.c.b16 %v3670, %v3670
        %v3743 = vpack.c.b16 %v3671, %v3671
        %v3744 = vpack.c.b16 %v3672, %v3672
        %v3745 = vpack.c.b16 %v3673, %v3673
        %v3746 = vpack.c.b16 %v3674, %v3674
        %v3747 = vpack.c.b16 %v3675, %v3675
        %v3748 = vpack.c.b16 %v3676, %v3676
        %v3749 = vpack.c.b16 %v3677, %v3677
        %v3750 = vpack.c.b16 %v3678, %v3678
        %v3751 = vpack.c.b16 %v3679, %v3679
        %v3752 = vpack.c.b16 %v3680, %v3680
        %v3802 = vsel %vm2704, %v3440, 0
        %v3805 = vsel %vm2708, %v3729, 0
        %v3808 = vsel %vm2708, %v3730, 0
        %v3811 = vsel %vm2708, %v3731, 0
        %v3814 = vsel %vm2708, %v3732, 0
        %v3817 = vsel %vm2708, %v3733, 0
        %v3820 = vsel %vm2708, %v3734, 0
        %v3823 = vsel %vm2708, %v3735, 0
        %v3826 = vsel %vm2708, %v3736, 0
        %v3829 = vsel %vm2708, %v3737, 0
        %v3832 = vsel %vm2708, %v3738, 0
        %v3835 = vsel %vm2708, %v3739, 0
        %v3838 = vsel %vm2708, %v3740, 0
        %v3841 = vsel %vm2708, %v3741, 0
        %v3844 = vsel %vm2708, %v3742, 0
        %v3847 = vsel %vm2708, %v3743, 0
        %v3850 = vsel %vm2708, %v3744, 0
        %v3853 = vsel %vm2708, %v3745, 0
        %v3856 = vsel %vm2708, %v3746, 0
        %v3859 = vsel %vm2708, %v3747, 0
        %v3862 = vsel %vm2708, %v3748, 0
        %v3865 = vsel %vm2708, %v3749, 0
        %v3868 = vsel %vm2708, %v3750, 0
        %v3871 = vsel %vm2708, %v3751, 0
        %v3874 = vsel %vm2708, %v3752, 0
        %3876 = vmatpush.bf16.msra.mxu0 0
        %3877 = vmatpush.bf16.msra.mxu0 0
        %3878 = vmatpush.bf16.msra.mxu0 0
        %3879 = vmatpush.bf16.msra.mxu0 0
        %3880 = vmatpush.bf16.msra.mxu0 0
        %3881 = vmatpush.bf16.msra.mxu0 %v3805
        %3882 = vmatpush.bf16.msra.mxu0 %v3705
        %3883 = vmatpush.bf16.msra.mxu0 %v3681
        %3884 = vmatmul.bf16.gmra.mxu0 %v3802
        %v3885 = vpop.f32.mrf.mxu0
        %v3886 = vadd.f32 0.0, %v3885
        %v3887 = vpop.f32.mrf.mxu0
        %3888 = vdwg.mxu0
        %3889 = vmatpush.bf16.msra.mxu0 0
        %3890 = vmatpush.bf16.msra.mxu0 0
        %3891 = vmatpush.bf16.msra.mxu0 0
        %3892 = vmatpush.bf16.msra.mxu0 0
        %3893 = vmatpush.bf16.msra.mxu0 0
        %3894 = vmatpush.bf16.msra.mxu0 %v3808
        %3895 = vmatpush.bf16.msra.mxu0 %v3706
        %3896 = vmatpush.bf16.msra.mxu0 %v3682
        %3897 = vmatmul.bf16.gmra.mxu0 %v3802
        %v3898 = vpop.f32.mrf.mxu0
        %v3899 = vadd.f32 0.0, %v3898
        %v3900 = vpop.f32.mrf.mxu0
        %3901 = vdwg.mxu0
        %3902 = vmatpush.bf16.msra.mxu0 0
        %3903 = vmatpush.bf16.msra.mxu0 0
        %3904 = vmatpush.bf16.msra.mxu0 0
        %3905 = vmatpush.bf16.msra.mxu0 0
        %3906 = vmatpush.bf16.msra.mxu0 0
        %3907 = vmatpush.bf16.msra.mxu0 %v3811
        %3908 = vmatpush.bf16.msra.mxu0 %v3707
        %3909 = vmatpush.bf16.msra.mxu0 %v3683
        %3910 = vmatmul.bf16.gmra.mxu0 %v3802
        %v3911 = vpop.f32.mrf.mxu0
        %v3912 = vadd.f32 0.0, %v3911
        %v3913 = vpop.f32.mrf.mxu0
        %3914 = vdwg.mxu0
        %3915 = vmatpush.bf16.msra.mxu0 0
        %3916 = vmatpush.bf16.msra.mxu0 0
        %3917 = vmatpush.bf16.msra.mxu0 0
        %3918 = vmatpush.bf16.msra.mxu0 0
        %3919 = vmatpush.bf16.msra.mxu0 0
        %3920 = vmatpush.bf16.msra.mxu0 %v3814
        %3921 = vmatpush.bf16.msra.mxu0 %v3708
        %3922 = vmatpush.bf16.msra.mxu0 %v3684
        %3923 = vmatmul.bf16.gmra.mxu0 %v3802
        %v3924 = vpop.f32.mrf.mxu0
        %v3925 = vadd.f32 0.0, %v3924
        %v3926 = vpop.f32.mrf.mxu0
        %3927 = vdwg.mxu0
        %3928 = vmatpush.bf16.msra.mxu0 0
        %3929 = vmatpush.bf16.msra.mxu0 0
        %3930 = vmatpush.bf16.msra.mxu0 0
        %3931 = vmatpush.bf16.msra.mxu0 0
        %3932 = vmatpush.bf16.msra.mxu0 0
        %3933 = vmatpush.bf16.msra.mxu0 %v3817
        %3934 = vmatpush.bf16.msra.mxu0 %v3709
        %3935 = vmatpush.bf16.msra.mxu0 %v3685
        %3936 = vmatmul.bf16.gmra.mxu0 %v3802
        %v3937 = vpop.f32.mrf.mxu0
        %v3938 = vadd.f32 0.0, %v3937
        %v3939 = vpop.f32.mrf.mxu0
        %3940 = vdwg.mxu0
        %3941 = vmatpush.bf16.msra.mxu0 0
        %3942 = vmatpush.bf16.msra.mxu0 0
        %3943 = vmatpush.bf16.msra.mxu0 0
        %3944 = vmatpush.bf16.msra.mxu0 0
        %3945 = vmatpush.bf16.msra.mxu0 0
        %3946 = vmatpush.bf16.msra.mxu0 %v3820
        %3947 = vmatpush.bf16.msra.mxu0 %v3710
        %3948 = vmatpush.bf16.msra.mxu0 %v3686
        %3949 = vmatmul.bf16.gmra.mxu0 %v3802
        %v3950 = vpop.f32.mrf.mxu0
        %v3951 = vadd.f32 0.0, %v3950
        %v3952 = vpop.f32.mrf.mxu0
        %3953 = vdwg.mxu0
        %3954 = vmatpush.bf16.msra.mxu0 0
        %3955 = vmatpush.bf16.msra.mxu0 0
        %3956 = vmatpush.bf16.msra.mxu0 0
        %3957 = vmatpush.bf16.msra.mxu0 0
        %3958 = vmatpush.bf16.msra.mxu0 0
        %3959 = vmatpush.bf16.msra.mxu0 %v3823
        %3960 = vmatpush.bf16.msra.mxu0 %v3711
        %3961 = vmatpush.bf16.msra.mxu0 %v3687
        %3962 = vmatmul.bf16.gmra.mxu0 %v3802
        %v3963 = vpop.f32.mrf.mxu0
        %v3964 = vadd.f32 0.0, %v3963
        %v3965 = vpop.f32.mrf.mxu0
        %3966 = vdwg.mxu0
        %3967 = vmatpush.bf16.msra.mxu0 0
        %3968 = vmatpush.bf16.msra.mxu0 0
        %3969 = vmatpush.bf16.msra.mxu0 0
        %3970 = vmatpush.bf16.msra.mxu0 0
        %3971 = vmatpush.bf16.msra.mxu0 0
        %3972 = vmatpush.bf16.msra.mxu0 %v3826
        %3973 = vmatpush.bf16.msra.mxu0 %v3712
        %3974 = vmatpush.bf16.msra.mxu0 %v3688
        %3975 = vmatmul.bf16.gmra.mxu0 %v3802
        %v3976 = vpop.f32.mrf.mxu0
        %v3977 = vadd.f32 0.0, %v3976
        %v3978 = vpop.f32.mrf.mxu0
        %3979 = vdwg.mxu0
        %3980 = vmatpush.bf16.msra.mxu0 0
        %3981 = vmatpush.bf16.msra.mxu0 0
        %3982 = vmatpush.bf16.msra.mxu0 0
        %3983 = vmatpush.bf16.msra.mxu0 0
        %3984 = vmatpush.bf16.msra.mxu0 0
        %3985 = vmatpush.bf16.msra.mxu0 %v3829
        %3986 = vmatpush.bf16.msra.mxu0 %v3713
        %3987 = vmatpush.bf16.msra.mxu0 %v3689
        %3988 = vmatmul.bf16.gmra.mxu0 %v3802
        %v3989 = vpop.f32.mrf.mxu0
        %v3990 = vadd.f32 0.0, %v3989
        %v3991 = vpop.f32.mrf.mxu0
        %3992 = vdwg.mxu0
        %3993 = vmatpush.bf16.msra.mxu0 0
        %3994 = vmatpush.bf16.msra.mxu0 0
        %3995 = vmatpush.bf16.msra.mxu0 0
        %3996 = vmatpush.bf16.msra.mxu0 0
        %3997 = vmatpush.bf16.msra.mxu0 0
        %3998 = vmatpush.bf16.msra.mxu0 %v3832
        %3999 = vmatpush.bf16.msra.mxu0 %v3714
        %4000 = vmatpush.bf16.msra.mxu0 %v3690
        %4001 = vmatmul.bf16.gmra.mxu0 %v3802
        %v4002 = vpop.f32.mrf.mxu0
        %v4003 = vadd.f32 0.0, %v4002
        %v4004 = vpop.f32.mrf.mxu0
        %4005 = vdwg.mxu0
        %4006 = vmatpush.bf16.msra.mxu0 0
        %4007 = vmatpush.bf16.msra.mxu0 0
        %4008 = vmatpush.bf16.msra.mxu0 0
        %4009 = vmatpush.bf16.msra.mxu0 0
        %4010 = vmatpush.bf16.msra.mxu0 0
        %4011 = vmatpush.bf16.msra.mxu0 %v3835
        %4012 = vmatpush.bf16.msra.mxu0 %v3715
        %4013 = vmatpush.bf16.msra.mxu0 %v3691
        %4014 = vmatmul.bf16.gmra.mxu0 %v3802
        %v4015 = vpop.f32.mrf.mxu0
        %v4016 = vadd.f32 0.0, %v4015
        %v4017 = vpop.f32.mrf.mxu0
        %4018 = vdwg.mxu0
        %4019 = vmatpush.bf16.msra.mxu0 0
        %4020 = vmatpush.bf16.msra.mxu0 0
        %4021 = vmatpush.bf16.msra.mxu0 0
        %4022 = vmatpush.bf16.msra.mxu0 0
        %4023 = vmatpush.bf16.msra.mxu0 0
        %4024 = vmatpush.bf16.msra.mxu0 %v3838
        %4025 = vmatpush.bf16.msra.mxu0 %v3716
        %4026 = vmatpush.bf16.msra.mxu0 %v3692
        %4027 = vmatmul.bf16.gmra.mxu0 %v3802
        %v4028 = vpop.f32.mrf.mxu0
        %v4029 = vadd.f32 0.0, %v4028
        %v4030 = vpop.f32.mrf.mxu0
        %4031 = vdwg.mxu0
        %4032 = vmatpush.bf16.msra.mxu0 0
        %4033 = vmatpush.bf16.msra.mxu0 0
        %4034 = vmatpush.bf16.msra.mxu0 0
        %4035 = vmatpush.bf16.msra.mxu0 0
        %4036 = vmatpush.bf16.msra.mxu0 0
        %4037 = vmatpush.bf16.msra.mxu0 %v3841
        %4038 = vmatpush.bf16.msra.mxu0 %v3717
        %4039 = vmatpush.bf16.msra.mxu0 %v3693
        %4040 = vmatmul.bf16.gmra.mxu0 %v3802
        %v4041 = vpop.f32.mrf.mxu0
        %v4042 = vadd.f32 0.0, %v4041
        %v4043 = vpop.f32.mrf.mxu0
        %4044 = vdwg.mxu0
        %4045 = vmatpush.bf16.msra.mxu0 0
        %4046 = vmatpush.bf16.msra.mxu0 0
        %4047 = vmatpush.bf16.msra.mxu0 0
        %4048 = vmatpush.bf16.msra.mxu0 0
        %4049 = vmatpush.bf16.msra.mxu0 0
        %4050 = vmatpush.bf16.msra.mxu0 %v3844
        %4051 = vmatpush.bf16.msra.mxu0 %v3718
        %4052 = vmatpush.bf16.msra.mxu0 %v3694
        %4053 = vmatmul.bf16.gmra.mxu0 %v3802
        %v4054 = vpop.f32.mrf.mxu0
        %v4055 = vadd.f32 0.0, %v4054
        %v4056 = vpop.f32.mrf.mxu0
        %4057 = vdwg.mxu0
        %4058 = vmatpush.bf16.msra.mxu0 0
        %4059 = vmatpush.bf16.msra.mxu0 0
        %4060 = vmatpush.bf16.msra.mxu0 0
        %4061 = vmatpush.bf16.msra.mxu0 0
        %4062 = vmatpush.bf16.msra.mxu0 0
        %4063 = vmatpush.bf16.msra.mxu0 %v3847
        %4064 = vmatpush.bf16.msra.mxu0 %v3719
        %4065 = vmatpush.bf16.msra.mxu0 %v3695
        %4066 = vmatmul.bf16.gmra.mxu0 %v3802
        %v4067 = vpop.f32.mrf.mxu0
        %v4068 = vadd.f32 0.0, %v4067
        %v4069 = vpop.f32.mrf.mxu0
        %4070 = vdwg.mxu0
        %4071 = vmatpush.bf16.msra.mxu0 0
        %4072 = vmatpush.bf16.msra.mxu0 0
        %4073 = vmatpush.bf16.msra.mxu0 0
        %4074 = vmatpush.bf16.msra.mxu0 0
        %4075 = vmatpush.bf16.msra.mxu0 0
        %4076 = vmatpush.bf16.msra.mxu0 %v3850
        %4077 = vmatpush.bf16.msra.mxu0 %v3720
        %4078 = vmatpush.bf16.msra.mxu0 %v3696
        %4079 = vmatmul.bf16.gmra.mxu0 %v3802
        %v4080 = vpop.f32.mrf.mxu0
        %v4081 = vadd.f32 0.0, %v4080
        %v4082 = vpop.f32.mrf.mxu0
        %4083 = vdwg.mxu0
        %4084 = vmatpush.bf16.msra.mxu0 0
        %4085 = vmatpush.bf16.msra.mxu0 0
        %4086 = vmatpush.bf16.msra.mxu0 0
        %4087 = vmatpush.bf16.msra.mxu0 0
        %4088 = vmatpush.bf16.msra.mxu0 0
        %4089 = vmatpush.bf16.msra.mxu0 %v3853
        %4090 = vmatpush.bf16.msra.mxu0 %v3721
        %4091 = vmatpush.bf16.msra.mxu0 %v3697
        %4092 = vmatmul.bf16.gmra.mxu0 %v3802
        %v4093 = vpop.f32.mrf.mxu0
        %v4094 = vadd.f32 0.0, %v4093
        %v4095 = vpop.f32.mrf.mxu0
        %4096 = vdwg.mxu0
        %4097 = vmatpush.bf16.msra.mxu0 0
        %4098 = vmatpush.bf16.msra.mxu0 0
        %4099 = vmatpush.bf16.msra.mxu0 0
        %4100 = vmatpush.bf16.msra.mxu0 0
        %4101 = vmatpush.bf16.msra.mxu0 0
        %4102 = vmatpush.bf16.msra.mxu0 %v3856
        %4103 = vmatpush.bf16.msra.mxu0 %v3722
        %4104 = vmatpush.bf16.msra.mxu0 %v3698
        %4105 = vmatmul.bf16.gmra.mxu0 %v3802
        %v4106 = vpop.f32.mrf.mxu0
        %v4107 = vadd.f32 0.0, %v4106
        %v4108 = vpop.f32.mrf.mxu0
        %4109 = vdwg.mxu0
        %4110 = vmatpush.bf16.msra.mxu0 0
        %4111 = vmatpush.bf16.msra.mxu0 0
        %4112 = vmatpush.bf16.msra.mxu0 0
        %4113 = vmatpush.bf16.msra.mxu0 0
        %4114 = vmatpush.bf16.msra.mxu0 0
        %4115 = vmatpush.bf16.msra.mxu0 %v3859
        %4116 = vmatpush.bf16.msra.mxu0 %v3723
        %4117 = vmatpush.bf16.msra.mxu0 %v3699
        %4118 = vmatmul.bf16.gmra.mxu0 %v3802
        %v4119 = vpop.f32.mrf.mxu0
        %v4120 = vadd.f32 0.0, %v4119
        %v4121 = vpop.f32.mrf.mxu0
        %4122 = vdwg.mxu0
        %4123 = vmatpush.bf16.msra.mxu0 0
        %4124 = vmatpush.bf16.msra.mxu0 0
        %4125 = vmatpush.bf16.msra.mxu0 0
        %4126 = vmatpush.bf16.msra.mxu0 0
        %4127 = vmatpush.bf16.msra.mxu0 0
        %4128 = vmatpush.bf16.msra.mxu0 %v3862
        %4129 = vmatpush.bf16.msra.mxu0 %v3724
        %4130 = vmatpush.bf16.msra.mxu0 %v3700
        %4131 = vmatmul.bf16.gmra.mxu0 %v3802
        %v4132 = vpop.f32.mrf.mxu0
        %v4133 = vadd.f32 0.0, %v4132
        %v4134 = vpop.f32.mrf.mxu0
        %4135 = vdwg.mxu0
        %4136 = vmatpush.bf16.msra.mxu0 0
        %4137 = vmatpush.bf16.msra.mxu0 0
        %4138 = vmatpush.bf16.msra.mxu0 0
        %4139 = vmatpush.bf16.msra.mxu0 0
        %4140 = vmatpush.bf16.msra.mxu0 0
        %4141 = vmatpush.bf16.msra.mxu0 %v3865
        %4142 = vmatpush.bf16.msra.mxu0 %v3725
        %4143 = vmatpush.bf16.msra.mxu0 %v3701
        %4144 = vmatmul.bf16.gmra.mxu0 %v3802
        %v4145 = vpop.f32.mrf.mxu0
        %v4146 = vadd.f32 0.0, %v4145
        %v4147 = vpop.f32.mrf.mxu0
        %4148 = vdwg.mxu0
        %4149 = vmatpush.bf16.msra.mxu0 0
        %4150 = vmatpush.bf16.msra.mxu0 0
        %4151 = vmatpush.bf16.msra.mxu0 0
        %4152 = vmatpush.bf16.msra.mxu0 0
        %4153 = vmatpush.bf16.msra.mxu0 0
        %4154 = vmatpush.bf16.msra.mxu0 %v3868
        %4155 = vmatpush.bf16.msra.mxu0 %v3726
        %4156 = vmatpush.bf16.msra.mxu0 %v3702
        %4157 = vmatmul.bf16.gmra.mxu0 %v3802
        %v4158 = vpop.f32.mrf.mxu0
        %v4159 = vadd.f32 0.0, %v4158
        %v4160 = vpop.f32.mrf.mxu0
        %4161 = vdwg.mxu0
        %4162 = vmatpush.bf16.msra.mxu0 0
        %4163 = vmatpush.bf16.msra.mxu0 0
        %4164 = vmatpush.bf16.msra.mxu0 0
        %4165 = vmatpush.bf16.msra.mxu0 0
        %4166 = vmatpush.bf16.msra.mxu0 0
        %4167 = vmatpush.bf16.msra.mxu0 %v3871
        %4168 = vmatpush.bf16.msra.mxu0 %v3727
        %4169 = vmatpush.bf16.msra.mxu0 %v3703
        %4170 = vmatmul.bf16.gmra.mxu0 %v3802
        %v4171 = vpop.f32.mrf.mxu0
        %v4172 = vadd.f32 0.0, %v4171
        %v4173 = vpop.f32.mrf.mxu0
        %4174 = vdwg.mxu0
        %4175 = vmatpush.bf16.msra.mxu0 0
        %4176 = vmatpush.bf16.msra.mxu0 0
        %4177 = vmatpush.bf16.msra.mxu0 0
        %4178 = vmatpush.bf16.msra.mxu0 0
        %4179 = vmatpush.bf16.msra.mxu0 0
        %4180 = vmatpush.bf16.msra.mxu0 %v3874
        %4181 = vmatpush.bf16.msra.mxu0 %v3728
        %4182 = vmatpush.bf16.msra.mxu0 %v3704
        %4183 = vmatmul.bf16.gmra.mxu0 %v3802
        %v4184 = vpop.f32.mrf.mxu0
        %v4185 = vadd.f32 0.0, %v4184
        %v4186 = vpop.f32.mrf.mxu0
        %4187 = vdwg.mxu0
        %v4188 = vadd.f32 %v3137, %v3886
        %v4189 = vadd.f32 %v3150, %v3899
        %v4190 = vadd.f32 %v3163, %v3912
        %v4191 = vadd.f32 %v3176, %v3925
        %v4192 = vadd.f32 %v3189, %v3938
        %v4193 = vadd.f32 %v3202, %v3951
        %v4194 = vadd.f32 %v3215, %v3964
        %v4195 = vadd.f32 %v3228, %v3977
        %v4196 = vadd.f32 %v3241, %v3990
        %v4197 = vadd.f32 %v3254, %v4003
        %v4198 = vadd.f32 %v3267, %v4016
        %v4199 = vadd.f32 %v3280, %v4029
        %v4200 = vadd.f32 %v3293, %v4042
        %v4201 = vadd.f32 %v3306, %v4055
        %v4202 = vadd.f32 %v3319, %v4068
        %v4203 = vadd.f32 %v3332, %v4081
        %v4204 = vadd.f32 %v3345, %v4094
        %v4205 = vadd.f32 %v3358, %v4107
        %v4206 = vadd.f32 %v3371, %v4120
        %v4207 = vadd.f32 %v3384, %v4133
        %v4208 = vadd.f32 %v3397, %v4146
        %v4209 = vadd.f32 %v3410, %v4159
        %v4210 = vadd.f32 %v3423, %v4172
        %v4211 = vadd.f32 %v3436, %v4185
        %v4212 = vld [vmem:[#allocation8] sm:$0xff]
        %v4213 = vld [vmem:[#allocation8 + $0x8] sm:$0xff]
        %v4214 = vld [vmem:[#allocation8 + $0x10] sm:$0xff]
        %v4218 = vperm.slane %v4212, 0
        %v4219 = vperm.slane %v4212, 1
        %v4220 = vperm.slane %v4212, 2
        %v4221 = vperm.slane %v4212, 3
        %v4222 = vperm.slane %v4212, 4
        %v4223 = vperm.slane %v4212, 5
        %v4224 = vperm.slane %v4212, 6
        %v4225 = vperm.slane %v4212, 7
        %v4226 = vperm.slane %v4213, 0
        %v4227 = vperm.slane %v4213, 1
        %v4228 = vperm.slane %v4213, 2
        %v4229 = vperm.slane %v4213, 3
        %v4230 = vperm.slane %v4213, 4
        %v4231 = vperm.slane %v4213, 5
        %v4232 = vperm.slane %v4213, 6
        %v4233 = vperm.slane %v4213, 7
        %v4234 = vperm.slane %v4214, 0
        %v4235 = vperm.slane %v4214, 1
        %v4236 = vperm.slane %v4214, 2
        %v4237 = vperm.slane %v4214, 3
        %v4238 = vperm.slane %v4214, 4
        %v4239 = vperm.slane %v4214, 5
        %v4240 = vperm.slane %v4214, 6
        %v4241 = vperm.slane %v4214, 7
        %v4266 = vmul.f32 %v4188, %v4218
        %v4267 = vmul.f32 %v4189, %v4219
        %v4268 = vmul.f32 %v4190, %v4220
        %v4269 = vmul.f32 %v4191, %v4221
        %v4270 = vmul.f32 %v4192, %v4222
        %v4271 = vmul.f32 %v4193, %v4223
        %v4272 = vmul.f32 %v4194, %v4224
        %v4273 = vmul.f32 %v4195, %v4225
        %v4274 = vmul.f32 %v4196, %v4226
        %v4275 = vmul.f32 %v4197, %v4227
        %v4276 = vmul.f32 %v4198, %v4228
        %v4277 = vmul.f32 %v4199, %v4229
        %v4278 = vmul.f32 %v4200, %v4230
        %v4279 = vmul.f32 %v4201, %v4231
        %v4280 = vmul.f32 %v4202, %v4232
        %v4281 = vmul.f32 %v4203, %v4233
        %v4282 = vmul.f32 %v4204, %v4234
        %v4283 = vmul.f32 %v4205, %v4235
        %v4284 = vmul.f32 %v4206, %v4236
        %v4285 = vmul.f32 %v4207, %v4237
        %v4286 = vmul.f32 %v4208, %v4238
        %v4287 = vmul.f32 %v4209, %v4239
        %v4288 = vmul.f32 %v4210, %v4240
        %v4289 = vmul.f32 %v4211, %v4241
        %v4290 = vadd.f32 %v4266, %v4267
        %v4291 = vadd.f32 %v4290, %v4268
        %v4292 = vadd.f32 %v4291, %v4269
        %v4293 = vadd.f32 %v4292, %v4270
        %v4294 = vadd.f32 %v4293, %v4271
        %v4295 = vadd.f32 %v4294, %v4272
        %v4296 = vadd.f32 %v4295, %v4273
        %v4297 = vadd.f32 %v4296, %v4274
        %v4298 = vadd.f32 %v4297, %v4275
        %v4299 = vadd.f32 %v4298, %v4276
        %v4300 = vadd.f32 %v4299, %v4277
        %v4301 = vadd.f32 %v4300, %v4278
        %v4302 = vadd.f32 %v4301, %v4279
        %v4303 = vadd.f32 %v4302, %v4280
        %v4304 = vadd.f32 %v4303, %v4281
        %v4305 = vadd.f32 %v4304, %v4282
        %v4306 = vadd.f32 %v4305, %v4283
        %v4307 = vadd.f32 %v4306, %v4284
        %v4308 = vadd.f32 %v4307, %v4285
        %v4309 = vadd.f32 %v4308, %v4286
        %v4310 = vadd.f32 %v4309, %v4287
        %v4311 = vadd.f32 %v4310, %v4288
        %v4312 = vadd.f32 %v4311, %v4289
        %4313 = vadd.xlane.f32.xlu0 %v4312
        %v4314 = vpop.xlane.xlu0 %4313
        %v4315 = vmul.f32 %v4314, 0.001
        %v4316 = vmul.f32 %v4266, %v4188
        %v4317 = vmul.f32 %v4267, %v4189
        %v4318 = vmul.f32 %v4268, %v4190
        %v4319 = vmul.f32 %v4269, %v4191
        %v4320 = vmul.f32 %v4270, %v4192
        %v4321 = vmul.f32 %v4271, %v4193
        %v4322 = vmul.f32 %v4272, %v4194
        %v4323 = vmul.f32 %v4273, %v4195
        %v4324 = vmul.f32 %v4274, %v4196
        %v4325 = vmul.f32 %v4275, %v4197
        %v4326 = vmul.f32 %v4276, %v4198
        %v4327 = vmul.f32 %v4277, %v4199
        %v4328 = vmul.f32 %v4278, %v4200
        %v4329 = vmul.f32 %v4279, %v4201
        %v4330 = vmul.f32 %v4280, %v4202
        %v4331 = vmul.f32 %v4281, %v4203
        %v4332 = vmul.f32 %v4282, %v4204
        %v4333 = vmul.f32 %v4283, %v4205
        %v4334 = vmul.f32 %v4284, %v4206
        %v4335 = vmul.f32 %v4285, %v4207
        %v4336 = vmul.f32 %v4286, %v4208
        %v4337 = vmul.f32 %v4287, %v4209
        %v4338 = vmul.f32 %v4288, %v4210
        %v4339 = vmul.f32 %v4289, %v4211
        %v4340 = vadd.f32 %v4316, %v4317
        %v4341 = vadd.f32 %v4340, %v4318
        %v4342 = vadd.f32 %v4341, %v4319
        %v4343 = vadd.f32 %v4342, %v4320
        %v4344 = vadd.f32 %v4343, %v4321
        %v4345 = vadd.f32 %v4344, %v4322
        %v4346 = vadd.f32 %v4345, %v4323
        %v4347 = vadd.f32 %v4346, %v4324
        %v4348 = vadd.f32 %v4347, %v4325
        %v4349 = vadd.f32 %v4348, %v4326
        %v4350 = vadd.f32 %v4349, %v4327
        %v4351 = vadd.f32 %v4350, %v4328
        %v4352 = vadd.f32 %v4351, %v4329
        %v4353 = vadd.f32 %v4352, %v4330
        %v4354 = vadd.f32 %v4353, %v4331
        %v4355 = vadd.f32 %v4354, %v4332
        %v4356 = vadd.f32 %v4355, %v4333
        %v4357 = vadd.f32 %v4356, %v4334
        %v4358 = vadd.f32 %v4357, %v4335
        %v4359 = vadd.f32 %v4358, %v4336
        %v4360 = vadd.f32 %v4359, %v4337
        %v4361 = vadd.f32 %v4360, %v4338
        %v4362 = vadd.f32 %v4361, %v4339
        %4363 = vadd.xlane.f32.xlu0 %v4362
        %v4364 = vpop.xlane.xlu0 %4363
        %v4365 = vmul.f32 %v4364, 0.001
        %v4366 = vmul.f32 %v4315, %v4315
        %v4367 = vsub.f32 %v4365, %v4366
        %v4368 = vmax.f32 %v4367, 0.0
        %v4369 = vsub.f32 %v4188, %v4315
        %v4370 = vsub.f32 %v4189, %v4315
        %v4371 = vsub.f32 %v4190, %v4315
        %v4372 = vsub.f32 %v4191, %v4315
        %v4373 = vsub.f32 %v4192, %v4315
        %v4374 = vsub.f32 %v4193, %v4315
        %v4375 = vsub.f32 %v4194, %v4315
        %v4376 = vsub.f32 %v4195, %v4315
        %v4377 = vsub.f32 %v4196, %v4315
        %v4378 = vsub.f32 %v4197, %v4315
        %v4379 = vsub.f32 %v4198, %v4315
        %v4380 = vsub.f32 %v4199, %v4315
        %v4381 = vsub.f32 %v4200, %v4315
        %v4382 = vsub.f32 %v4201, %v4315
        %v4383 = vsub.f32 %v4202, %v4315
        %v4384 = vsub.f32 %v4203, %v4315
        %v4385 = vsub.f32 %v4204, %v4315
        %v4386 = vsub.f32 %v4205, %v4315
        %v4387 = vsub.f32 %v4206, %v4315
        %v4388 = vsub.f32 %v4207, %v4315
        %v4389 = vsub.f32 %v4208, %v4315
        %v4390 = vsub.f32 %v4209, %v4315
        %v4391 = vsub.f32 %v4210, %v4315
        %v4392 = vsub.f32 %v4211, %v4315
        %v4393 = vadd.f32 %v4368, 1e-05
        %v4394 = vrsqrt.pop %v4393
        %v4395 = vmul.f32 %v4394, %v4393
        %v4396 = vmul.f32 %v4395, %v4394
        %v4397 = vmul.f32 0.5, %v4396
        %v4398 = vsub.f32 1.5, %v4397
        %v4399 = vmul.f32 %v4394, %v4398
        %vm4400 = vweird.f32 %v4393
        %vm4401 = vweird.f32 %v4394
        %vm4402 = vmor %vm4400, %vm4401
        %v4403 = vsel %vm4402, %v4394, %v4399
        %v4404 = vmul.f32 %v4369, %v4403
        %v4405 = vmul.f32 %v4370, %v4403
        %v4406 = vmul.f32 %v4371, %v4403
        %v4407 = vmul.f32 %v4372, %v4403
        %v4408 = vmul.f32 %v4373, %v4403
        %v4409 = vmul.f32 %v4374, %v4403
        %v4410 = vmul.f32 %v4375, %v4403
        %v4411 = vmul.f32 %v4376, %v4403
        %v4412 = vmul.f32 %v4377, %v4403
        %v4413 = vmul.f32 %v4378, %v4403
        %v4414 = vmul.f32 %v4379, %v4403
        %v4415 = vmul.f32 %v4380, %v4403
        %v4416 = vmul.f32 %v4381, %v4403
        %v4417 = vmul.f32 %v4382, %v4403
        %v4418 = vmul.f32 %v4383, %v4403
        %v4419 = vmul.f32 %v4384, %v4403
        %v4420 = vmul.f32 %v4385, %v4403
        %v4421 = vmul.f32 %v4386, %v4403
        %v4422 = vmul.f32 %v4387, %v4403
        %v4423 = vmul.f32 %v4388, %v4403
        %v4424 = vmul.f32 %v4389, %v4403
        %v4425 = vmul.f32 %v4390, %v4403
        %v4426 = vmul.f32 %v4391, %v4403
        %v4427 = vmul.f32 %v4392, %v4403
        %vm4428 = vcmp.ge.f32.partialorder %v4404, 0.0
        %vm4429 = vcmp.ge.f32.partialorder %v4405, 0.0
        %vm4430 = vcmp.ge.f32.partialorder %v4406, 0.0
        %vm4431 = vcmp.ge.f32.partialorder %v4407, 0.0
        %vm4432 = vcmp.ge.f32.partialorder %v4408, 0.0
        %vm4433 = vcmp.ge.f32.partialorder %v4409, 0.0
        %vm4434 = vcmp.ge.f32.partialorder %v4410, 0.0
        %vm4435 = vcmp.ge.f32.partialorder %v4411, 0.0
        %vm4436 = vcmp.ge.f32.partialorder %v4412, 0.0
        %vm4437 = vcmp.ge.f32.partialorder %v4413, 0.0
        %vm4438 = vcmp.ge.f32.partialorder %v4414, 0.0
        %vm4439 = vcmp.ge.f32.partialorder %v4415, 0.0
        %vm4440 = vcmp.ge.f32.partialorder %v4416, 0.0
        %vm4441 = vcmp.ge.f32.partialorder %v4417, 0.0
        %vm4442 = vcmp.ge.f32.partialorder %v4418, 0.0
        %vm4443 = vcmp.ge.f32.partialorder %v4419, 0.0
        %vm4444 = vcmp.ge.f32.partialorder %v4420, 0.0
        %vm4445 = vcmp.ge.f32.partialorder %v4421, 0.0
        %vm4446 = vcmp.ge.f32.partialorder %v4422, 0.0
        %vm4447 = vcmp.ge.f32.partialorder %v4423, 0.0
        %vm4448 = vcmp.ge.f32.partialorder %v4424, 0.0
        %vm4449 = vcmp.ge.f32.partialorder %v4425, 0.0
        %vm4450 = vcmp.ge.f32.partialorder %v4426, 0.0
        %vm4451 = vcmp.ge.f32.partialorder %v4427, 0.0
        %v4452 = vmul.f32 %v4404, 0.01
        %v4453 = vmul.f32 %v4405, 0.01
        %v4454 = vmul.f32 %v4406, 0.01
        %v4455 = vmul.f32 %v4407, 0.01
        %v4456 = vmul.f32 %v4408, 0.01
        %v4457 = vmul.f32 %v4409, 0.01
        %v4458 = vmul.f32 %v4410, 0.01
        %v4459 = vmul.f32 %v4411, 0.01
        %v4460 = vmul.f32 %v4412, 0.01
        %v4461 = vmul.f32 %v4413, 0.01
        %v4462 = vmul.f32 %v4414, 0.01
        %v4463 = vmul.f32 %v4415, 0.01
        %v4464 = vmul.f32 %v4416, 0.01
        %v4465 = vmul.f32 %v4417, 0.01
        %v4466 = vmul.f32 %v4418, 0.01
        %v4467 = vmul.f32 %v4419, 0.01
        %v4468 = vmul.f32 %v4420, 0.01
        %v4469 = vmul.f32 %v4421, 0.01
        %v4470 = vmul.f32 %v4422, 0.01
        %v4471 = vmul.f32 %v4423, 0.01
        %v4472 = vmul.f32 %v4424, 0.01
        %v4473 = vmul.f32 %v4425, 0.01
        %v4474 = vmul.f32 %v4426, 0.01
        %v4475 = vmul.f32 %v4427, 0.01
        %v4476 = vsel %vm4428, %v4404, %v4452
        %v4477 = vsel %vm4429, %v4405, %v4453
        %v4478 = vsel %vm4430, %v4406, %v4454
        %v4479 = vsel %vm4431, %v4407, %v4455
        %v4480 = vsel %vm4432, %v4408, %v4456
        %v4481 = vsel %vm4433, %v4409, %v4457
        %v4482 = vsel %vm4434, %v4410, %v4458
        %v4483 = vsel %vm4435, %v4411, %v4459
        %v4484 = vsel %vm4436, %v4412, %v4460
        %v4485 = vsel %vm4437, %v4413, %v4461
        %v4486 = vsel %vm4438, %v4414, %v4462
        %v4487 = vsel %vm4439, %v4415, %v4463
        %v4488 = vsel %vm4440, %v4416, %v4464
        %v4489 = vsel %vm4441, %v4417, %v4465
        %v4490 = vsel %vm4442, %v4418, %v4466
        %v4491 = vsel %vm4443, %v4419, %v4467
        %v4492 = vsel %vm4444, %v4420, %v4468
        %v4493 = vsel %vm4445, %v4421, %v4469
        %v4494 = vsel %vm4446, %v4422, %v4470
        %v4495 = vsel %vm4447, %v4423, %v4471
        %v4496 = vsel %vm4448, %v4424, %v4472
        %v4497 = vsel %vm4449, %v4425, %v4473
        %v4498 = vsel %vm4450, %v4426, %v4474
        %v4499 = vsel %vm4451, %v4427, %v4475
        %v4500 = vmul.f32 %v4476, %v4218
        %v4501 = vmul.f32 %v4477, %v4219
        %v4502 = vmul.f32 %v4478, %v4220
        %v4503 = vmul.f32 %v4479, %v4221
        %v4504 = vmul.f32 %v4480, %v4222
        %v4505 = vmul.f32 %v4481, %v4223
        %v4506 = vmul.f32 %v4482, %v4224
        %v4507 = vmul.f32 %v4483, %v4225
        %v4508 = vmul.f32 %v4484, %v4226
        %v4509 = vmul.f32 %v4485, %v4227
        %v4510 = vmul.f32 %v4486, %v4228
        %v4511 = vmul.f32 %v4487, %v4229
        %v4512 = vmul.f32 %v4488, %v4230
        %v4513 = vmul.f32 %v4489, %v4231
        %v4514 = vmul.f32 %v4490, %v4232
        %v4515 = vmul.f32 %v4491, %v4233
        %v4516 = vmul.f32 %v4492, %v4234
        %v4517 = vmul.f32 %v4493, %v4235
        %v4518 = vmul.f32 %v4494, %v4236
        %v4519 = vmul.f32 %v4495, %v4237
        %v4520 = vmul.f32 %v4496, %v4238
        %v4521 = vmul.f32 %v4497, %v4239
        %v4522 = vmul.f32 %v4498, %v4240
        %v4523 = vmul.f32 %v4499, %v4241
        %4524 = vst [vmem:[%s240] sm:$0xff] %v4500
        %4525 = vst [vmem:[%s240 + $0x8] sm:$0xff] %v4501
        %4526 = vst [vmem:[%s240 + $0x10] sm:$0xff] %v4502
        %4527 = vst [vmem:[%s240 + $0x18] sm:$0xff] %v4503
        %4528 = vst [vmem:[%s240 + $0x20] sm:$0xff] %v4504
        %4529 = vst [vmem:[%s240 + $0x28] sm:$0xff] %v4505
        %4530 = vst [vmem:[%s240 + $0x30] sm:$0xff] %v4506
        %4531 = vst [vmem:[%s240 + $0x38] sm:$0xff] %v4507
        %4532 = vst [vmem:[%s240 + $0x40] sm:$0xff] %v4508
        %4533 = vst [vmem:[%s240 + $0x48] sm:$0xff] %v4509
        %4534 = vst [vmem:[%s240 + $0x50] sm:$0xff] %v4510
        %4535 = vst [vmem:[%s240 + $0x58] sm:$0xff] %v4511
        %4536 = vst [vmem:[%s240 + $0x60] sm:$0xff] %v4512
        %4537 = vst [vmem:[%s240 + $0x68] sm:$0xff] %v4513
        %4538 = vst [vmem:[%s240 + $0x70] sm:$0xff] %v4514
        %4539 = vst [vmem:[%s240 + $0x78] sm:$0xff] %v4515
        %4540 = vst [vmem:[%s240 + $0x80] sm:$0xff] %v4516
        %4541 = vst [vmem:[%s240 + $0x88] sm:$0xff] %v4517
        %4542 = vst [vmem:[%s240 + $0x90] sm:$0xff] %v4518
        %4543 = vst [vmem:[%s240 + $0x98] sm:$0xff] %v4519
        %4544 = vst [vmem:[%s240 + $0xa0] sm:$0xff] %v4520
        %4545 = vst [vmem:[%s240 + $0xa8] sm:$0xff] %v4521
        %4546 = vst [vmem:[%s240 + $0xb0] sm:$0xff] %v4522
        %4547 = vst [vmem:[%s240 + $0xb8] sm:$0xff] %v4523
        %4548 = vst [vmem:[%s240 + $0xc0] sm:$0xff] 0.0
        %4549 = vst [vmem:[%s240 + $0xc8] sm:$0xff] 0.0
        %4550 = vst [vmem:[%s240 + $0xd0] sm:$0xff] 0.0
        %4551 = vst [vmem:[%s240 + $0xd8] sm:$0xff] 0.0
        %4552 = vst [vmem:[%s240 + $0xe0] sm:$0xff] 0.0
        %s4553 = sand.u32 %s116, 1
        %s4554 = scalar_lea.sflag [#allocation5], %s4553
        %s4555 = sand.u32 %s116, 1
        %s4556 = smul.addr %s4555, 232
        %s4557 = scalar_lea.vmem [#allocation9], %s4556
        // Predicated region
        $region45: #{tpu_custom_call.1} parent=31 // pred_check
          %p4558 = pneg %p126
        $region46: #{tpu_custom_call.1} parent=31 // pred_check_branch
          %4560 = sbr.rel (%p4558) target = $region48
        $region47: #{tpu_custom_call.1} parent=31 // pred_region
          %4562 = vsyncadd %s4554, 0
          %s4563 = smul.addr %s26, 29
          %s4564 = smul.addr %s25, 29
          %s4565 = sadd.s32 %s4563, %s4564
          %s4566 = smul.addr %s4565, 8
          %s4567 = scalar_lea.hbm %s3, %s4566
          %s4569 = sshll.u32 %s4557, 4
          %s4570 = int_to_ptr.vmem [resolvable:$true] %s4569
          %s4571 = sshll.u32 %s4567, 4
          %s4572 = int_to_ptr.hbm [resolvable:$true] %s4571
          %4574 = dma.vmem_to_hbm [thread:$0]  %s4570, 3712, %s4572, %s4554
        $region48: #{tpu_custom_call.1} parent=31 // pred_fallthru
          _
      $region32: #{tpu_custom_call.1} parent=5 // pred_fallthru
        _
      %p4575 = scmp.le.s32.totalorder 2, %s16
      // Predicated region
      $region49: #{tpu_custom_call.1} parent=5 // pred_check
        %p4576 = pneg %p4575
      $region50: #{tpu_custom_call.1} parent=5 // pred_check_branch
        %4578 = sbr.rel (%p4576) target = $region52
      $region51: #{tpu_custom_call.1} parent=5 // pred_region
        %s4579 = ssub.s32 %s16, 2
        // Predicated region
        $region53: #{tpu_custom_call.1} parent=51 // pred_check
          %p4580 = pneg %p132
        $region54: #{tpu_custom_call.1} parent=51 // pred_check_branch
          %4582 = sbr.rel (%p4580) target = $region56
        $region55: #{tpu_custom_call.1} parent=51 // pred_region
          %s4583 = sand.u32 %s117, 1
          %s4584 = scalar_lea.sflag [#allocation5], %s4583
          %s4585 = sand.u32 %s117, 1
          %s4586 = smul.addr %s4585, 232
          %s4587 = scalar_lea.vmem [#allocation9], %s4586
          %4589 = dma.done %s4584, 3712
        $region56: #{tpu_custom_call.1} parent=51 // pred_fallthru
          _
      $region52: #{tpu_custom_call.1} parent=5 // pred_fallthru
        _
    $region6: #{tpu_custom_call.1} parent=1 // loop_footer
      %s20 = sadd.s32 1, %s16
    $region7: #{tpu_custom_call.1} parent=1 // loop_footer_branch
      %15 = sbr.rel target = $region3
    $region8: #{tpu_custom_call.1} parent=1 // loop_exit
      _
    %4590 = vsyncpa [#allocation4], 1
    %s4591 = scalar_lea.sflag [#allocation4], 1
    %4592 = vsyncpa %s4591, 1
    %4593 = vsyncpa [#allocation7], 1
    %4594 = vsyncpa [#allocation5], 1
    %s4595 = scalar_lea.sflag [#allocation5], 1
    %4596 = vsyncpa %s4595, 1

</llo_original>
